<compile_context>
chip_gen: v7x
topology: tpu7x:2x2x1
jax: 0.10.0
libtpu: 0.0.40
codegen_flags: <defaults>
</compile_context>

<pallas_src>
import functools
import math

import jax
import jax.numpy as jnp
from jax.experimental import pallas as pl
from jax.experimental.pallas import tpu as pltpu


# ----------------------------------------------------------------------------- helpers

_VMEM_LIMIT = 32 * 1024 * 1024  # safe on v5e/v6e/v7x


def _round_up(x, m):
    return (x + m - 1) // m * m


def _pad_axis(x, axis, target):
    pad = target - x.shape[axis]
    if pad == 0:
        return x
    pads = [(0, 0)] * x.ndim
    pads[axis] = (0, pad)
    return jnp.pad(x, pads)


def _to_bf16(x):
    return x if x.dtype == jnp.bfloat16 else x.astype(jnp.bfloat16)


def _pick_tk(K, max_full=1024):
    """Pick a contraction tile that divides K (no wasted K padding)."""
    if K <= max_full:
        return K
    for t in (512, 384, 256, 128):
        if K % t == 0:
            return t
    return 512  # fallback: pad K


def _gelu(x):
    # tanh-approx GELU (BERT-style).  TODO(synk): exact-erf GELU for bit parity with nn.GELU.
    return 0.5 * x * (1.0 + jnp.tanh(0.7978845608028654 * (x + 0.044715 * x * x * x)))


# ----------------------------------------------------------------------------- GEMM kernels

def _mm_kernel(x_ref, w_ref, b_ref, o_ref, acc_ref, *, activation):
    """Tiled y = x @ w + b (+ optional tanh / gelu). bf16 operands, f32 accumulator."""
    k = pl.program_id(2)

    @pl.when(k == 0)
    def _():
        acc_ref[...] = jnp.zeros_like(acc_ref)

    acc_ref[...] += jnp.dot(x_ref[...], w_ref[...],
                            preferred_element_type=jnp.float32)

    @pl.when(k == pl.num_programs(2) - 1)
    def _():
        y = acc_ref[...] + b_ref[...]
        if activation == "tanh":
            y = jnp.tanh(y)
        elif activation == "gelu":
            y = _gelu(y)
        o_ref[...] = y.astype(o_ref.dtype)


def matmul_bias(x, w, b, activation=None, *, out_dtype=jnp.bfloat16, tm=512, tn=512):
    """y = x @ w + b (optionally tanh/gelu). x:(M,K) bf16, w:(K,N) bf16, b:(N,) f32."""
    M, K = x.shape
    N = w.shape[1]

    tm_e = tm if M >= tm else _round_up(M, 8)
    tn_e = tn if N >= tn else _round_up(N, 128)     # lane-dense output blocks
    tk_e = _pick_tk(K)

    Mp, Np, Kp = _round_up(M, tm_e), _round_up(N, tn_e), _round_up(K, tk_e)

    xp = _pad_axis(_pad_axis(_to_bf16(x), 0, Mp), 1, Kp)   # no-ops when pre-padded/bf16
    wp = _pad_axis(_pad_axis(_to_bf16(w), 0, Kp), 1, Np)
    bp = _pad_axis(b.reshape(1, N).astype(jnp.float32), 1, Np)

    kern = functools.partial(_mm_kernel, activation=activation)
    out = pl.pallas_call(
        kern,
        out_shape=jax.ShapeDtypeStruct((Mp, Np), out_dtype),
        grid=(Mp // tm_e, Np // tn_e, Kp // tk_e),
        in_specs=[
            pl.BlockSpec((tm_e, tk_e), lambda i, j, k: (i, k)),
            pl.BlockSpec((tk_e, tn_e), lambda i, j, k: (k, j)),
            pl.BlockSpec((1, tn_e), lambda i, j, k: (0, j)),
        ],
        out_specs=pl.BlockSpec((tm_e, tn_e), lambda i, j, k: (i, j)),
        scratch_shapes=[pltpu.VMEM((tm_e, tn_e), jnp.float32)],
        compiler_params=pltpu.CompilerParams(
            dimension_semantics=("parallel", "parallel", "arbitrary"),
            vmem_limit_bytes=_VMEM_LIMIT),
    )(xp, wp, bp)
    return out[:M, :N]


def _mm_res_ln_kernel(x_ref, w_ref, b_ref, r_ref, g_ref, bb_ref, o_ref, acc_ref):
    """Tiled y = LayerNorm(x @ w + b + residual) * gamma + beta (full feature dim per block)."""
    k = pl.program_id(1)

    @pl.when(k == 0)
    def _():
        acc_ref[...] = jnp.zeros_like(acc_ref)

    acc_ref[...] += jnp.dot(x_ref[...], w_ref[...],
                            preferred_element_type=jnp.float32)

    @pl.when(k == pl.num_programs(1) - 1)
    def _():
        y = acc_ref[...] + b_ref[...] + r_ref[...].astype(jnp.float32)
        mu = jnp.mean(y, axis=-1, keepdims=True)
        var = jnp.mean((y - mu) * (y - mu), axis=-1, keepdims=True)
        yn = (y - mu) * jax.lax.rsqrt(var + 1e-5)
        o_ref[...] = (yn * g_ref[...] + bb_ref[...]).astype(o_ref.dtype)


def matmul_bias_residual_ln(x, w, b, res, gamma, beta, *, tm=512):
    """LayerNorm(x @ w + b + res). N (= LN dim) kept full-width; bf16 in, bf16 out, f32 LN math."""
    M, K = x.shape
    N = w.shape[1]
    tm_e = tm if M >= tm else _round_up(M, 8)
    tk_e = _pick_tk(K)
    Mp, Kp = _round_up(M, tm_e), _round_up(K, tk_e)

    xp = _pad_axis(_pad_axis(_to_bf16(x), 0, Mp), 1, Kp)
    wp = _pad_axis(_to_bf16(w), 0, Kp)
    rp = _pad_axis(_to_bf16(res), 0, Mp)   # residual streamed as bf16, upcast in epilogue

    out = pl.pallas_call(
        _mm_res_ln_kernel,
        out_shape=jax.ShapeDtypeStruct((Mp, N), jnp.bfloat16),
        grid=(Mp // tm_e, Kp // tk_e),
        in_specs=[
            pl.BlockSpec((tm_e, tk_e), lambda i, k: (i, k)),
            pl.BlockSpec((tk_e, N), lambda i, k: (k, 0)),
            pl.BlockSpec((1, N), lambda i, k: (0, 0)),
            pl.BlockSpec((tm_e, N), lambda i, k: (i, 0)),
            pl.BlockSpec((1, N), lambda i, k: (0, 0)),
            pl.BlockSpec((1, N), lambda i, k: (0, 0)),
        ],
        out_specs=pl.BlockSpec((tm_e, N), lambda i, k: (i, 0)),
        scratch_shapes=[pltpu.VMEM((tm_e, N), jnp.float32)],
        compiler_params=pltpu.CompilerParams(
            dimension_semantics=("parallel", "arbitrary"),
            vmem_limit_bytes=_VMEM_LIMIT),
    )(xp, wp, b.reshape(1, N).astype(jnp.float32), rp,
      gamma.reshape(1, N).astype(jnp.float32),
      beta.reshape(1, N).astype(jnp.float32))
    return out[:M]


# ----------------------------------------------------------------------------- attention

def _attn_kernel(q_ref, k_ref, v_ref, m_ref, o_ref, *, scale):
    """One (batch, head) grid step: softmax(q k^T * scale + mask) v, bf16 MXU / f32 softmax."""
    q = q_ref[0, 0]                     # (L, dk) bf16
    k = k_ref[0, 0]                     # (L, dk) bf16
    v = v_ref[0, 0]                     # (L, dk) bf16
    mask = m_ref[0]                     # (1, L)  f32 additive

    s = jax.lax.dot_general(q, k, (((1,), (1,)), ((), ())),
                            preferred_element_type=jnp.float32) * scale + mask
    s = s - jnp.max(s, axis=-1, keepdims=True)
    p = jnp.exp(s)
    p = p / jnp.sum(p, axis=-1, keepdims=True)          # exact reciprocal (review note)
    o = jnp.dot(p.astype(jnp.bfloat16), v, preferred_element_type=jnp.float32)
    o_ref[0, 0] = o.astype(o_ref.dtype)


def mha_attention(qkv_flat, add_mask, B, L, d, num_heads):
    """qkv_flat: (B*L, 3d) bf16 (q|k|v along columns); add_mask: (B, 1, L) f32 additive.

    Returns (B*L, d) bf16.  Grid = (B, heads), both parallel -> B*H steps for megacore.
    """
    H = num_heads
    dk = d // H
    qkv = qkv_flat.reshape(B, L, 3, H, dk)
    q = jnp.transpose(qkv[:, :, 0], (0, 2, 1, 3))        # (B, H, L, dk)
    k = jnp.transpose(qkv[:, :, 1], (0, 2, 1, 3))
    v = jnp.transpose(qkv[:, :, 2], (0, 2, 1, 3))

    kern = functools.partial(_attn_kernel, scale=1.0 / math.sqrt(dk))
    out = pl.pallas_call(
        kern,
        out_shape=jax.ShapeDtypeStruct((B, H, L, dk), jnp.bfloat16),
        grid=(B, H),
        in_specs=[
            pl.BlockSpec((1, 1, L, dk), lambda b, h: (b, h, 0, 0)),
            pl.BlockSpec((1, 1, L, dk), lambda b, h: (b, h, 0, 0)),
            pl.BlockSpec((1, 1, L, dk), lambda b, h: (b, h, 0, 0)),
            pl.BlockSpec((1, 1, L), lambda b, h: (b, 0, 0)),
        ],
        out_specs=pl.BlockSpec((1, 1, L, dk), lambda b, h: (b, h, 0, 0)),
        compiler_params=pltpu.CompilerParams(
            dimension_semantics=("parallel", "parallel"),
            vmem_limit_bytes=_VMEM_LIMIT),
    )(q, k, v, add_mask)
    # TODO(synk): for L >= 512, tile the query axis with flash-style online softmax (v7x VMEM).
    return jnp.transpose(out, (0, 2, 1, 3)).reshape(B * L, d)


# ----------------------------------------------------------------------------- params

def positional_encoding(max_seq_length, d_model):
    pos = jnp.arange(max_seq_length, dtype=jnp.float32)[:, None]
    div = jnp.exp(jnp.arange(0, d_model, 2, dtype=jnp.float32)
                  * (-math.log(10000.0) / d_model))
    pe = jnp.zeros((max_seq_length, d_model), jnp.float32)
    pe = pe.at[:, 0::2].set(jnp.sin(pos * div))
    pe = pe.at[:, 1::2].set(jnp.cos(pos * div))
    return pe  # (max_seq_length, d_model)


def init_params(key, vocab_size, d_model, num_layers, num_heads, d_ff, max_seq_length):
    del num_heads  # static config, kept out of the (traced) params pytree

    def nrm(k, shape):
        return 0.02 * jax.random.normal(k, shape, jnp.float32)

    keys = jax.random.split(key, 4 + num_layers)
    params = {
        "token_emb": nrm(keys[0], (vocab_size, d_model)),
        "segment_emb": nrm(keys[1], (2, d_model)),      # unused in forward (matches PyTorch)
        "pos_encoding": positional_encoding(max_seq_length, d_model),
        "pooler_w": nrm(keys[2], (d_model, d_model)),
        "pooler_b": jnp.zeros((d_model,), jnp.float32),
        "final_w": nrm(keys[3], (d_model, vocab_size)),
        "final_b": jnp.zeros((vocab_size,), jnp.float32),
        "layers": [],
    }
    for l in range(num_layers):
        lk = jax.random.split(keys[4 + l], 6)
        params["layers"].append({
            "wq": nrm(lk[0], (d_model, d_model)), "bq": jnp.zeros((d_model,), jnp.float32),
            "wk": nrm(lk[1], (d_model, d_model)), "bk": jnp.zeros((d_model,), jnp.float32),
            "wv": nrm(lk[2], (d_model, d_model)), "bv": jnp.zeros((d_model,), jnp.float32),
            "wo": nrm(lk[3], (d_model, d_model)), "bo": jnp.zeros((d_model,), jnp.float32),
            "ln1_g": jnp.ones((d_model,), jnp.float32), "ln1_b": jnp.zeros((d_model,), jnp.float32),
            "w1": nrm(lk[4], (d_model, d_ff)), "b1": jnp.zeros((d_ff,), jnp.float32),
            "w2": nrm(lk[5], (d_ff, d_model)), "b2": jnp.zeros((d_model,), jnp.float32),
            "ln2_g": jnp.ones((d_model,), jnp.float32), "ln2_b": jnp.zeros((d_model,), jnp.float32),
        })
    return params


def prepare_params(params):
    """One-time fusion/cast: fused QKV weight, all GEMM weights pre-cast to bf16."""
    bf = lambda a: a.astype(jnp.bfloat16)
    prep = {
        "token_emb": params["token_emb"],
        "pos_encoding": params["pos_encoding"],
        "pooler_w": bf(params["pooler_w"]), "pooler_b": params["pooler_b"],
        "final_w": bf(params["final_w"]), "final_b": params["final_b"],
        "layers": [],
    }
    for p in params["layers"]:
        prep["layers"].append({
            "wqkv": bf(jnp.concatenate([p["wq"], p["wk"], p["wv"]], axis=1)),
            "bqkv": jnp.concatenate([p["bq"], p["bk"], p["bv"]], axis=0),
            "wo": bf(p["wo"]), "bo": p["bo"],
            "ln1_g": p["ln1_g"], "ln1_b": p["ln1_b"],
            "w1": bf(p["w1"]), "b1": p["b1"],
            "w2": bf(p["w2"]), "b2": p["b2"],
            "ln2_g": p["ln2_g"], "ln2_b": p["ln2_b"],
        })
    return prep


# ----------------------------------------------------------------------------- forward

def encoder_layer(x, add_mask, p, num_heads):
    B, L, d = x.shape
    xf = x.reshape(B * L, d)                               # bf16 activations throughout

    # Fused QKV projection: a single (d, 3d) GEMM (weights pre-fused/pre-cast).
    qkv = matmul_bias(xf, p["wqkv"], p["bqkv"])            # (B*L, 3d) bf16

    # Multi-head attention: (batch, head) grid, bf16 MXU matmuls, f32 softmax.
    attn = mha_attention(qkv, add_mask, B, L, d, num_heads)  # (B*L, d) bf16

    # Output projection with fused bias + residual + LayerNorm epilogue.
    h1 = matmul_bias_residual_ln(attn, p["wo"], p["bo"], xf, p["ln1_g"], p["ln1_b"])

    # FFN: GEMM+GELU, then GEMM with fused bias + residual + LayerNorm.
    ff = matmul_bias(h1, p["w1"], p["b1"], activation="gelu")
    h2 = matmul_bias_residual_ln(ff, p["w2"], p["b2"], h1, p["ln2_g"], p["ln2_b"])
    return h2.reshape(B, L, d)


def bert_forward(params, input_ids, segment_ids, attention_mask, *, num_heads):
    # segment_ids accepted but unused (mirrors the reference forward()).
    del segment_ids
    input_ids = input_ids.astype(jnp.int32)
    B, S, C = input_ids.shape
    vocab, d = params["token_emb"].shape
    L = S * C  # C must be 4 (pos encoding is tiled x4 in the reference)

    # Embedding lookup (glue, plain JAX gather)
    tok = jnp.take(params["token_emb"], input_ids, axis=0).reshape(B, L, d)

    pe = params["pos_encoding"][:S]                     # (S, d)
    pe = jnp.concatenate([pe] * 4, axis=0)              # (4S, d) == (L, d) when C == 4
    x = (tok + pe[None, :, :]).astype(jnp.bfloat16)     # cast once; bf16 across the stack
    # dropout -> identity (inference)

    # attention_mask: 1 = attend, 0 = masked  ->  additive mask (B, 1, L), kept f32
    add_mask = ((1.0 - attention_mask.astype(jnp.float32)) * -1e9).reshape(B, 1, L)

    for p in params["layers"]:
        x = encoder_layer(x, add_mask, p, num_heads)

    sequence_output = x                                  # (B, L, d) bf16

    # Pooler on [CLS].
    cls = sequence_output[:, 0, :].reshape(B, d)
    pooled = matmul_bias(cls, params["pooler_w"], params["pooler_b"],
                         activation="tanh")              # (B, d) bf16

    # Final vocab projection: sequence rows + pooled rows in ONE GEMM (single weight stream).
    all_rows = jnp.concatenate([sequence_output.reshape(B * L, d), pooled], axis=0)
    logits = matmul_bias(all_rows, params["final_w"], params["final_b"],
                         out_dtype=jnp.float32)          # (B*L + B, vocab) f32
    seq_logits = logits[:B * L].reshape(B, L, vocab)
    pooled_logits = logits[B * L:].reshape(B, 1, vocab)
    return seq_logits, pooled_logits


# ----------------------------------------------------------------------------- main

if __name__ == "__main__":
    vocab_size = 64
    d_model = 32
    num_layers = 2
    num_heads = 4
    d_ff = 64
    max_seq_length = 16

    B, S, C = 2, 8, 4          # C must be 4 (the reference tiles pos encodings x4)
    L = S * C

    key = jax.random.PRNGKey(0)
    kp, ki = jax.random.split(key, 2)

    raw_params = init_params(kp, vocab_size, d_model, num_layers, num_heads, d_ff,
                             max_seq_length)
    params = prepare_params(raw_params)   # one-time weight fusion + bf16 cast

    input_ids = jax.random.randint(ki, (B, S, C), 0, vocab_size, dtype=jnp.int32)
    segment_ids = jnp.zeros((B, S, C), jnp.int32)
    attention_mask = jnp.ones((B, L), jnp.float32)

    fwd = jax.jit(functools.partial(bert_forward, num_heads=num_heads))
    seq_logits, pooled_logits = fwd(params, input_ids, segment_ids, attention_mask)
    jax.block_until_ready((seq_logits, pooled_logits))

    assert seq_logits.shape == (B, L, vocab_size), seq_logits.shape
    assert pooled_logits.shape == (B, 1, vocab_size), pooled_logits.shape
    assert bool(jnp.isfinite(seq_logits).all()), "non-finite seq logits"
    assert bool(jnp.isfinite(pooled_logits).all()), "non-finite pooled logits"
    print("KERNEL_OK")
</pallas_src>

<mosaic_0001>
module attributes {stable_mosaic.version = 11 : i64} {
  func.func @_mm_kernel(%arg0: i32, %arg1: i32, %arg2: i32, %arg3: memref<64x32xbf16, #tpu.memory_space<vmem>>, %arg4: memref<32x128xbf16, #tpu.memory_space<vmem>>, %arg5: memref<1x128xf32, #tpu.memory_space<vmem>>, %arg6: memref<64x128xbf16, #tpu.memory_space<vmem>>, %arg7: memref<64x128xf32, #tpu.memory_space<vmem>>) attributes {dimension_semantics = [#tpu.dimension_semantics<parallel>, #tpu.dimension_semantics<parallel>, #tpu.dimension_semantics<arbitrary>], iteration_bounds = array<i64: 1, 1, 1>, scalar_prefetch = 0 : i64, scratch_operands = 1 : i64, tpu.core_type = #tpu.core_type<tc>, window_params = [{transform_indices = @transform_0, window_bounds = array<i64: 64, 32>}, {transform_indices = @transform_1, window_bounds = array<i64: 32, 128>}, {transform_indices = @transform_2, window_bounds = array<i64: 1, 128>}, {transform_indices = @transform_3, window_bounds = array<i64: 64, 128>}]} {
    %c0_i32 = arith.constant 0 : i32
    %0 = arith.cmpi eq, %arg2, %c0_i32 : i32
    %1 = arith.extui %0 : i1 to i32
    %c0_i32_0 = arith.constant 0 : i32
    %2 = arith.cmpi ne, %1, %c0_i32_0 : i32
    scf.if %2 {
      %cst_10 = arith.constant 0.000000e+00 : f32
      %12 = vector.broadcast %cst_10 : f32 to vector<64x128xf32>
      %c0_11 = arith.constant 0 : index
      %c0_12 = arith.constant 0 : index
      %13 = vector.load %arg7[%c0_11, %c0_12] : memref<64x128xf32, #tpu.memory_space<vmem>>, vector<64x128xf32>
      tpu.vector_store %arg7[%c0_11, %c0_12], %12 {strides = array<i32>} : memref<64x128xf32, #tpu.memory_space<vmem>>, vector<64x128xf32>,
    } else {
    }
    %c0 = arith.constant 0 : index
    %c0_1 = arith.constant 0 : index
    %3 = vector.load %arg7[%c0, %c0_1] : memref<64x128xf32, #tpu.memory_space<vmem>>, vector<64x128xf32>
    %c0_2 = arith.constant 0 : index
    %c0_3 = arith.constant 0 : index
    %4 = vector.load %arg3[%c0_2, %c0_3] : memref<64x32xbf16, #tpu.memory_space<vmem>>, vector<64x32xbf16>
    %c0_4 = arith.constant 0 : index
    %c0_5 = arith.constant 0 : index
    %5 = vector.load %arg4[%c0_4, %c0_5] : memref<32x128xbf16, #tpu.memory_space<vmem>>, vector<32x128xbf16>
    %cst = arith.constant dense<0.000000e+00> : vector<64x128xf32>
    %6 = tpu.matmul %4, %5, %cst {dimension_numbers = #tpu.dot_dimension_numbers<[1], [0], [0], [1], [0, 0, 1, 1], [], []>} : vector<64x32xbf16>, vector<32x128xbf16>, vector<64x128xf32> -> vector<64x128xf32>
    %7 = arith.addf %3, %6 : vector<64x128xf32>
    %c0_6 = arith.constant 0 : index
    %c0_7 = arith.constant 0 : index
    %8 = vector.load %arg7[%c0_6, %c0_7] : memref<64x128xf32, #tpu.memory_space<vmem>>, vector<64x128xf32>
    tpu.vector_store %arg7[%c0_6, %c0_7], %7 {strides = array<i32>} : memref<64x128xf32, #tpu.memory_space<vmem>>, vector<64x128xf32>,
    %c0_i32_8 = arith.constant 0 : i32
    %9 = arith.cmpi eq, %arg2, %c0_i32_8 : i32
    %10 = arith.extui %9 : i1 to i32
    %c0_i32_9 = arith.constant 0 : i32
    %11 = arith.cmpi ne, %10, %c0_i32_9 : i32
    scf.if %11 {
      %c0_10 = arith.constant 0 : index
      %c0_11 = arith.constant 0 : index
      %12 = vector.load %arg7[%c0_10, %c0_11] : memref<64x128xf32, #tpu.memory_space<vmem>>, vector<64x128xf32>
      %c0_12 = arith.constant 0 : index
      %c0_13 = arith.constant 0 : index
      %13 = vector.load %arg5[%c0_12, %c0_13] : memref<1x128xf32, #tpu.memory_space<vmem>>, vector<1x128xf32>
      %14 = vector.broadcast %13 : vector<1x128xf32> to vector<64x128xf32>
      %15 = arith.addf %12, %14 : vector<64x128xf32>
      %16 = arith.truncf %15 : vector<64x128xf32> to vector<64x128xbf16>
      %c0_14 = arith.constant 0 : index
      %c0_15 = arith.constant 0 : index
      %17 = vector.load %arg6[%c0_14, %c0_15] : memref<64x128xbf16, #tpu.memory_space<vmem>>, vector<64x128xbf16>
      tpu.vector_store %arg6[%c0_14, %c0_15], %16 {strides = array<i32>} : memref<64x128xbf16, #tpu.memory_space<vmem>>, vector<64x128xbf16>,
    } else {
    }
    return
  }
  func.func @transform_0(%arg0: i32, %arg1: i32, %arg2: i32) -> (i32, i32) {
    %c0_i32 = arith.constant 0 : i32
    return %arg0, %arg2 : i32, i32
  }
  func.func @transform_1(%arg0: i32, %arg1: i32, %arg2: i32) -> (i32, i32) {
    %c0_i32 = arith.constant 0 : i32
    return %arg2, %arg1 : i32, i32
  }
  func.func @transform_2(%arg0: i32, %arg1: i32, %arg2: i32) -> (i32, i32) {
    %c0_i32 = arith.constant 0 : i32
    %c0_i32_0 = arith.constant 0 : i32
    return %c0_i32, %arg1 : i32, i32
  }
  func.func @transform_3(%arg0: i32, %arg1: i32, %arg2: i32) -> (i32, i32) {
    %c0_i32 = arith.constant 0 : i32
    return %arg0, %arg1 : i32, i32
  }
}

module attributes {stable_mosaic.version = 11 : i64} {
  func.func @_attn_kernel(%arg0: i32, %arg1: i32, %arg2: memref<1x1x32x8xbf16, #tpu.memory_space<vmem>>, %arg3: memref<1x1x32x8xbf16, #tpu.memory_space<vmem>>, %arg4: memref<1x1x32x8xbf16, #tpu.memory_space<vmem>>, %arg5: memref<1x1x32xf32, #tpu.memory_space<vmem>>, %arg6: memref<1x1x32x8xbf16, #tpu.memory_space<vmem>>) attributes {dimension_semantics = [#tpu.dimension_semantics<parallel>, #tpu.dimension_semantics<parallel>], iteration_bounds = array<i64: 2, 4>, scalar_prefetch = 0 : i64, scratch_operands = 0 : i64, tpu.core_type = #tpu.core_type<tc>, window_params = [{transform_indices = @transform_0, window_bounds = array<i64: 1, 1, 32, 8>}, {transform_indices = @transform_1, window_bounds = array<i64: 1, 1, 32, 8>}, {transform_indices = @transform_2, window_bounds = array<i64: 1, 1, 32, 8>}, {transform_indices = @transform_3, window_bounds = array<i64: 1, 1, 32>}, {transform_indices = @transform_4, window_bounds = array<i64: 1, 1, 32, 8>}]} {
    %c0 = arith.constant 0 : index
    %c0_0 = arith.constant 0 : index
    %c0_1 = arith.constant 0 : index
    %c0_2 = arith.constant 0 : index
    %0 = vector.load %arg2[%c0, %c0_0, %c0_1, %c0_2] : memref<1x1x32x8xbf16, #tpu.memory_space<vmem>>, vector<1x1x32x8xbf16>
    %1 = vector.shape_cast %0 : vector<1x1x32x8xbf16> to vector<32x8xbf16>
    %c0_3 = arith.constant 0 : index
    %c0_4 = arith.constant 0 : index
    %c0_5 = arith.constant 0 : index
    %c0_6 = arith.constant 0 : index
    %2 = vector.load %arg3[%c0_3, %c0_4, %c0_5, %c0_6] : memref<1x1x32x8xbf16, #tpu.memory_space<vmem>>, vector<1x1x32x8xbf16>
    %3 = vector.shape_cast %2 : vector<1x1x32x8xbf16> to vector<32x8xbf16>
    %c0_7 = arith.constant 0 : index
    %c0_8 = arith.constant 0 : index
    %c0_9 = arith.constant 0 : index
    %c0_10 = arith.constant 0 : index
    %4 = vector.load %arg4[%c0_7, %c0_8, %c0_9, %c0_10] : memref<1x1x32x8xbf16, #tpu.memory_space<vmem>>, vector<1x1x32x8xbf16>
    %5 = vector.shape_cast %4 : vector<1x1x32x8xbf16> to vector<32x8xbf16>
    %c0_11 = arith.constant 0 : index
    %c0_12 = arith.constant 0 : index
    %c0_13 = arith.constant 0 : index
    %6 = vector.load %arg5[%c0_11, %c0_12, %c0_13] : memref<1x1x32xf32, #tpu.memory_space<vmem>>, vector<1x1x32xf32>
    %7 = vector.shape_cast %6 : vector<1x1x32xf32> to vector<1x32xf32>
    %cst = arith.constant dense<0.000000e+00> : vector<32x32xf32>
    %8 = tpu.matmul %1, %3, %cst {dimension_numbers = #tpu.dot_dimension_numbers<[1], [1], [0], [0], [0, 0, 1, 0], [], []>} : vector<32x8xbf16>, vector<32x8xbf16>, vector<32x32xf32> -> vector<32x32xf32>
    %cst_14 = arith.constant 0.353553385 : f32
    %9 = vector.broadcast %cst_14 : f32 to vector<32x32xf32>
    %10 = arith.mulf %8, %9 : vector<32x32xf32>
    %11 = vector.broadcast %7 : vector<1x32xf32> to vector<32x32xf32>
    %12 = arith.addf %10, %11 : vector<32x32xf32>
    %cst_15 = arith.constant dense<0xFF800000> : vector<32xf32>
    %13 = vector.multi_reduction <maximumf>, %12, %cst_15 [1] : vector<32x32xf32> to vector<32xf32>
    %14 = vector.shape_cast %13 : vector<32xf32> to vector<32x1xf32>
    %15 = vector.broadcast %14 : vector<32x1xf32> to vector<32x32xf32>
    %16 = arith.subf %12, %15 : vector<32x32xf32>
    %17 = math.exp %16 : vector<32x32xf32>
    %cst_16 = arith.constant dense<0.000000e+00> : vector<32xf32>
    %18 = vector.multi_reduction <add>, %17, %cst_16 [1] : vector<32x32xf32> to vector<32xf32>
    %19 = vector.shape_cast %18 : vector<32xf32> to vector<32x1xf32>
    %20 = vector.broadcast %19 : vector<32x1xf32> to vector<32x32xf32>
    %21 = arith.divf %17, %20 : vector<32x32xf32>
    %22 = arith.truncf %21 : vector<32x32xf32> to vector<32x32xbf16>
    %cst_17 = arith.constant dense<0.000000e+00> : vector<32x8xf32>
    %23 = tpu.matmul %22, %5, %cst_17 {dimension_numbers = #tpu.dot_dimension_numbers<[1], [0], [0], [1], [0, 0, 1, 1], [], []>} : vector<32x32xbf16>, vector<32x8xbf16>, vector<32x8xf32> -> vector<32x8xf32>
    %24 = arith.truncf %23 : vector<32x8xf32> to vector<32x8xbf16>
    %c0_18 = arith.constant 0 : index
    %c0_19 = arith.constant 0 : index
    %c0_20 = arith.constant 0 : index
    %c0_21 = arith.constant 0 : index
    %25 = vector.load %arg6[%c0_18, %c0_19, %c0_20, %c0_21] : memref<1x1x32x8xbf16, #tpu.memory_space<vmem>>, vector<1x1x32x8xbf16>
    %26 = vector.shape_cast %25 : vector<1x1x32x8xbf16> to vector<32x8xbf16>
    %27 = vector.shape_cast %24 : vector<32x8xbf16> to vector<1x1x32x8xbf16>
    tpu.vector_store %arg6[%c0_18, %c0_19, %c0_20, %c0_21], %27 {strides = array<i32>} : memref<1x1x32x8xbf16, #tpu.memory_space<vmem>>, vector<1x1x32x8xbf16>,
    return
  }
  func.func @transform_0(%arg0: i32, %arg1: i32) -> (i32, i32, i32, i32) {
    %c0_i32 = arith.constant 0 : i32
    %c0_i32_0 = arith.constant 0 : i32
    %c0_i32_1 = arith.constant 0 : i32
    return %arg0, %arg1, %c0_i32, %c0_i32_0 : i32, i32, i32, i32
  }
  func.func @transform_1(%arg0: i32, %arg1: i32) -> (i32, i32, i32, i32) {
    %c0_i32 = arith.constant 0 : i32
    %c0_i32_0 = arith.constant 0 : i32
    %c0_i32_1 = arith.constant 0 : i32
    return %arg0, %arg1, %c0_i32, %c0_i32_0 : i32, i32, i32, i32
  }
  func.func @transform_2(%arg0: i32, %arg1: i32) -> (i32, i32, i32, i32) {
    %c0_i32 = arith.constant 0 : i32
    %c0_i32_0 = arith.constant 0 : i32
    %c0_i32_1 = arith.constant 0 : i32
    return %arg0, %arg1, %c0_i32, %c0_i32_0 : i32, i32, i32, i32
  }
  func.func @transform_3(%arg0: i32, %arg1: i32) -> (i32, i32, i32) {
    %c0_i32 = arith.constant 0 : i32
    %c0_i32_0 = arith.constant 0 : i32
    %c0_i32_1 = arith.constant 0 : i32
    return %arg0, %c0_i32, %c0_i32_0 : i32, i32, i32
  }
  func.func @transform_4(%arg0: i32, %arg1: i32) -> (i32, i32, i32, i32) {
    %c0_i32 = arith.constant 0 : i32
    %c0_i32_0 = arith.constant 0 : i32
    %c0_i32_1 = arith.constant 0 : i32
    return %arg0, %arg1, %c0_i32, %c0_i32_0 : i32, i32, i32, i32
  }
}

module attributes {stable_mosaic.version = 11 : i64} {
  func.func @_mm_res_ln_kernel(%arg0: i32, %arg1: i32, %arg2: memref<64x32xbf16, #tpu.memory_space<vmem>>, %arg3: memref<32x32xbf16, #tpu.memory_space<vmem>>, %arg4: memref<1x32xf32, #tpu.memory_space<vmem>>, %arg5: memref<64x32xbf16, #tpu.memory_space<vmem>>, %arg6: memref<1x32xf32, #tpu.memory_space<vmem>>, %arg7: memref<1x32xf32, #tpu.memory_space<vmem>>, %arg8: memref<64x32xbf16, #tpu.memory_space<vmem>>, %arg9: memref<64x32xf32, #tpu.memory_space<vmem>>) attributes {dimension_semantics = [#tpu.dimension_semantics<parallel>, #tpu.dimension_semantics<arbitrary>], iteration_bounds = array<i64: 1, 1>, scalar_prefetch = 0 : i64, scratch_operands = 1 : i64, tpu.core_type = #tpu.core_type<tc>, window_params = [{transform_indices = @transform_0, window_bounds = array<i64: 64, 32>}, {transform_indices = @transform_1, window_bounds = array<i64: 32, 32>}, {pipeline_mode = #tpu.pipeline_mode<synchronous>, transform_indices = @transform_2, window_bounds = array<i64: 1, 32>}, {transform_indices = @transform_3, window_bounds = array<i64: 64, 32>}, {pipeline_mode = #tpu.pipeline_mode<synchronous>, transform_indices = @transform_4, window_bounds = array<i64: 1, 32>}, {pipeline_mode = #tpu.pipeline_mode<synchronous>, transform_indices = @transform_5, window_bounds = array<i64: 1, 32>}, {transform_indices = @transform_6, window_bounds = array<i64: 64, 32>}]} {
    %c0_i32 = arith.constant 0 : i32
    %0 = arith.cmpi eq, %arg1, %c0_i32 : i32
    %1 = arith.extui %0 : i1 to i32
    %c0_i32_0 = arith.constant 0 : i32
    %2 = arith.cmpi ne, %1, %c0_i32_0 : i32
    scf.if %2 {
      %cst_10 = arith.constant 0.000000e+00 : f32
      %12 = vector.broadcast %cst_10 : f32 to vector<64x32xf32>
      %c0_11 = arith.constant 0 : index
      %c0_12 = arith.constant 0 : index
      %13 = vector.load %arg9[%c0_11, %c0_12] : memref<64x32xf32, #tpu.memory_space<vmem>>, vector<64x32xf32>
      tpu.vector_store %arg9[%c0_11, %c0_12], %12 {strides = array<i32>} : memref<64x32xf32, #tpu.memory_space<vmem>>, vector<64x32xf32>,
    } else {
    }
    %c0 = arith.constant 0 : index
    %c0_1 = arith.constant 0 : index
    %3 = vector.load %arg9[%c0, %c0_1] : memref<64x32xf32, #tpu.memory_space<vmem>>, vector<64x32xf32>
    %c0_2 = arith.constant 0 : index
    %c0_3 = arith.constant 0 : index
    %4 = vector.load %arg2[%c0_2, %c0_3] : memref<64x32xbf16, #tpu.memory_space<vmem>>, vector<64x32xbf16>
    %c0_4 = arith.constant 0 : index
    %c0_5 = arith.constant 0 : index
    %5 = vector.load %arg3[%c0_4, %c0_5] : memref<32x32xbf16, #tpu.memory_space<vmem>>, vector<32x32xbf16>
    %cst = arith.constant dense<0.000000e+00> : vector<64x32xf32>
    %6 = tpu.matmul %4, %5, %cst {dimension_numbers = #tpu.dot_dimension_numbers<[1], [0], [0], [1], [0, 0, 1, 1], [], []>} : vector<64x32xbf16>, vector<32x32xbf16>, vector<64x32xf32> -> vector<64x32xf32>
    %7 = arith.addf %3, %6 : vector<64x32xf32>
    %c0_6 = arith.constant 0 : index
    %c0_7 = arith.constant 0 : index
    %8 = vector.load %arg9[%c0_6, %c0_7] : memref<64x32xf32, #tpu.memory_space<vmem>>, vector<64x32xf32>
    tpu.vector_store %arg9[%c0_6, %c0_7], %7 {strides = array<i32>} : memref<64x32xf32, #tpu.memory_space<vmem>>, vector<64x32xf32>,
    %c0_i32_8 = arith.constant 0 : i32
    %9 = arith.cmpi eq, %arg1, %c0_i32_8 : i32
    %10 = arith.extui %9 : i1 to i32
    %c0_i32_9 = arith.constant 0 : i32
    %11 = arith.cmpi ne, %10, %c0_i32_9 : i32
    scf.if %11 {
      %c0_10 = arith.constant 0 : index
      %c0_11 = arith.constant 0 : index
      %12 = vector.load %arg9[%c0_10, %c0_11] : memref<64x32xf32, #tpu.memory_space<vmem>>, vector<64x32xf32>
      %c0_12 = arith.constant 0 : index
      %c0_13 = arith.constant 0 : index
      %13 = vector.load %arg4[%c0_12, %c0_13] : memref<1x32xf32, #tpu.memory_space<vmem>>, vector<1x32xf32>
      %14 = vector.broadcast %13 : vector<1x32xf32> to vector<64x32xf32>
      %15 = arith.addf %12, %14 : vector<64x32xf32>
      %c0_14 = arith.constant 0 : index
      %c0_15 = arith.constant 0 : index
      %16 = vector.load %arg5[%c0_14, %c0_15] : memref<64x32xbf16, #tpu.memory_space<vmem>>, vector<64x32xbf16>
      %17 = arith.extf %16 : vector<64x32xbf16> to vector<64x32xf32>
      %18 = arith.addf %15, %17 : vector<64x32xf32>
      %cst_16 = arith.constant dense<0.000000e+00> : vector<64xf32>
      %19 = vector.multi_reduction <add>, %18, %cst_16 [1] : vector<64x32xf32> to vector<64xf32>
      %20 = vector.shape_cast %19 : vector<64xf32> to vector<64x1xf32>
      %cst_17 = arith.constant 3.200000e+01 : f32
      %21 = vector.broadcast %cst_17 : f32 to vector<64x1xf32>
      %22 = arith.divf %20, %21 : vector<64x1xf32>
      %23 = vector.broadcast %22 : vector<64x1xf32> to vector<64x32xf32>
      %24 = arith.subf %18, %23 : vector<64x32xf32>
      %25 = vector.broadcast %22 : vector<64x1xf32> to vector<64x32xf32>
      %26 = arith.subf %18, %25 : vector<64x32xf32>
      %27 = arith.mulf %24, %26 : vector<64x32xf32>
      %cst_18 = arith.constant dense<0.000000e+00> : vector<64xf32>
      %28 = vector.multi_reduction <add>, %27, %cst_18 [1] : vector<64x32xf32> to vector<64xf32>
      %29 = vector.shape_cast %28 : vector<64xf32> to vector<64x1xf32>
      %cst_19 = arith.constant 3.200000e+01 : f32
      %30 = vector.broadcast %cst_19 : f32 to vector<64x1xf32>
      %31 = arith.divf %29, %30 : vector<64x1xf32>
      %32 = vector.broadcast %22 : vector<64x1xf32> to vector<64x32xf32>
      %33 = arith.subf %18, %32 : vector<64x32xf32>
      %cst_20 = arith.constant 9.99999974E-6 : f32
      %34 = vector.broadcast %cst_20 : f32 to vector<64x1xf32>
      %35 = arith.addf %31, %34 : vector<64x1xf32>
      %36 = math.rsqrt %35 : vector<64x1xf32>
      %37 = vector.broadcast %36 : vector<64x1xf32> to vector<64x32xf32>
      %38 = arith.mulf %33, %37 : vector<64x32xf32>
      %c0_21 = arith.constant 0 : index
      %c0_22 = arith.constant 0 : index
      %39 = vector.load %arg6[%c0_21, %c0_22] : memref<1x32xf32, #tpu.memory_space<vmem>>, vector<1x32xf32>
      %40 = vector.broadcast %39 : vector<1x32xf32> to vector<64x32xf32>
      %41 = arith.mulf %38, %40 : vector<64x32xf32>
      %c0_23 = arith.constant 0 : index
      %c0_24 = arith.constant 0 : index
      %42 = vector.load %arg7[%c0_23, %c0_24] : memref<1x32xf32, #tpu.memory_space<vmem>>, vector<1x32xf32>
      %43 = vector.broadcast %42 : vector<1x32xf32> to vector<64x32xf32>
      %44 = arith.addf %41, %43 : vector<64x32xf32>
      %45 = arith.truncf %44 : vector<64x32xf32> to vector<64x32xbf16>
      %c0_25 = arith.constant 0 : index
      %c0_26 = arith.constant 0 : index
      %46 = vector.load %arg8[%c0_25, %c0_26] : memref<64x32xbf16, #tpu.memory_space<vmem>>, vector<64x32xbf16>
      tpu.vector_store %arg8[%c0_25, %c0_26], %45 {strides = array<i32>} : memref<64x32xbf16, #tpu.memory_space<vmem>>, vector<64x32xbf16>,
    } else {
    }
    return
  }
  func.func @transform_0(%arg0: i32, %arg1: i32) -> (i32, i32) {
    %c0_i32 = arith.constant 0 : i32
    return %arg0, %arg1 : i32, i32
  }
  func.func @transform_1(%arg0: i32, %arg1: i32) -> (i32, i32) {
    %c0_i32 = arith.constant 0 : i32
    %c0_i32_0 = arith.constant 0 : i32
    return %arg1, %c0_i32 : i32, i32
  }
  func.func @transform_2(%arg0: i32, %arg1: i32) -> (i32, i32) {
    %c0_i32 = arith.constant 0 : i32
    %c0_i32_0 = arith.constant 0 : i32
    %c0_i32_1 = arith.constant 0 : i32
    return %c0_i32, %c0_i32_0 : i32, i32
  }
  func.func @transform_3(%arg0: i32, %arg1: i32) -> (i32, i32) {
    %c0_i32 = arith.constant 0 : i32
    %c0_i32_0 = arith.constant 0 : i32
    return %arg0, %c0_i32 : i32, i32
  }
  func.func @transform_4(%arg0: i32, %arg1: i32) -> (i32, i32) {
    %c0_i32 = arith.constant 0 : i32
    %c0_i32_0 = arith.constant 0 : i32
    %c0_i32_1 = arith.constant 0 : i32
    return %c0_i32, %c0_i32_0 : i32, i32
  }
  func.func @transform_5(%arg0: i32, %arg1: i32) -> (i32, i32) {
    %c0_i32 = arith.constant 0 : i32
    %c0_i32_0 = arith.constant 0 : i32
    %c0_i32_1 = arith.constant 0 : i32
    return %c0_i32, %c0_i32_0 : i32, i32
  }
  func.func @transform_6(%arg0: i32, %arg1: i32) -> (i32, i32) {
    %c0_i32 = arith.constant 0 : i32
    %c0_i32_0 = arith.constant 0 : i32
    return %arg0, %c0_i32 : i32, i32
  }
}

module attributes {stable_mosaic.version = 11 : i64} {
  func.func @_mm_kernel(%arg0: i32, %arg1: i32, %arg2: i32, %arg3: memref<64x32xbf16, #tpu.memory_space<vmem>>, %arg4: memref<32x128xbf16, #tpu.memory_space<vmem>>, %arg5: memref<1x128xf32, #tpu.memory_space<vmem>>, %arg6: memref<64x128xbf16, #tpu.memory_space<vmem>>, %arg7: memref<64x128xf32, #tpu.memory_space<vmem>>) attributes {dimension_semantics = [#tpu.dimension_semantics<parallel>, #tpu.dimension_semantics<parallel>, #tpu.dimension_semantics<arbitrary>], iteration_bounds = array<i64: 1, 1, 1>, scalar_prefetch = 0 : i64, scratch_operands = 1 : i64, tpu.core_type = #tpu.core_type<tc>, window_params = [{transform_indices = @transform_0, window_bounds = array<i64: 64, 32>}, {transform_indices = @transform_1, window_bounds = array<i64: 32, 128>}, {transform_indices = @transform_2, window_bounds = array<i64: 1, 128>}, {transform_indices = @transform_3, window_bounds = array<i64: 64, 128>}]} {
    %c0_i32 = arith.constant 0 : i32
    %0 = arith.cmpi eq, %arg2, %c0_i32 : i32
    %1 = arith.extui %0 : i1 to i32
    %c0_i32_0 = arith.constant 0 : i32
    %2 = arith.cmpi ne, %1, %c0_i32_0 : i32
    scf.if %2 {
      %cst_10 = arith.constant 0.000000e+00 : f32
      %12 = vector.broadcast %cst_10 : f32 to vector<64x128xf32>
      %c0_11 = arith.constant 0 : index
      %c0_12 = arith.constant 0 : index
      %13 = vector.load %arg7[%c0_11, %c0_12] : memref<64x128xf32, #tpu.memory_space<vmem>>, vector<64x128xf32>
      tpu.vector_store %arg7[%c0_11, %c0_12], %12 {strides = array<i32>} : memref<64x128xf32, #tpu.memory_space<vmem>>, vector<64x128xf32>,
    } else {
    }
    %c0 = arith.constant 0 : index
    %c0_1 = arith.constant 0 : index
    %3 = vector.load %arg7[%c0, %c0_1] : memref<64x128xf32, #tpu.memory_space<vmem>>, vector<64x128xf32>
    %c0_2 = arith.constant 0 : index
    %c0_3 = arith.constant 0 : index
    %4 = vector.load %arg3[%c0_2, %c0_3] : memref<64x32xbf16, #tpu.memory_space<vmem>>, vector<64x32xbf16>
    %c0_4 = arith.constant 0 : index
    %c0_5 = arith.constant 0 : index
    %5 = vector.load %arg4[%c0_4, %c0_5] : memref<32x128xbf16, #tpu.memory_space<vmem>>, vector<32x128xbf16>
    %cst = arith.constant dense<0.000000e+00> : vector<64x128xf32>
    %6 = tpu.matmul %4, %5, %cst {dimension_numbers = #tpu.dot_dimension_numbers<[1], [0], [0], [1], [0, 0, 1, 1], [], []>} : vector<64x32xbf16>, vector<32x128xbf16>, vector<64x128xf32> -> vector<64x128xf32>
    %7 = arith.addf %3, %6 : vector<64x128xf32>
    %c0_6 = arith.constant 0 : index
    %c0_7 = arith.constant 0 : index
    %8 = vector.load %arg7[%c0_6, %c0_7] : memref<64x128xf32, #tpu.memory_space<vmem>>, vector<64x128xf32>
    tpu.vector_store %arg7[%c0_6, %c0_7], %7 {strides = array<i32>} : memref<64x128xf32, #tpu.memory_space<vmem>>, vector<64x128xf32>,
    %c0_i32_8 = arith.constant 0 : i32
    %9 = arith.cmpi eq, %arg2, %c0_i32_8 : i32
    %10 = arith.extui %9 : i1 to i32
    %c0_i32_9 = arith.constant 0 : i32
    %11 = arith.cmpi ne, %10, %c0_i32_9 : i32
    scf.if %11 {
      %c0_10 = arith.constant 0 : index
      %c0_11 = arith.constant 0 : index
      %12 = vector.load %arg7[%c0_10, %c0_11] : memref<64x128xf32, #tpu.memory_space<vmem>>, vector<64x128xf32>
      %c0_12 = arith.constant 0 : index
      %c0_13 = arith.constant 0 : index
      %13 = vector.load %arg5[%c0_12, %c0_13] : memref<1x128xf32, #tpu.memory_space<vmem>>, vector<1x128xf32>
      %14 = vector.broadcast %13 : vector<1x128xf32> to vector<64x128xf32>
      %15 = arith.addf %12, %14 : vector<64x128xf32>
      %cst_14 = arith.constant 5.000000e-01 : f32
      %16 = vector.broadcast %cst_14 : f32 to vector<64x128xf32>
      %17 = arith.mulf %16, %15 : vector<64x128xf32>
      %cst_15 = arith.constant 4.471500e-02 : f32
      %18 = vector.broadcast %cst_15 : f32 to vector<64x128xf32>
      %19 = arith.mulf %18, %15 : vector<64x128xf32>
      %20 = arith.mulf %19, %15 : vector<64x128xf32>
      %21 = arith.mulf %20, %15 : vector<64x128xf32>
      %22 = arith.addf %15, %21 : vector<64x128xf32>
      %cst_16 = arith.constant 0.797884583 : f32
      %23 = vector.broadcast %cst_16 : f32 to vector<64x128xf32>
      %24 = arith.mulf %23, %22 : vector<64x128xf32>
      %25 = math.tanh %24 : vector<64x128xf32>
      %cst_17 = arith.constant 1.000000e+00 : f32
      %26 = vector.broadcast %cst_17 : f32 to vector<64x128xf32>
      %27 = arith.addf %26, %25 : vector<64x128xf32>
      %28 = arith.mulf %17, %27 : vector<64x128xf32>
      %29 = arith.truncf %28 : vector<64x128xf32> to vector<64x128xbf16>
      %c0_18 = arith.constant 0 : index
      %c0_19 = arith.constant 0 : index
      %30 = vector.load %arg6[%c0_18, %c0_19] : memref<64x128xbf16, #tpu.memory_space<vmem>>, vector<64x128xbf16>
      tpu.vector_store %arg6[%c0_18, %c0_19], %29 {strides = array<i32>} : memref<64x128xbf16, #tpu.memory_space<vmem>>, vector<64x128xbf16>,
    } else {
    }
    return
  }
  func.func @transform_0(%arg0: i32, %arg1: i32, %arg2: i32) -> (i32, i32) {
    %c0_i32 = arith.constant 0 : i32
    return %arg0, %arg2 : i32, i32
  }
  func.func @transform_1(%arg0: i32, %arg1: i32, %arg2: i32) -> (i32, i32) {
    %c0_i32 = arith.constant 0 : i32
    return %arg2, %arg1 : i32, i32
  }
  func.func @transform_2(%arg0: i32, %arg1: i32, %arg2: i32) -> (i32, i32) {
    %c0_i32 = arith.constant 0 : i32
    %c0_i32_0 = arith.constant 0 : i32
    return %c0_i32, %arg1 : i32, i32
  }
  func.func @transform_3(%arg0: i32, %arg1: i32, %arg2: i32) -> (i32, i32) {
    %c0_i32 = arith.constant 0 : i32
    return %arg0, %arg1 : i32, i32
  }
}

module attributes {stable_mosaic.version = 11 : i64} {
  func.func @_mm_res_ln_kernel(%arg0: i32, %arg1: i32, %arg2: memref<64x64xbf16, #tpu.memory_space<vmem>>, %arg3: memref<64x32xbf16, #tpu.memory_space<vmem>>, %arg4: memref<1x32xf32, #tpu.memory_space<vmem>>, %arg5: memref<64x32xbf16, #tpu.memory_space<vmem>>, %arg6: memref<1x32xf32, #tpu.memory_space<vmem>>, %arg7: memref<1x32xf32, #tpu.memory_space<vmem>>, %arg8: memref<64x32xbf16, #tpu.memory_space<vmem>>, %arg9: memref<64x32xf32, #tpu.memory_space<vmem>>) attributes {dimension_semantics = [#tpu.dimension_semantics<parallel>, #tpu.dimension_semantics<arbitrary>], iteration_bounds = array<i64: 1, 1>, scalar_prefetch = 0 : i64, scratch_operands = 1 : i64, tpu.core_type = #tpu.core_type<tc>, window_params = [{transform_indices = @transform_0, window_bounds = array<i64: 64, 64>}, {transform_indices = @transform_1, window_bounds = array<i64: 64, 32>}, {pipeline_mode = #tpu.pipeline_mode<synchronous>, transform_indices = @transform_2, window_bounds = array<i64: 1, 32>}, {transform_indices = @transform_3, window_bounds = array<i64: 64, 32>}, {pipeline_mode = #tpu.pipeline_mode<synchronous>, transform_indices = @transform_4, window_bounds = array<i64: 1, 32>}, {pipeline_mode = #tpu.pipeline_mode<synchronous>, transform_indices = @transform_5, window_bounds = array<i64: 1, 32>}, {transform_indices = @transform_6, window_bounds = array<i64: 64, 32>}]} {
    %c0_i32 = arith.constant 0 : i32
    %0 = arith.cmpi eq, %arg1, %c0_i32 : i32
    %1 = arith.extui %0 : i1 to i32
    %c0_i32_0 = arith.constant 0 : i32
    %2 = arith.cmpi ne, %1, %c0_i32_0 : i32
    scf.if %2 {
      %cst_10 = arith.constant 0.000000e+00 : f32
      %12 = vector.broadcast %cst_10 : f32 to vector<64x32xf32>
      %c0_11 = arith.constant 0 : index
      %c0_12 = arith.constant 0 : index
      %13 = vector.load %arg9[%c0_11, %c0_12] : memref<64x32xf32, #tpu.memory_space<vmem>>, vector<64x32xf32>
      tpu.vector_store %arg9[%c0_11, %c0_12], %12 {strides = array<i32>} : memref<64x32xf32, #tpu.memory_space<vmem>>, vector<64x32xf32>,
    } else {
    }
    %c0 = arith.constant 0 : index
    %c0_1 = arith.constant 0 : index
    %3 = vector.load %arg9[%c0, %c0_1] : memref<64x32xf32, #tpu.memory_space<vmem>>, vector<64x32xf32>
    %c0_2 = arith.constant 0 : index
    %c0_3 = arith.constant 0 : index
    %4 = vector.load %arg2[%c0_2, %c0_3] : memref<64x64xbf16, #tpu.memory_space<vmem>>, vector<64x64xbf16>
    %c0_4 = arith.constant 0 : index
    %c0_5 = arith.constant 0 : index
    %5 = vector.load %arg3[%c0_4, %c0_5] : memref<64x32xbf16, #tpu.memory_space<vmem>>, vector<64x32xbf16>
    %cst = arith.constant dense<0.000000e+00> : vector<64x32xf32>
    %6 = tpu.matmul %4, %5, %cst {dimension_numbers = #tpu.dot_dimension_numbers<[1], [0], [0], [1], [0, 0, 1, 1], [], []>} : vector<64x64xbf16>, vector<64x32xbf16>, vector<64x32xf32> -> vector<64x32xf32>
    %7 = arith.addf %3, %6 : vector<64x32xf32>
    %c0_6 = arith.constant 0 : index
    %c0_7 = arith.constant 0 : index
    %8 = vector.load %arg9[%c0_6, %c0_7] : memref<64x32xf32, #tpu.memory_space<vmem>>, vector<64x32xf32>
    tpu.vector_store %arg9[%c0_6, %c0_7], %7 {strides = array<i32>} : memref<64x32xf32, #tpu.memory_space<vmem>>, vector<64x32xf32>,
    %c0_i32_8 = arith.constant 0 : i32
    %9 = arith.cmpi eq, %arg1, %c0_i32_8 : i32
    %10 = arith.extui %9 : i1 to i32
    %c0_i32_9 = arith.constant 0 : i32
    %11 = arith.cmpi ne, %10, %c0_i32_9 : i32
    scf.if %11 {
      %c0_10 = arith.constant 0 : index
      %c0_11 = arith.constant 0 : index
      %12 = vector.load %arg9[%c0_10, %c0_11] : memref<64x32xf32, #tpu.memory_space<vmem>>, vector<64x32xf32>
      %c0_12 = arith.constant 0 : index
      %c0_13 = arith.constant 0 : index
      %13 = vector.load %arg4[%c0_12, %c0_13] : memref<1x32xf32, #tpu.memory_space<vmem>>, vector<1x32xf32>
      %14 = vector.broadcast %13 : vector<1x32xf32> to vector<64x32xf32>
      %15 = arith.addf %12, %14 : vector<64x32xf32>
      %c0_14 = arith.constant 0 : index
      %c0_15 = arith.constant 0 : index
      %16 = vector.load %arg5[%c0_14, %c0_15] : memref<64x32xbf16, #tpu.memory_space<vmem>>, vector<64x32xbf16>
      %17 = arith.extf %16 : vector<64x32xbf16> to vector<64x32xf32>
      %18 = arith.addf %15, %17 : vector<64x32xf32>
      %cst_16 = arith.constant dense<0.000000e+00> : vector<64xf32>
      %19 = vector.multi_reduction <add>, %18, %cst_16 [1] : vector<64x32xf32> to vector<64xf32>
      %20 = vector.shape_cast %19 : vector<64xf32> to vector<64x1xf32>
      %cst_17 = arith.constant 3.200000e+01 : f32
      %21 = vector.broadcast %cst_17 : f32 to vector<64x1xf32>
      %22 = arith.divf %20, %21 : vector<64x1xf32>
      %23 = vector.broadcast %22 : vector<64x1xf32> to vector<64x32xf32>
      %24 = arith.subf %18, %23 : vector<64x32xf32>
      %25 = vector.broadcast %22 : vector<64x1xf32> to vector<64x32xf32>
      %26 = arith.subf %18, %25 : vector<64x32xf32>
      %27 = arith.mulf %24, %26 : vector<64x32xf32>
      %cst_18 = arith.constant dense<0.000000e+00> : vector<64xf32>
      %28 = vector.multi_reduction <add>, %27, %cst_18 [1] : vector<64x32xf32> to vector<64xf32>
      %29 = vector.shape_cast %28 : vector<64xf32> to vector<64x1xf32>
      %cst_19 = arith.constant 3.200000e+01 : f32
      %30 = vector.broadcast %cst_19 : f32 to vector<64x1xf32>
      %31 = arith.divf %29, %30 : vector<64x1xf32>
      %32 = vector.broadcast %22 : vector<64x1xf32> to vector<64x32xf32>
      %33 = arith.subf %18, %32 : vector<64x32xf32>
      %cst_20 = arith.constant 9.99999974E-6 : f32
      %34 = vector.broadcast %cst_20 : f32 to vector<64x1xf32>
      %35 = arith.addf %31, %34 : vector<64x1xf32>
      %36 = math.rsqrt %35 : vector<64x1xf32>
      %37 = vector.broadcast %36 : vector<64x1xf32> to vector<64x32xf32>
      %38 = arith.mulf %33, %37 : vector<64x32xf32>
      %c0_21 = arith.constant 0 : index
      %c0_22 = arith.constant 0 : index
      %39 = vector.load %arg6[%c0_21, %c0_22] : memref<1x32xf32, #tpu.memory_space<vmem>>, vector<1x32xf32>
      %40 = vector.broadcast %39 : vector<1x32xf32> to vector<64x32xf32>
      %41 = arith.mulf %38, %40 : vector<64x32xf32>
      %c0_23 = arith.constant 0 : index
      %c0_24 = arith.constant 0 : index
      %42 = vector.load %arg7[%c0_23, %c0_24] : memref<1x32xf32, #tpu.memory_space<vmem>>, vector<1x32xf32>
      %43 = vector.broadcast %42 : vector<1x32xf32> to vector<64x32xf32>
      %44 = arith.addf %41, %43 : vector<64x32xf32>
      %45 = arith.truncf %44 : vector<64x32xf32> to vector<64x32xbf16>
      %c0_25 = arith.constant 0 : index
      %c0_26 = arith.constant 0 : index
      %46 = vector.load %arg8[%c0_25, %c0_26] : memref<64x32xbf16, #tpu.memory_space<vmem>>, vector<64x32xbf16>
      tpu.vector_store %arg8[%c0_25, %c0_26], %45 {strides = array<i32>} : memref<64x32xbf16, #tpu.memory_space<vmem>>, vector<64x32xbf16>,
    } else {
    }
    return
  }
  func.func @transform_0(%arg0: i32, %arg1: i32) -> (i32, i32) {
    %c0_i32 = arith.constant 0 : i32
    return %arg0, %arg1 : i32, i32
  }
  func.func @transform_1(%arg0: i32, %arg1: i32) -> (i32, i32) {
    %c0_i32 = arith.constant 0 : i32
    %c0_i32_0 = arith.constant 0 : i32
    return %arg1, %c0_i32 : i32, i32
  }
  func.func @transform_2(%arg0: i32, %arg1: i32) -> (i32, i32) {
    %c0_i32 = arith.constant 0 : i32
    %c0_i32_0 = arith.constant 0 : i32
    %c0_i32_1 = arith.constant 0 : i32
    return %c0_i32, %c0_i32_0 : i32, i32
  }
  func.func @transform_3(%arg0: i32, %arg1: i32) -> (i32, i32) {
    %c0_i32 = arith.constant 0 : i32
    %c0_i32_0 = arith.constant 0 : i32
    return %arg0, %c0_i32 : i32, i32
  }
  func.func @transform_4(%arg0: i32, %arg1: i32) -> (i32, i32) {
    %c0_i32 = arith.constant 0 : i32
    %c0_i32_0 = arith.constant 0 : i32
    %c0_i32_1 = arith.constant 0 : i32
    return %c0_i32, %c0_i32_0 : i32, i32
  }
  func.func @transform_5(%arg0: i32, %arg1: i32) -> (i32, i32) {
    %c0_i32 = arith.constant 0 : i32
    %c0_i32_0 = arith.constant 0 : i32
    %c0_i32_1 = arith.constant 0 : i32
    return %c0_i32, %c0_i32_0 : i32, i32
  }
  func.func @transform_6(%arg0: i32, %arg1: i32) -> (i32, i32) {
    %c0_i32 = arith.constant 0 : i32
    %c0_i32_0 = arith.constant 0 : i32
    return %arg0, %c0_i32 : i32, i32
  }
}

module attributes {stable_mosaic.version = 11 : i64} {
  func.func @_mm_kernel(%arg0: i32, %arg1: i32, %arg2: i32, %arg3: memref<8x32xbf16, #tpu.memory_space<vmem>>, %arg4: memref<32x128xbf16, #tpu.memory_space<vmem>>, %arg5: memref<1x128xf32, #tpu.memory_space<vmem>>, %arg6: memref<8x128xbf16, #tpu.memory_space<vmem>>, %arg7: memref<8x128xf32, #tpu.memory_space<vmem>>) attributes {dimension_semantics = [#tpu.dimension_semantics<parallel>, #tpu.dimension_semantics<parallel>, #tpu.dimension_semantics<arbitrary>], iteration_bounds = array<i64: 1, 1, 1>, scalar_prefetch = 0 : i64, scratch_operands = 1 : i64, tpu.core_type = #tpu.core_type<tc>, window_params = [{transform_indices = @transform_0, window_bounds = array<i64: 8, 32>}, {transform_indices = @transform_1, window_bounds = array<i64: 32, 128>}, {transform_indices = @transform_2, window_bounds = array<i64: 1, 128>}, {transform_indices = @transform_3, window_bounds = array<i64: 8, 128>}]} {
    %c0_i32 = arith.constant 0 : i32
    %0 = arith.cmpi eq, %arg2, %c0_i32 : i32
    %1 = arith.extui %0 : i1 to i32
    %c0_i32_0 = arith.constant 0 : i32
    %2 = arith.cmpi ne, %1, %c0_i32_0 : i32
    scf.if %2 {
      %cst_10 = arith.constant 0.000000e+00 : f32
      %12 = vector.broadcast %cst_10 : f32 to vector<8x128xf32>
      %c0_11 = arith.constant 0 : index
      %c0_12 = arith.constant 0 : index
      %13 = vector.load %arg7[%c0_11, %c0_12] : memref<8x128xf32, #tpu.memory_space<vmem>>, vector<8x128xf32>
      tpu.vector_store %arg7[%c0_11, %c0_12], %12 {strides = array<i32>} : memref<8x128xf32, #tpu.memory_space<vmem>>, vector<8x128xf32>,
    } else {
    }
    %c0 = arith.constant 0 : index
    %c0_1 = arith.constant 0 : index
    %3 = vector.load %arg7[%c0, %c0_1] : memref<8x128xf32, #tpu.memory_space<vmem>>, vector<8x128xf32>
    %c0_2 = arith.constant 0 : index
    %c0_3 = arith.constant 0 : index
    %4 = vector.load %arg3[%c0_2, %c0_3] : memref<8x32xbf16, #tpu.memory_space<vmem>>, vector<8x32xbf16>
    %c0_4 = arith.constant 0 : index
    %c0_5 = arith.constant 0 : index
    %5 = vector.load %arg4[%c0_4, %c0_5] : memref<32x128xbf16, #tpu.memory_space<vmem>>, vector<32x128xbf16>
    %cst = arith.constant dense<0.000000e+00> : vector<8x128xf32>
    %6 = tpu.matmul %4, %5, %cst {dimension_numbers = #tpu.dot_dimension_numbers<[1], [0], [0], [1], [0, 0, 1, 1], [], []>} : vector<8x32xbf16>, vector<32x128xbf16>, vector<8x128xf32> -> vector<8x128xf32>
    %7 = arith.addf %3, %6 : vector<8x128xf32>
    %c0_6 = arith.constant 0 : index
    %c0_7 = arith.constant 0 : index
    %8 = vector.load %arg7[%c0_6, %c0_7] : memref<8x128xf32, #tpu.memory_space<vmem>>, vector<8x128xf32>
    tpu.vector_store %arg7[%c0_6, %c0_7], %7 {strides = array<i32>} : memref<8x128xf32, #tpu.memory_space<vmem>>, vector<8x128xf32>,
    %c0_i32_8 = arith.constant 0 : i32
    %9 = arith.cmpi eq, %arg2, %c0_i32_8 : i32
    %10 = arith.extui %9 : i1 to i32
    %c0_i32_9 = arith.constant 0 : i32
    %11 = arith.cmpi ne, %10, %c0_i32_9 : i32
    scf.if %11 {
      %c0_10 = arith.constant 0 : index
      %c0_11 = arith.constant 0 : index
      %12 = vector.load %arg7[%c0_10, %c0_11] : memref<8x128xf32, #tpu.memory_space<vmem>>, vector<8x128xf32>
      %c0_12 = arith.constant 0 : index
      %c0_13 = arith.constant 0 : index
      %13 = vector.load %arg5[%c0_12, %c0_13] : memref<1x128xf32, #tpu.memory_space<vmem>>, vector<1x128xf32>
      %14 = vector.broadcast %13 : vector<1x128xf32> to vector<8x128xf32>
      %15 = arith.addf %12, %14 : vector<8x128xf32>
      %16 = math.tanh %15 : vector<8x128xf32>
      %17 = arith.truncf %16 : vector<8x128xf32> to vector<8x128xbf16>
      %c0_14 = arith.constant 0 : index
      %c0_15 = arith.constant 0 : index
      %18 = vector.load %arg6[%c0_14, %c0_15] : memref<8x128xbf16, #tpu.memory_space<vmem>>, vector<8x128xbf16>
      tpu.vector_store %arg6[%c0_14, %c0_15], %17 {strides = array<i32>} : memref<8x128xbf16, #tpu.memory_space<vmem>>, vector<8x128xbf16>,
    } else {
    }
    return
  }
  func.func @transform_0(%arg0: i32, %arg1: i32, %arg2: i32) -> (i32, i32) {
    %c0_i32 = arith.constant 0 : i32
    return %arg0, %arg2 : i32, i32
  }
  func.func @transform_1(%arg0: i32, %arg1: i32, %arg2: i32) -> (i32, i32) {
    %c0_i32 = arith.constant 0 : i32
    return %arg2, %arg1 : i32, i32
  }
  func.func @transform_2(%arg0: i32, %arg1: i32, %arg2: i32) -> (i32, i32) {
    %c0_i32 = arith.constant 0 : i32
    %c0_i32_0 = arith.constant 0 : i32
    return %c0_i32, %arg1 : i32, i32
  }
  func.func @transform_3(%arg0: i32, %arg1: i32, %arg2: i32) -> (i32, i32) {
    %c0_i32 = arith.constant 0 : i32
    return %arg0, %arg1 : i32, i32
  }
}

module attributes {stable_mosaic.version = 11 : i64} {
  func.func @_mm_kernel(%arg0: i32, %arg1: i32, %arg2: i32, %arg3: memref<72x32xbf16, #tpu.memory_space<vmem>>, %arg4: memref<32x128xbf16, #tpu.memory_space<vmem>>, %arg5: memref<1x128xf32, #tpu.memory_space<vmem>>, %arg6: memref<72x128xf32, #tpu.memory_space<vmem>>, %arg7: memref<72x128xf32, #tpu.memory_space<vmem>>) attributes {dimension_semantics = [#tpu.dimension_semantics<parallel>, #tpu.dimension_semantics<parallel>, #tpu.dimension_semantics<arbitrary>], iteration_bounds = array<i64: 1, 1, 1>, scalar_prefetch = 0 : i64, scratch_operands = 1 : i64, tpu.core_type = #tpu.core_type<tc>, window_params = [{transform_indices = @transform_0, window_bounds = array<i64: 72, 32>}, {transform_indices = @transform_1, window_bounds = array<i64: 32, 128>}, {transform_indices = @transform_2, window_bounds = array<i64: 1, 128>}, {transform_indices = @transform_3, window_bounds = array<i64: 72, 128>}]} {
    %c0_i32 = arith.constant 0 : i32
    %0 = arith.cmpi eq, %arg2, %c0_i32 : i32
    %1 = arith.extui %0 : i1 to i32
    %c0_i32_0 = arith.constant 0 : i32
    %2 = arith.cmpi ne, %1, %c0_i32_0 : i32
    scf.if %2 {
      %cst_10 = arith.constant 0.000000e+00 : f32
      %12 = vector.broadcast %cst_10 : f32 to vector<72x128xf32>
      %c0_11 = arith.constant 0 : index
      %c0_12 = arith.constant 0 : index
      %13 = vector.load %arg7[%c0_11, %c0_12] : memref<72x128xf32, #tpu.memory_space<vmem>>, vector<72x128xf32>
      tpu.vector_store %arg7[%c0_11, %c0_12], %12 {strides = array<i32>} : memref<72x128xf32, #tpu.memory_space<vmem>>, vector<72x128xf32>,
    } else {
    }
    %c0 = arith.constant 0 : index
    %c0_1 = arith.constant 0 : index
    %3 = vector.load %arg7[%c0, %c0_1] : memref<72x128xf32, #tpu.memory_space<vmem>>, vector<72x128xf32>
    %c0_2 = arith.constant 0 : index
    %c0_3 = arith.constant 0 : index
    %4 = vector.load %arg3[%c0_2, %c0_3] : memref<72x32xbf16, #tpu.memory_space<vmem>>, vector<72x32xbf16>
    %c0_4 = arith.constant 0 : index
    %c0_5 = arith.constant 0 : index
    %5 = vector.load %arg4[%c0_4, %c0_5] : memref<32x128xbf16, #tpu.memory_space<vmem>>, vector<32x128xbf16>
    %cst = arith.constant dense<0.000000e+00> : vector<72x128xf32>
    %6 = tpu.matmul %4, %5, %cst {dimension_numbers = #tpu.dot_dimension_numbers<[1], [0], [0], [1], [0, 0, 1, 1], [], []>} : vector<72x32xbf16>, vector<32x128xbf16>, vector<72x128xf32> -> vector<72x128xf32>
    %7 = arith.addf %3, %6 : vector<72x128xf32>
    %c0_6 = arith.constant 0 : index
    %c0_7 = arith.constant 0 : index
    %8 = vector.load %arg7[%c0_6, %c0_7] : memref<72x128xf32, #tpu.memory_space<vmem>>, vector<72x128xf32>
    tpu.vector_store %arg7[%c0_6, %c0_7], %7 {strides = array<i32>} : memref<72x128xf32, #tpu.memory_space<vmem>>, vector<72x128xf32>,
    %c0_i32_8 = arith.constant 0 : i32
    %9 = arith.cmpi eq, %arg2, %c0_i32_8 : i32
    %10 = arith.extui %9 : i1 to i32
    %c0_i32_9 = arith.constant 0 : i32
    %11 = arith.cmpi ne, %10, %c0_i32_9 : i32
    scf.if %11 {
      %c0_10 = arith.constant 0 : index
      %c0_11 = arith.constant 0 : index
      %12 = vector.load %arg7[%c0_10, %c0_11] : memref<72x128xf32, #tpu.memory_space<vmem>>, vector<72x128xf32>
      %c0_12 = arith.constant 0 : index
      %c0_13 = arith.constant 0 : index
      %13 = vector.load %arg5[%c0_12, %c0_13] : memref<1x128xf32, #tpu.memory_space<vmem>>, vector<1x128xf32>
      %14 = vector.broadcast %13 : vector<1x128xf32> to vector<72x128xf32>
      %15 = arith.addf %12, %14 : vector<72x128xf32>
      %c0_14 = arith.constant 0 : index
      %c0_15 = arith.constant 0 : index
      %16 = vector.load %arg6[%c0_14, %c0_15] : memref<72x128xf32, #tpu.memory_space<vmem>>, vector<72x128xf32>
      tpu.vector_store %arg6[%c0_14, %c0_15], %15 {strides = array<i32>} : memref<72x128xf32, #tpu.memory_space<vmem>>, vector<72x128xf32>,
    } else {
    }
    return
  }
  func.func @transform_0(%arg0: i32, %arg1: i32, %arg2: i32) -> (i32, i32) {
    %c0_i32 = arith.constant 0 : i32
    return %arg0, %arg2 : i32, i32
  }
  func.func @transform_1(%arg0: i32, %arg1: i32, %arg2: i32) -> (i32, i32) {
    %c0_i32 = arith.constant 0 : i32
    return %arg2, %arg1 : i32, i32
  }
  func.func @transform_2(%arg0: i32, %arg1: i32, %arg2: i32) -> (i32, i32) {
    %c0_i32 = arith.constant 0 : i32
    %c0_i32_0 = arith.constant 0 : i32
    return %c0_i32, %arg1 : i32, i32
  }
  func.func @transform_3(%arg0: i32, %arg1: i32, %arg2: i32) -> (i32, i32) {
    %c0_i32 = arith.constant 0 : i32
    return %arg0, %arg1 : i32, i32
  }
}

</mosaic_0001>

<llo_original>
// kernel: bert_forward.13
$region0: #{bert_forward.13}
  #allocation0 [shape = 'u32[]', space=smem, size = 0x4, offset = 0x4, fixed_abs, tag = 'smem constant byte address 0x4 - core index']
  #allocation1 [shape = 'u32[144,128]{1,0:T(1,128)}', space=vmem, size = 0x12000, scoped, tag = 'internal scratch']
  %s0 = inlined_call_operand.vmem [shape: bf16[2,4,32,8], index: 0, kind: input, shape index: {}]
  %s1 = inlined_call_operand.vmem [shape: bf16[2,4,32,8], index: 1, kind: input, shape index: {}]
  %s2 = inlined_call_operand.vmem [shape: bf16[2,4,32,8], index: 2, kind: input, shape index: {}]
  %s3 = inlined_call_operand.vmem [shape: f32[2,1,32], index: 3, kind: input, shape index: {}]
  %s4 = inlined_call_operand.vmem [shape: bf16[2,4,32,8], index: 4, kind: output, shape index: {}]
  %s5 = sld [smem:[#allocation0]]
  $region49: #{bert_forward.13} parent=0
    _
  %s7 = ssub.s32 1, %s5
  %s8 = scalar_select 0, %s7, %s5
  loop: start=0, step=1, limit=10
  $region2: #{bert_forward.13} parent=0 // loop_pre_header
    _
  $region3: #{bert_forward.13} parent=0 // loop_header
    %s10 = sphi 0, %s14
    %p11 = scmp.ge.s32.totalorder %s10, 10
    %s17 = sphi 0, %s29
    %s18 = sphi 0, %s25
    %s19 = sphi 0, %s17
    %s20 = sphi 0, %s18
    %s21 = sphi 0, %s19
    %s22 = sphi 0, %s20
    %s34 = sphi 0, %s36
    %s37 = sphi 0, %s34
    %s38 = sphi 0, %s37
    %s54 = sphi 0, %s38
    %s62 = sphi 0, %s64
    %s65 = sphi 0, %s62
    %s66 = sphi 0, %s65
    %s82 = sphi 0, %s66
    %s90 = sphi 0, %s92
    %s93 = sphi 0, %s90
    %s94 = sphi 0, %s93
    %s110 = sphi 0, %s94
    %s116 = sphi 0, %s118
    %s119 = sphi 0, %s116
    %s120 = sphi 0, %s119
    %s136 = sphi 0, %s120
    %s144 = sphi 0, %s146
    %s147 = sphi 0, %s144
    %s148 = sphi 0, %s147
    %s164 = sphi 0, %s148
  $region4: #{bert_forward.13} parent=0 // loop_header_branch
    %13 = sbr.rel (%p11) target = $region8
  $region5: #{bert_forward.13} parent=0 // loop_body
    %s15 = ssub.s32 %s10, 1
    %s16 = ssub.s32 %s10, 2
    %s23 = sadd.s32 1, %s18
    %p24 = scmp.ge.s32.totalorder %s23, 4
    %s25 = scalar_select %p24, 0, %s23
    %s26 = sadd.s32 1, %s17
    %s27 = scalar_select %p24, %s26, %s17
    %p28 = scmp.ge.s32.totalorder %s27, 2
    %s29 = scalar_select %p28, 0, %s27
    %s30 = ssub.s32 %s17, %s29
    %s31 = ssub.s32 %s18, %s25
    %s32 = sor.u32 %s30, %s31
    %p33 = scmp.eq.s32.totalorder %s32, 0
    %s35 = sadd.s32 %s34, 1
    %s36 = scalar_select %p33, %s34, %s35
    %p39 = pneg %p33
    %p40 = scmp.eq.s32.totalorder %s10, 7
    %p41 = por %p39, %p40
    %p42 = scmp.ne.s32.totalorder %s34, %s37
    %p43 = scmp.eq.s32.totalorder %s10, 0
    %p44 = por %p42, %p43
    %p45 = scmp.ne.s32.totalorder %s34, %s37
    %p46 = scmp.eq.s32.totalorder %s15, 7
    %p47 = por %p45, %p46
    %p48 = scmp.ne.s32.totalorder %s37, %s38
    %p49 = scmp.eq.s32.totalorder %s15, 0
    %p50 = por %p48, %p49
    %p51 = scmp.ne.s32.totalorder %s37, %s38
    %p52 = scmp.eq.s32.totalorder %s16, 7
    %p53 = por %p51, %p52
    %p55 = scmp.ne.s32.totalorder %s38, %s54
    %p56 = scmp.eq.s32.totalorder %s16, 0
    %p57 = por %p55, %p56
    %s58 = ssub.s32 %s17, %s29
    %s59 = ssub.s32 %s18, %s25
    %s60 = sor.u32 %s58, %s59
    %p61 = scmp.eq.s32.totalorder %s60, 0
    %s63 = sadd.s32 %s62, 1
    %s64 = scalar_select %p61, %s62, %s63
    %p67 = pneg %p61
    %p68 = scmp.eq.s32.totalorder %s10, 7
    %p69 = por %p67, %p68
    %p70 = scmp.ne.s32.totalorder %s62, %s65
    %p71 = scmp.eq.s32.totalorder %s10, 0
    %p72 = por %p70, %p71
    %p73 = scmp.ne.s32.totalorder %s62, %s65
    %p74 = scmp.eq.s32.totalorder %s15, 7
    %p75 = por %p73, %p74
    %p76 = scmp.ne.s32.totalorder %s65, %s66
    %p77 = scmp.eq.s32.totalorder %s15, 0
    %p78 = por %p76, %p77
    %p79 = scmp.ne.s32.totalorder %s65, %s66
    %p80 = scmp.eq.s32.totalorder %s16, 7
    %p81 = por %p79, %p80
    %p83 = scmp.ne.s32.totalorder %s66, %s82
    %p84 = scmp.eq.s32.totalorder %s16, 0
    %p85 = por %p83, %p84
    %s86 = ssub.s32 %s17, %s29
    %s87 = ssub.s32 %s18, %s25
    %s88 = sor.u32 %s86, %s87
    %p89 = scmp.eq.s32.totalorder %s88, 0
    %s91 = sadd.s32 %s90, 1
    %s92 = scalar_select %p89, %s90, %s91
    %p95 = pneg %p89
    %p96 = scmp.eq.s32.totalorder %s10, 7
    %p97 = por %p95, %p96
    %p98 = scmp.ne.s32.totalorder %s90, %s93
    %p99 = scmp.eq.s32.totalorder %s10, 0
    %p100 = por %p98, %p99
    %p101 = scmp.ne.s32.totalorder %s90, %s93
    %p102 = scmp.eq.s32.totalorder %s15, 7
    %p103 = por %p101, %p102
    %p104 = scmp.ne.s32.totalorder %s93, %s94
    %p105 = scmp.eq.s32.totalorder %s15, 0
    %p106 = por %p104, %p105
    %p107 = scmp.ne.s32.totalorder %s93, %s94
    %p108 = scmp.eq.s32.totalorder %s16, 7
    %p109 = por %p107, %p108
    %p111 = scmp.ne.s32.totalorder %s94, %s110
    %p112 = scmp.eq.s32.totalorder %s16, 0
    %p113 = por %p111, %p112
    %s114 = ssub.s32 %s17, %s29
    %p115 = scmp.eq.s32.totalorder %s114, 0
    %s117 = sadd.s32 %s116, 1
    %s118 = scalar_select %p115, %s116, %s117
    %p121 = pneg %p115
    %p122 = scmp.eq.s32.totalorder %s10, 7
    %p123 = por %p121, %p122
    %p124 = scmp.ne.s32.totalorder %s116, %s119
    %p125 = scmp.eq.s32.totalorder %s10, 0
    %p126 = por %p124, %p125
    %p127 = scmp.ne.s32.totalorder %s116, %s119
    %p128 = scmp.eq.s32.totalorder %s15, 7
    %p129 = por %p127, %p128
    %p130 = scmp.ne.s32.totalorder %s119, %s120
    %p131 = scmp.eq.s32.totalorder %s15, 0
    %p132 = por %p130, %p131
    %p133 = scmp.ne.s32.totalorder %s119, %s120
    %p134 = scmp.eq.s32.totalorder %s16, 7
    %p135 = por %p133, %p134
    %p137 = scmp.ne.s32.totalorder %s120, %s136
    %p138 = scmp.eq.s32.totalorder %s16, 0
    %p139 = por %p137, %p138
    %s140 = ssub.s32 %s17, %s29
    %s141 = ssub.s32 %s18, %s25
    %s142 = sor.u32 %s140, %s141
    %p143 = scmp.eq.s32.totalorder %s142, 0
    %s145 = sadd.s32 %s144, 1
    %s146 = scalar_select %p143, %s144, %s145
    %p149 = pneg %p143
    %p150 = scmp.eq.s32.totalorder %s10, 7
    %p151 = por %p149, %p150
    %p152 = scmp.ne.s32.totalorder %s144, %s147
    %p153 = scmp.eq.s32.totalorder %s10, 0
    %p154 = por %p152, %p153
    %p155 = scmp.ne.s32.totalorder %s144, %s147
    %p156 = scmp.eq.s32.totalorder %s15, 7
    %p157 = por %p155, %p156
    %p158 = scmp.ne.s32.totalorder %s147, %s148
    %p159 = scmp.eq.s32.totalorder %s15, 0
    %p160 = por %p158, %p159
    %p161 = scmp.ne.s32.totalorder %s147, %s148
    %p162 = scmp.eq.s32.totalorder %s16, 7
    %p163 = por %p161, %p162
    %p165 = scmp.ne.s32.totalorder %s148, %s164
    %p166 = scmp.eq.s32.totalorder %s16, 0
    %p167 = por %p165, %p166
    %p168 = scmp.le.s32.totalorder 1, %s10
    %p169 = scmp.lt.s32.totalorder %s10, 9
    %p170 = pnand %p168, %p169
    %p171 = pneg %p170
    // Predicated region
    $region9: #{bert_forward.13} parent=5 // pred_check
      _
    $region10: #{bert_forward.13} parent=5 // pred_check_branch
      %173 = sbr.rel (%p170) target = $region12
    $region11: #{bert_forward.13} parent=5 // pred_region
      %s174 = ssub.s32 %s10, 1
    $region12: #{bert_forward.13} parent=5 // pred_fallthru
      _
    %p175 = scmp.lt.s32.totalorder %s10, 8
    // Predicated region
    $region13: #{bert_forward.13} parent=5 // pred_check
      %p176 = pneg %p175
    $region14: #{bert_forward.13} parent=5 // pred_check_branch
      %178 = sbr.rel (%p176) target = $region16
    $region15: #{bert_forward.13} parent=5 // pred_region
      // Predicated region
      $region17: #{bert_forward.13} parent=15 // pred_check
        %p179 = pneg %p44
      $region18: #{bert_forward.13} parent=15 // pred_check_branch
        %181 = sbr.rel (%p179) target = $region20
      $region19: #{bert_forward.13} parent=15 // pred_region
        %p182 = scmp.lt.s32.totalorder %s17, 1
        %s183 = scalar_select %p182, %s17, 1
        %p184 = scmp.lt.s32.totalorder %s18, 3
        %s185 = scalar_select %p184, %s18, 3
        %s186 = smul.addr %s185, 4
        %s187 = smul.addr %s183, 16
        %s188 = sadd.s32 %s186, %s187
        %s189 = smul.addr %s188, 4
        %s190 = scalar_lea.vmem %s0, %s189
      $region20: #{bert_forward.13} parent=15 // pred_fallthru
        _
      // Predicated region
      $region21: #{bert_forward.13} parent=15 // pred_check
        %p191 = pneg %p72
      $region22: #{bert_forward.13} parent=15 // pred_check_branch
        %193 = sbr.rel (%p191) target = $region24
      $region23: #{bert_forward.13} parent=15 // pred_region
        %p194 = scmp.lt.s32.totalorder %s17, 1
        %s195 = scalar_select %p194, %s17, 1
        %p196 = scmp.lt.s32.totalorder %s18, 3
        %s197 = scalar_select %p196, %s18, 3
        %s198 = smul.addr %s197, 4
        %s199 = smul.addr %s195, 16
        %s200 = sadd.s32 %s198, %s199
        %s201 = smul.addr %s200, 4
        %s202 = scalar_lea.vmem %s1, %s201
      $region24: #{bert_forward.13} parent=15 // pred_fallthru
        _
      // Predicated region
      $region25: #{bert_forward.13} parent=15 // pred_check
        %p203 = pneg %p100
      $region26: #{bert_forward.13} parent=15 // pred_check_branch
        %205 = sbr.rel (%p203) target = $region28
      $region27: #{bert_forward.13} parent=15 // pred_region
        %p206 = scmp.lt.s32.totalorder %s17, 1
        %s207 = scalar_select %p206, %s17, 1
        %p208 = scmp.lt.s32.totalorder %s18, 3
        %s209 = scalar_select %p208, %s18, 3
        %s210 = smul.addr %s209, 4
        %s211 = smul.addr %s207, 16
        %s212 = sadd.s32 %s210, %s211
        %s213 = smul.addr %s212, 4
        %s214 = scalar_lea.vmem %s2, %s213
      $region28: #{bert_forward.13} parent=15 // pred_fallthru
        _
      // Predicated region
      $region29: #{bert_forward.13} parent=15 // pred_check
        %p215 = pneg %p126
      $region30: #{bert_forward.13} parent=15 // pred_check_branch
        %217 = sbr.rel (%p215) target = $region32
      $region31: #{bert_forward.13} parent=15 // pred_region
        %p218 = scmp.lt.s32.totalorder %s17, 1
        %s219 = scalar_select %p218, %s17, 1
        %s220 = scalar_lea.vmem %s3, %s219
      $region32: #{bert_forward.13} parent=15 // pred_fallthru
        _
    $region16: #{bert_forward.13} parent=5 // pred_fallthru
      _
    %p221 = scmp.le.s32.totalorder 1, %s10
    %p222 = scmp.lt.s32.totalorder %s10, 9
    %p223 = pnand %p221, %p222
    %p224 = pneg %p223
    // Predicated region
    $region33: #{bert_forward.13} parent=5 // pred_check
      _
    $region34: #{bert_forward.13} parent=5 // pred_check_branch
      %226 = sbr.rel (%p223) target = $region36
    $region35: #{bert_forward.13} parent=5 // pred_region
      %s227 = ssub.s32 %s10, 1
      %p228 = scmp.lt.s32.totalorder %s19, 1
      %s229 = scalar_select %p228, %s19, 1
      %p230 = scmp.lt.s32.totalorder %s20, 3
      %s231 = scalar_select %p230, %s20, 3
      %s232 = smul.addr %s231, 4
      %s233 = smul.addr %s229, 16
      %s234 = sadd.s32 %s232, %s233
      %s235 = smul.addr %s234, 4
      %s236 = scalar_lea.vmem %s0, %s235
      %p237 = pneg %p50
      %p238 = pneg %p47
      %p239 = scmp.lt.s32.totalorder %s19, 1
      %s240 = scalar_select %p239, %s19, 1
      %p241 = scmp.lt.s32.totalorder %s20, 3
      %s242 = scalar_select %p241, %s20, 3
      %s243 = smul.addr %s242, 4
      %s244 = smul.addr %s240, 16
      %s245 = sadd.s32 %s243, %s244
      %s246 = smul.addr %s245, 4
      %s247 = scalar_lea.vmem %s1, %s246
      %p248 = pneg %p78
      %p249 = pneg %p75
      %p250 = scmp.lt.s32.totalorder %s19, 1
      %s251 = scalar_select %p250, %s19, 1
      %p252 = scmp.lt.s32.totalorder %s20, 3
      %s253 = scalar_select %p252, %s20, 3
      %s254 = smul.addr %s253, 4
      %s255 = smul.addr %s251, 16
      %s256 = sadd.s32 %s254, %s255
      %s257 = smul.addr %s256, 4
      %s258 = scalar_lea.vmem %s2, %s257
      %p259 = pneg %p106
      %p260 = pneg %p103
      %p261 = scmp.lt.s32.totalorder %s19, 1
      %s262 = scalar_select %p261, %s19, 1
      %s263 = scalar_lea.vmem %s3, %s262
      %p264 = pneg %p132
      %p265 = pneg %p129
      %p266 = pneg %p160
      %p267 = pneg %p157
      %p268 = scmp.lt.s32.totalorder %s19, 1
      %s269 = scalar_select %p268, %s19, 1
      %p270 = scmp.lt.s32.totalorder %s20, 3
      %s271 = scalar_select %p270, %s20, 3
      %s272 = smul.addr %s271, 4
      %s273 = smul.addr %s269, 16
      %s274 = sadd.s32 %s272, %s273
      %s275 = smul.addr %s274, 4
      %s276 = scalar_lea.vmem %s4, %s275
      %p277 = scmp.lt.s32.totalorder %s19, 1
      %s278 = scalar_select %p277, %s19, 1
      %p279 = scmp.lt.s32.totalorder %s20, 3
      %s280 = scalar_select %p279, %s20, 3
      %s281 = smul.addr %s280, 4
      %s282 = smul.addr %s278, 16
      %s283 = sadd.s32 %s281, %s282
      %s284 = smul.addr %s283, 4
      %s285 = scalar_lea.vmem %s0, %s284
      %p286 = scmp.lt.s32.totalorder %s19, 1
      %s287 = scalar_select %p286, %s19, 1
      %p288 = scmp.lt.s32.totalorder %s20, 3
      %s289 = scalar_select %p288, %s20, 3
      %s290 = smul.addr %s289, 4
      %s291 = smul.addr %s287, 16
      %s292 = sadd.s32 %s290, %s291
      %s293 = smul.addr %s292, 4
      %s294 = scalar_lea.vmem %s1, %s293
      %p295 = scmp.lt.s32.totalorder %s19, 1
      %s296 = scalar_select %p295, %s19, 1
      %p297 = scmp.lt.s32.totalorder %s20, 3
      %s298 = scalar_select %p297, %s20, 3
      %s299 = smul.addr %s298, 4
      %s300 = smul.addr %s296, 16
      %s301 = sadd.s32 %s299, %s300
      %s302 = smul.addr %s301, 4
      %s303 = scalar_lea.vmem %s2, %s302
      %p304 = scmp.lt.s32.totalorder %s19, 1
      %s305 = scalar_select %p304, %s19, 1
      %s306 = scalar_lea.vmem %s3, %s305
      %p307 = scmp.lt.s32.totalorder %s19, 1
      %s308 = scalar_select %p307, %s19, 1
      %p309 = scmp.lt.s32.totalorder %s20, 3
      %s310 = scalar_select %p309, %s20, 3
      %s311 = smul.addr %s310, 4
      %s312 = smul.addr %s308, 16
      %s313 = sadd.s32 %s311, %s312
      %s314 = smul.addr %s313, 4
      %s315 = scalar_lea.vmem %s4, %s314
      %v317 = vld [vmem:[%s285] sm:$0xf]
      %v318 = vld [vmem:[%s285 + $0x4] sm:$0xf]
      %v319 = vld [vmem:[%s285 + $0x8] sm:$0xf]
      %v320 = vld [vmem:[%s285 + $0xc] sm:$0xf]
      %v321 = vld [vmem:[%s294] sm:$0xf]
      %v322 = vld [vmem:[%s294 + $0x4] sm:$0xf]
      %v323 = vld [vmem:[%s294 + $0x8] sm:$0xf]
      %v324 = vld [vmem:[%s294 + $0xc] sm:$0xf]
      %v325 = vld [vmem:[%s303] sm:$0xf]
      %v326 = vld [vmem:[%s303 + $0x4] sm:$0xf]
      %v327 = vld [vmem:[%s303 + $0x8] sm:$0xf]
      %v328 = vld [vmem:[%s303 + $0xc] sm:$0xf]
      %v329 = vld [vmem:[%s306] sm:$0x1]
      %v334 = vunpack.c.l.b16 %v317
      %v335 = vunpack.c.l.b16 %v318
      %v336 = vunpack.c.l.b16 %v319
      %v337 = vunpack.c.l.b16 %v320
      %v338 = vpack.c.b16 %v335, %v334
      %v339 = vpack.c.b16 %v337, %v336
      %v344 = vunpack.c.l.b16 %v321
      %v345 = vunpack.c.l.b16 %v322
      %v346 = vunpack.c.l.b16 %v323
      %v347 = vunpack.c.l.b16 %v324
      %v348 = vpack.c.b16 %v345, %v344
      %v349 = vpack.c.b16 %v347, %v346
      %vm350 = vcmask 64512
      %v352 = vsel %vm350, %v338, 0
      %v355 = vsel %vm350, %v339, 0
      %v358 = vsel %vm350, %v348, 0
      %v361 = vsel %vm350, %v349, 0
      %363 = vmatprep.subr.bf16.mxu0 0
      %364 = vmatpush1.bf16.xpose.msra.mxu0 %v358
      %365 = vmatprep.subr.bf16.mxu0 0
      %366 = vmatpush1.bf16.xpose.msra.mxu0 %v361
      %367 = vmatprep.subr.bf16.mxu0 0
      %368 = vmatpush1.bf16.xpose.msra.mxu0 0
      %369 = vmatprep.subr.bf16.mxu0 0
      %370 = vmatpush1.bf16.xpose.msra.mxu0 0
      %371 = vmatprep.subr.bf16.mxu0 0
      %372 = vmatpush1.bf16.xpose.msra.mxu0 0
      %373 = vmatprep.subr.bf16.mxu0 0
      %374 = vmatpush1.bf16.xpose.msra.mxu0 0
      %375 = vmatprep.subr.bf16.mxu0 0
      %376 = vmatpush1.bf16.xpose.msra.mxu0 0
      %377 = vmatprep.subr.bf16.mxu0 0
      %378 = vmatpush1.bf16.xpose.msra.mxu0 0
      %379 = vmatprep.subr.bf16.mxu0 0
      %380 = vmatpush1.bf16.xpose.msra.mxu0 0
      %381 = vmatprep.subr.bf16.mxu0 0
      %382 = vmatpush1.bf16.xpose.msra.mxu0 0
      %383 = vmatprep.subr.bf16.mxu0 0
      %384 = vmatpush1.bf16.xpose.msra.mxu0 0
      %385 = vmatprep.subr.bf16.mxu0 0
      %386 = vmatpush1.bf16.xpose.msra.mxu0 0
      %387 = vmatprep.subr.bf16.mxu0 0
      %388 = vmatpush1.bf16.xpose.msra.mxu0 0
      %389 = vmatprep.subr.bf16.mxu0 0
      %390 = vmatpush1.bf16.xpose.msra.mxu0 0
      %391 = vmatprep.subr.bf16.mxu0 0
      %392 = vmatpush1.bf16.xpose.msra.mxu0 0
      %393 = vmatprep.subr.bf16.mxu0 0
      %394 = vmatpush1.bf16.xpose.msra.mxu0 0
      %395 = vmatprep.mubr.bf16.mxu0 0
      %396 = vmatmul.mubr.bf16.gmra.mrb[0].mxu0 %v352
      %v397 = vpop.f32.mrb[0].mxu0
      %v398 = vadd.f32 0.0, %v397
      %v399 = vpop.f32.mrb[0].mxu0
      %v400 = vpop.f32.mrb[0].mxu0
      %v401 = vadd.f32 0.0, %v400
      %v402 = vpop.f32.mrb[0].mxu0
      %403 = vmatprep.mubr.bf16.mxu0 0
      %404 = vmatmul.mubr.bf16.gmra.mrb[0].mxu0 %v355
      %v405 = vpop.f32.mrb[0].mxu0
      %v406 = vadd.f32 0.0, %v405
      %v407 = vpop.f32.mrb[0].mxu0
      %v408 = vpop.f32.mrb[0].mxu0
      %v409 = vadd.f32 0.0, %v408
      %v410 = vpop.f32.mrb[0].mxu0
      %411 = vdwg.mxu0
      %v412 = vmul.f32 %v398, 0.35355338
      %v413 = vmul.f32 %v401, 0.35355338
      %v414 = vmul.f32 %v406, 0.35355338
      %v415 = vmul.f32 %v409, 0.35355338
      %v417 = vlaneseq
      %v418 = vshrl.u32 %v417, 7
      %v419 = vsub.s32 0, %v418
      %v420 = vrot.slane %v329, %v419
      %v422 = vadd.f32 %v412, %v420
      %v423 = vadd.f32 %v413, %v420
      %v424 = vadd.f32 %v414, %v420
      %v425 = vadd.f32 %v415, %v420
      %vm426 = vcmask 261120
      %v427 = vsel %vm426, %v422, -inf
      %428 = vmax.xlane.f32.xlu0 %v427
      %v429 = vpop.xlane.xlu0 %428
      %v430 = vsel %vm426, %v423, -inf
      %431 = vmax.xlane.f32.xlu0 %v430
      %v432 = vpop.xlane.xlu0 %431
      %v433 = vsel %vm426, %v424, -inf
      %434 = vmax.xlane.f32.xlu0 %v433
      %v435 = vpop.xlane.xlu0 %434
      %v436 = vsel %vm426, %v425, -inf
      %437 = vmax.xlane.f32.xlu0 %v436
      %v438 = vpop.xlane.xlu0 %437
      %v439 = vsub.f32 %v422, %v429
      %v440 = vsub.f32 %v423, %v432
      %v441 = vsub.f32 %v424, %v435
      %v442 = vsub.f32 %v425, %v438
      %v443 = vmul.f32 %v439, 1.442695
      %v444 = vpow.pop %v443
      %v445 = vmul.f32 %v440, 1.442695
      %v446 = vpow.pop %v445
      %v447 = vmul.f32 %v441, 1.442695
      %v448 = vpow.pop %v447
      %v449 = vmul.f32 %v442, 1.442695
      %v450 = vpow.pop %v449
      %v451 = vsel %vm426, %v444, 0.0
      %452 = vadd.xlane.f32.xlu0 %v451
      %v453 = vpop.xlane.xlu0 %452
      %v454 = vsel %vm426, %v446, 0.0
      %455 = vadd.xlane.f32.xlu0 %v454
      %v456 = vpop.xlane.xlu0 %455
      %v457 = vsel %vm426, %v448, 0.0
      %458 = vadd.xlane.f32.xlu0 %v457
      %v459 = vpop.xlane.xlu0 %458
      %v460 = vsel %vm426, %v450, 0.0
      %461 = vadd.xlane.f32.xlu0 %v460
      %v462 = vpop.xlane.xlu0 %461
      %v463 = vrcp.pop %v453
      %v464 = vmul.f32 %v444, %v463
      %v465 = vrcp.pop %v456
      %v466 = vmul.f32 %v446, %v465
      %v467 = vrcp.pop %v459
      %v468 = vmul.f32 %v448, %v467
      %v469 = vrcp.pop %v462
      %v470 = vmul.f32 %v450, %v469
      %v471 = vpack.c.bf16 %v466, %v464
      %v472 = vpack.c.bf16 %v470, %v468
      %v477 = vunpack.c.l.b16 %v325
      %v478 = vunpack.c.l.b16 %v326
      %v479 = vunpack.c.l.b16 %v327
      %v480 = vunpack.c.l.b16 %v328
      %v481 = vpack.c.b16 %v478, %v477
      %v482 = vpack.c.b16 %v480, %v479
      %v486 = vsel %vm426, %v471, 0
      %v489 = vsel %vm426, %v472, 0
      %491 = vmatprep.subr.bf16.mxu0 0
      %492 = vmatpush1.bf16.msra.mxu0 %v481
      %493 = vmatprep.subr.bf16.mxu0 0
      %494 = vmatpush1.bf16.msra.mxu0 %v482
      %495 = vmatprep.subr.bf16.mxu0 0
      %496 = vmatpush1.bf16.msra.mxu0 0
      %497 = vmatprep.subr.bf16.mxu0 0
      %498 = vmatpush1.bf16.msra.mxu0 0
      %499 = vmatprep.subr.bf16.mxu0 0
      %500 = vmatpush1.bf16.msra.mxu0 0
      %501 = vmatprep.subr.bf16.mxu0 0
      %502 = vmatpush1.bf16.msra.mxu0 0
      %503 = vmatprep.subr.bf16.mxu0 0
      %504 = vmatpush1.bf16.msra.mxu0 0
      %505 = vmatprep.subr.bf16.mxu0 0
      %506 = vmatpush1.bf16.msra.mxu0 0
      %507 = vmatprep.subr.bf16.mxu0 0
      %508 = vmatpush1.bf16.msra.mxu0 0
      %509 = vmatprep.subr.bf16.mxu0 0
      %510 = vmatpush1.bf16.msra.mxu0 0
      %511 = vmatprep.subr.bf16.mxu0 0
      %512 = vmatpush1.bf16.msra.mxu0 0
      %513 = vmatprep.subr.bf16.mxu0 0
      %514 = vmatpush1.bf16.msra.mxu0 0
      %515 = vmatprep.subr.bf16.mxu0 0
      %516 = vmatpush1.bf16.msra.mxu0 0
      %517 = vmatprep.subr.bf16.mxu0 0
      %518 = vmatpush1.bf16.msra.mxu0 0
      %519 = vmatprep.subr.bf16.mxu0 0
      %520 = vmatpush1.bf16.msra.mxu0 0
      %521 = vmatprep.subr.bf16.mxu0 0
      %522 = vmatpush1.bf16.msra.mxu0 0
      %523 = vmatprep.mubr.bf16.mxu0 0
      %524 = vmatmul.mubr.bf16.gmra.mrb[0].mxu0 %v486
      %v525 = vpop.f32.mrb[0].mxu0
      %v526 = vadd.f32 0.0, %v525
      %v527 = vpop.f32.mrb[0].mxu0
      %v528 = vpop.f32.mrb[0].mxu0
      %v529 = vadd.f32 0.0, %v528
      %v530 = vpop.f32.mrb[0].mxu0
      %531 = vmatprep.mubr.bf16.mxu0 0
      %532 = vmatmul.mubr.bf16.gmra.mrb[0].mxu0 %v489
      %v533 = vpop.f32.mrb[0].mxu0
      %v534 = vadd.f32 0.0, %v533
      %v535 = vpop.f32.mrb[0].mxu0
      %v536 = vpop.f32.mrb[0].mxu0
      %v537 = vadd.f32 0.0, %v536
      %v538 = vpop.f32.mrb[0].mxu0
      %539 = vdwg.mxu0
      %v540 = vpack.c.bf16 %v529, %v526
      %v541 = vpack.c.bf16 %v537, %v534
      %v544 = vunpack.c.l.b16 %v540
      %v545 = vunpack.c.h.b16 %v540
      %v546 = vunpack.c.l.b16 %v541
      %v547 = vunpack.c.h.b16 %v541
      %v548 = vpack.c.b16 %v544, %v544
      %v549 = vpack.c.b16 %v545, %v545
      %v550 = vpack.c.b16 %v546, %v546
      %v551 = vpack.c.b16 %v547, %v547
      %vm556 = vcmask 60416
      %557 = vst.msk [vmem:[%s315] sm:$0xf] %vm556, %v548
      %558 = vst.msk [vmem:[%s315 + $0x4] sm:$0xf] %vm556, %v549
      %559 = vst.msk [vmem:[%s315 + $0x8] sm:$0xf] %vm556, %v550
      %560 = vst.msk [vmem:[%s315 + $0xc] sm:$0xf] %vm556, %v551
      %p561 = scmp.lt.s32.totalorder %s19, 1
      %s562 = scalar_select %p561, %s19, 1
      %p563 = scmp.lt.s32.totalorder %s20, 3
      %s564 = scalar_select %p563, %s20, 3
      %s565 = smul.addr %s564, 4
      %s566 = smul.addr %s562, 16
      %s567 = sadd.s32 %s565, %s566
      %s568 = smul.addr %s567, 4
      %s569 = scalar_lea.vmem %s4, %s568
      // Predicated region
      $region37: #{bert_forward.13} parent=35 // pred_check
        %p570 = pneg %p157
      $region38: #{bert_forward.13} parent=35 // pred_check_branch
        %572 = sbr.rel (%p570) target = $region40
      $region39: #{bert_forward.13} parent=35 // pred_region
        _
      $region40: #{bert_forward.13} parent=35 // pred_fallthru
        _
    $region36: #{bert_forward.13} parent=5 // pred_fallthru
      _
    %p573 = scmp.le.s32.totalorder 2, %s10
    // Predicated region
    $region41: #{bert_forward.13} parent=5 // pred_check
      %p574 = pneg %p573
    $region42: #{bert_forward.13} parent=5 // pred_check_branch
      %576 = sbr.rel (%p574) target = $region44
    $region43: #{bert_forward.13} parent=5 // pred_region
      %s577 = ssub.s32 %s10, 2
      // Predicated region
      $region45: #{bert_forward.13} parent=43 // pred_check
        %p578 = pneg %p163
      $region46: #{bert_forward.13} parent=43 // pred_check_branch
        %580 = sbr.rel (%p578) target = $region48
      $region47: #{bert_forward.13} parent=43 // pred_region
        %p581 = scmp.lt.s32.totalorder %s21, 1
        %s582 = scalar_select %p581, %s21, 1
        %p583 = scmp.lt.s32.totalorder %s22, 3
        %s584 = scalar_select %p583, %s22, 3
        %s585 = smul.addr %s584, 4
        %s586 = smul.addr %s582, 16
        %s587 = sadd.s32 %s585, %s586
        %s588 = smul.addr %s587, 4
        %s589 = scalar_lea.vmem %s4, %s588
      $region48: #{bert_forward.13} parent=43 // pred_fallthru
        _
    $region44: #{bert_forward.13} parent=5 // pred_fallthru
      _
  $region6: #{bert_forward.13} parent=0 // loop_footer
    %s14 = sadd.s32 1, %s10
  $region7: #{bert_forward.13} parent=0 // loop_footer_branch
    %9 = sbr.rel target = $region3
  $region8: #{bert_forward.13} parent=0 // loop_exit
    _

// kernel: bert_forward.12
$region0: #{bert_forward.12}
  #allocation0 [shape = 'u32[]', space=smem, size = 0x4, offset = 0x4, fixed_abs, tag = 'smem constant byte address 0x4 - core index']
  #allocation1 [shape = 'u32[144,128]{1,0:T(1,128)}', space=vmem, size = 0x12000, scoped, tag = 'internal scratch']
  #allocation2 [shape = 'f32[64,128]{1,0:T(8,128)}', space=vmem, size = 0x8000, scoped, tag = 'scratch operand']
  %s0 = inlined_call_operand.vmem [shape: bf16[64,32], index: 0, kind: input, shape index: {}]
  %s1 = inlined_call_operand.vmem [shape: bf16[32,128], index: 1, kind: input, shape index: {}]
  %s2 = inlined_call_operand.vmem [shape: f32[1,128], index: 2, kind: input, shape index: {}]
  %s3 = inlined_call_operand.vmem [shape: bf16[64,128], index: 3, kind: output, shape index: {}]
  %s4 = sld [smem:[#allocation0]]
  $region30: #{bert_forward.12} parent=0
    _
  %s6 = ssub.s32 1, %s4
  %s7 = scalar_select 0, %s6, %s4
  // Predicated region
  $region2: #{bert_forward.12} parent=0 // pred_check
    _
  $region3: #{bert_forward.12} parent=0 // pred_check_branch
    %9 = sbr.rel (0) target = $region5
  $region4: #{bert_forward.12} parent=0 // pred_region
    _
  $region5: #{bert_forward.12} parent=0 // pred_fallthru
    _
  // Predicated region
  $region6: #{bert_forward.12} parent=0 // pred_check
    _
  $region7: #{bert_forward.12} parent=0 // pred_check_branch
    %11 = sbr.rel (0) target = $region9
  $region8: #{bert_forward.12} parent=0 // pred_region
    _
  $region9: #{bert_forward.12} parent=0 // pred_fallthru
    _
  // Predicated region
  $region10: #{bert_forward.12} parent=0 // pred_check
    _
  $region11: #{bert_forward.12} parent=0 // pred_check_branch
    %13 = sbr.rel (0) target = $region13
  $region12: #{bert_forward.12} parent=0 // pred_region
    _
  $region13: #{bert_forward.12} parent=0 // pred_fallthru
    _
  %p15 = scmp.eq.s32.totalorder 0, 0
  // Predicated region
  $region14: #{bert_forward.12} parent=0 // pred_check
    %p16 = pneg %p15
  $region15: #{bert_forward.12} parent=0 // pred_check_branch
    %18 = sbr.rel (%p16) target = $region17
  $region16: #{bert_forward.12} parent=0 // pred_region
    %19 = vst [vmem:[#allocation2] sm:$0xff] 0.0
    %20 = vst [vmem:[#allocation2 + $0x8] sm:$0xff] 0.0
    %21 = vst [vmem:[#allocation2 + $0x10] sm:$0xff] 0.0
    %22 = vst [vmem:[#allocation2 + $0x18] sm:$0xff] 0.0
    %23 = vst [vmem:[#allocation2 + $0x20] sm:$0xff] 0.0
    %24 = vst [vmem:[#allocation2 + $0x28] sm:$0xff] 0.0
    %25 = vst [vmem:[#allocation2 + $0x30] sm:$0xff] 0.0
    %26 = vst [vmem:[#allocation2 + $0x38] sm:$0xff] 0.0
  $region17: #{bert_forward.12} parent=0 // pred_fallthru
    _
  %v27 = vld [vmem:[#allocation2] sm:$0xff]
  %v28 = vld [vmem:[#allocation2 + $0x8] sm:$0xff]
  %v29 = vld [vmem:[#allocation2 + $0x10] sm:$0xff]
  %v30 = vld [vmem:[#allocation2 + $0x18] sm:$0xff]
  %v31 = vld [vmem:[#allocation2 + $0x20] sm:$0xff]
  %v32 = vld [vmem:[#allocation2 + $0x28] sm:$0xff]
  %v33 = vld [vmem:[#allocation2 + $0x30] sm:$0xff]
  %v34 = vld [vmem:[#allocation2 + $0x38] sm:$0xff]
  %v35 = vld [vmem:[%s0] sm:$0xf]
  %v36 = vld [vmem:[%s0 + $0x4] sm:$0xf]
  %v37 = vld [vmem:[%s0 + $0x8] sm:$0xf]
  %v38 = vld [vmem:[%s0 + $0xc] sm:$0xf]
  %v39 = vld [vmem:[%s0 + $0x10] sm:$0xf]
  %v40 = vld [vmem:[%s0 + $0x14] sm:$0xf]
  %v41 = vld [vmem:[%s0 + $0x18] sm:$0xf]
  %v42 = vld [vmem:[%s0 + $0x1c] sm:$0xf]
  %v43 = vld [vmem:[%s1] sm:$0xf]
  %v44 = vld [vmem:[%s1 + $0x4] sm:$0xf]
  %v45 = vld [vmem:[%s1 + $0x8] sm:$0xf]
  %v46 = vld [vmem:[%s1 + $0xc] sm:$0xf]
  %v55 = vunpack.c.l.b16 %v35
  %v56 = vunpack.c.l.b16 %v36
  %v57 = vunpack.c.l.b16 %v37
  %v58 = vunpack.c.l.b16 %v38
  %v59 = vunpack.c.l.b16 %v39
  %v60 = vunpack.c.l.b16 %v40
  %v61 = vunpack.c.l.b16 %v41
  %v62 = vunpack.c.l.b16 %v42
  %v63 = vpack.c.b16 %v56, %v55
  %v64 = vpack.c.b16 %v58, %v57
  %v65 = vpack.c.b16 %v60, %v59
  %v66 = vpack.c.b16 %v62, %v61
  %v71 = vunpack.c.l.b16 %v43
  %v72 = vunpack.c.l.b16 %v44
  %v73 = vunpack.c.l.b16 %v45
  %v74 = vunpack.c.l.b16 %v46
  %v75 = vpack.c.b16 %v72, %v71
  %v76 = vpack.c.b16 %v74, %v73
  %vm79 = vcmask 261120
  %v81 = vsel %vm79, %v63, 0
  %v84 = vsel %vm79, %v64, 0
  %v87 = vsel %vm79, %v65, 0
  %v90 = vsel %vm79, %v66, 0
  %92 = vmatprep.subr.bf16.mxu0 0
  %93 = vmatpush1.bf16.msra.mxu0 %v75
  %94 = vmatprep.subr.bf16.mxu0 0
  %95 = vmatpush1.bf16.msra.mxu0 %v76
  %96 = vmatprep.subr.bf16.mxu0 0
  %97 = vmatpush1.bf16.msra.mxu0 0
  %98 = vmatprep.subr.bf16.mxu0 0
  %99 = vmatpush1.bf16.msra.mxu0 0
  %100 = vmatprep.subr.bf16.mxu0 0
  %101 = vmatpush1.bf16.msra.mxu0 0
  %102 = vmatprep.subr.bf16.mxu0 0
  %103 = vmatpush1.bf16.msra.mxu0 0
  %104 = vmatprep.subr.bf16.mxu0 0
  %105 = vmatpush1.bf16.msra.mxu0 0
  %106 = vmatprep.subr.bf16.mxu0 0
  %107 = vmatpush1.bf16.msra.mxu0 0
  %108 = vmatprep.subr.bf16.mxu0 0
  %109 = vmatpush1.bf16.msra.mxu0 0
  %110 = vmatprep.subr.bf16.mxu0 0
  %111 = vmatpush1.bf16.msra.mxu0 0
  %112 = vmatprep.subr.bf16.mxu0 0
  %113 = vmatpush1.bf16.msra.mxu0 0
  %114 = vmatprep.subr.bf16.mxu0 0
  %115 = vmatpush1.bf16.msra.mxu0 0
  %116 = vmatprep.subr.bf16.mxu0 0
  %117 = vmatpush1.bf16.msra.mxu0 0
  %118 = vmatprep.subr.bf16.mxu0 0
  %119 = vmatpush1.bf16.msra.mxu0 0
  %120 = vmatprep.subr.bf16.mxu0 0
  %121 = vmatpush1.bf16.msra.mxu0 0
  %122 = vmatprep.subr.bf16.mxu0 0
  %123 = vmatpush1.bf16.msra.mxu0 0
  %124 = vmatprep.mubr.bf16.mxu0 0
  %125 = vmatmul.mubr.bf16.gmra.mrb[0].mxu0 %v81
  %v126 = vpop.f32.mrb[0].mxu0
  %v127 = vadd.f32 0.0, %v126
  %v128 = vpop.f32.mrb[0].mxu0
  %v129 = vpop.f32.mrb[0].mxu0
  %v130 = vadd.f32 0.0, %v129
  %v131 = vpop.f32.mrb[0].mxu0
  %132 = vmatprep.mubr.bf16.mxu0 0
  %133 = vmatmul.mubr.bf16.gmra.mrb[0].mxu0 %v84
  %v134 = vpop.f32.mrb[0].mxu0
  %v135 = vadd.f32 0.0, %v134
  %v136 = vpop.f32.mrb[0].mxu0
  %v137 = vpop.f32.mrb[0].mxu0
  %v138 = vadd.f32 0.0, %v137
  %v139 = vpop.f32.mrb[0].mxu0
  %140 = vmatprep.mubr.bf16.mxu0 0
  %141 = vmatmul.mubr.bf16.gmra.mrb[0].mxu0 %v87
  %v142 = vpop.f32.mrb[0].mxu0
  %v143 = vadd.f32 0.0, %v142
  %v144 = vpop.f32.mrb[0].mxu0
  %v145 = vpop.f32.mrb[0].mxu0
  %v146 = vadd.f32 0.0, %v145
  %v147 = vpop.f32.mrb[0].mxu0
  %148 = vmatprep.mubr.bf16.mxu0 0
  %149 = vmatmul.mubr.bf16.gmra.mrb[0].mxu0 %v90
  %v150 = vpop.f32.mrb[0].mxu0
  %v151 = vadd.f32 0.0, %v150
  %v152 = vpop.f32.mrb[0].mxu0
  %v153 = vpop.f32.mrb[0].mxu0
  %v154 = vadd.f32 0.0, %v153
  %v155 = vpop.f32.mrb[0].mxu0
  %156 = vdwg.mxu0
  %v157 = vadd.f32 %v27, %v127
  %v158 = vadd.f32 %v28, %v130
  %v159 = vadd.f32 %v29, %v135
  %v160 = vadd.f32 %v30, %v138
  %v161 = vadd.f32 %v31, %v143
  %v162 = vadd.f32 %v32, %v146
  %v163 = vadd.f32 %v33, %v151
  %v164 = vadd.f32 %v34, %v154
  %165 = vst [vmem:[#allocation2] sm:$0xff] %v157
  %166 = vst [vmem:[#allocation2 + $0x8] sm:$0xff] %v158
  %167 = vst [vmem:[#allocation2 + $0x10] sm:$0xff] %v159
  %168 = vst [vmem:[#allocation2 + $0x18] sm:$0xff] %v160
  %169 = vst [vmem:[#allocation2 + $0x20] sm:$0xff] %v161
  %170 = vst [vmem:[#allocation2 + $0x28] sm:$0xff] %v162
  %171 = vst [vmem:[#allocation2 + $0x30] sm:$0xff] %v163
  %172 = vst [vmem:[#allocation2 + $0x38] sm:$0xff] %v164
  // Predicated region
  $region18: #{bert_forward.12} parent=0 // pred_check
    %p173 = pneg %p15
  $region19: #{bert_forward.12} parent=0 // pred_check_branch
    %175 = sbr.rel (%p173) target = $region21
  $region20: #{bert_forward.12} parent=0 // pred_region
    %v176 = vld [vmem:[#allocation2] sm:$0xff]
    %v177 = vld [vmem:[#allocation2 + $0x8] sm:$0xff]
    %v178 = vld [vmem:[#allocation2 + $0x10] sm:$0xff]
    %v179 = vld [vmem:[#allocation2 + $0x18] sm:$0xff]
    %v180 = vld [vmem:[#allocation2 + $0x20] sm:$0xff]
    %v181 = vld [vmem:[#allocation2 + $0x28] sm:$0xff]
    %v182 = vld [vmem:[#allocation2 + $0x30] sm:$0xff]
    %v183 = vld [vmem:[#allocation2 + $0x38] sm:$0xff]
    %v184 = vld [vmem:[%s2] sm:$0x1]
    %v186 = vlaneseq
    %v187 = vshrl.u32 %v186, 7
    %v188 = vsub.s32 0, %v187
    %v189 = vrot.slane %v184, %v188
    %v191 = vadd.f32 %v176, %v189
    %v192 = vadd.f32 %v177, %v189
    %v193 = vadd.f32 %v178, %v189
    %v194 = vadd.f32 %v179, %v189
    %v195 = vadd.f32 %v180, %v189
    %v196 = vadd.f32 %v181, %v189
    %v197 = vadd.f32 %v182, %v189
    %v198 = vadd.f32 %v183, %v189
    %v199 = vpack.c.bf16 %v192, %v191
    %v200 = vpack.c.bf16 %v194, %v193
    %v201 = vpack.c.bf16 %v196, %v195
    %v202 = vpack.c.bf16 %v198, %v197
    %v207 = vunpack.c.l.b16 %v199
    %v208 = vunpack.c.h.b16 %v199
    %v209 = vunpack.c.l.b16 %v200
    %v210 = vunpack.c.h.b16 %v200
    %v211 = vunpack.c.l.b16 %v201
    %v212 = vunpack.c.h.b16 %v201
    %v213 = vunpack.c.l.b16 %v202
    %v214 = vunpack.c.h.b16 %v202
    %v215 = vpack.c.b16 %v207, %v207
    %v216 = vpack.c.b16 %v208, %v208
    %v217 = vpack.c.b16 %v209, %v209
    %v218 = vpack.c.b16 %v210, %v210
    %v219 = vpack.c.b16 %v211, %v211
    %v220 = vpack.c.b16 %v212, %v212
    %v221 = vpack.c.b16 %v213, %v213
    %v222 = vpack.c.b16 %v214, %v214
    %231 = vst [vmem:[%s3] sm:$0xf] %v215
    %232 = vst [vmem:[%s3 + $0x4] sm:$0xf] %v216
    %233 = vst [vmem:[%s3 + $0x8] sm:$0xf] %v217
    %234 = vst [vmem:[%s3 + $0xc] sm:$0xf] %v218
    %235 = vst [vmem:[%s3 + $0x10] sm:$0xf] %v219
    %236 = vst [vmem:[%s3 + $0x14] sm:$0xf] %v220
    %237 = vst [vmem:[%s3 + $0x18] sm:$0xf] %v221
    %238 = vst [vmem:[%s3 + $0x1c] sm:$0xf] %v222
  $region21: #{bert_forward.12} parent=0 // pred_fallthru
    _
  // Predicated region
  $region22: #{bert_forward.12} parent=0 // pred_check
    _
  $region23: #{bert_forward.12} parent=0 // pred_check_branch
    %240 = sbr.rel (0) target = $region25
  $region24: #{bert_forward.12} parent=0 // pred_region
    _
  $region25: #{bert_forward.12} parent=0 // pred_fallthru
    _
  // Predicated region
  $region26: #{bert_forward.12} parent=0 // pred_check
    _
  $region27: #{bert_forward.12} parent=0 // pred_check_branch
    %242 = sbr.rel (0) target = $region29
  $region28: #{bert_forward.12} parent=0 // pred_region
    _
  $region29: #{bert_forward.12} parent=0 // pred_fallthru
    _

// kernel: bert_forward.14
$region0: #{bert_forward.14}
  #allocation0 [shape = 'u32[]', space=smem, size = 0x4, offset = 0x4, fixed_abs, tag = 'smem constant byte address 0x4 - core index']
  #allocation1 [shape = 'u32[144,128]{1,0:T(1,128)}', space=vmem, size = 0x12000, scoped, tag = 'internal scratch']
  #allocation2 [shape = 'f32[64,32]{1,0:T(8,128)}', space=vmem, size = 0x8000, scoped, tag = 'scratch operand']
  %s0 = inlined_call_operand.vmem [shape: bf16[64,32], index: 0, kind: input, shape index: {}]
  %s1 = inlined_call_operand.vmem [shape: bf16[32,32], index: 1, kind: input, shape index: {}]
  %s2 = inlined_call_operand.vmem [shape: f32[1,32], index: 2, kind: input, shape index: {}]
  %s3 = inlined_call_operand.vmem [shape: bf16[64,32], index: 3, kind: input, shape index: {}]
  %s4 = inlined_call_operand.vmem [shape: f32[1,32], index: 4, kind: input, shape index: {}]
  %s5 = inlined_call_operand.vmem [shape: f32[1,32], index: 5, kind: input, shape index: {}]
  %s6 = inlined_call_operand.vmem [shape: bf16[64,32], index: 6, kind: output, shape index: {}]
  %s7 = sld [smem:[#allocation0]]
  $region42: #{bert_forward.14} parent=0
    _
  %s9 = ssub.s32 1, %s7
  %s10 = scalar_select 0, %s9, %s7
  // Predicated region
  $region2: #{bert_forward.14} parent=0 // pred_check
    _
  $region3: #{bert_forward.14} parent=0 // pred_check_branch
    %12 = sbr.rel (0) target = $region5
  $region4: #{bert_forward.14} parent=0 // pred_region
    _
  $region5: #{bert_forward.14} parent=0 // pred_fallthru
    _
  // Predicated region
  $region6: #{bert_forward.14} parent=0 // pred_check
    _
  $region7: #{bert_forward.14} parent=0 // pred_check_branch
    %14 = sbr.rel (0) target = $region9
  $region8: #{bert_forward.14} parent=0 // pred_region
    _
  $region9: #{bert_forward.14} parent=0 // pred_fallthru
    _
  // Predicated region
  $region10: #{bert_forward.14} parent=0 // pred_check
    _
  $region11: #{bert_forward.14} parent=0 // pred_check_branch
    %16 = sbr.rel (0) target = $region13
  $region12: #{bert_forward.14} parent=0 // pred_region
    _
  $region13: #{bert_forward.14} parent=0 // pred_fallthru
    _
  // Predicated region
  $region14: #{bert_forward.14} parent=0 // pred_check
    _
  $region15: #{bert_forward.14} parent=0 // pred_check_branch
    %18 = sbr.rel (0) target = $region17
  $region16: #{bert_forward.14} parent=0 // pred_region
    _
  $region17: #{bert_forward.14} parent=0 // pred_fallthru
    _
  // Predicated region
  $region18: #{bert_forward.14} parent=0 // pred_check
    _
  $region19: #{bert_forward.14} parent=0 // pred_check_branch
    %20 = sbr.rel (0) target = $region21
  $region20: #{bert_forward.14} parent=0 // pred_region
    _
  $region21: #{bert_forward.14} parent=0 // pred_fallthru
    _
  // Predicated region
  $region22: #{bert_forward.14} parent=0 // pred_check
    _
  $region23: #{bert_forward.14} parent=0 // pred_check_branch
    %22 = sbr.rel (0) target = $region25
  $region24: #{bert_forward.14} parent=0 // pred_region
    _
  $region25: #{bert_forward.14} parent=0 // pred_fallthru
    _
  %p24 = scmp.eq.s32.totalorder 0, 0
  // Predicated region
  $region26: #{bert_forward.14} parent=0 // pred_check
    %p25 = pneg %p24
  $region27: #{bert_forward.14} parent=0 // pred_check_branch
    %27 = sbr.rel (%p25) target = $region29
  $region28: #{bert_forward.14} parent=0 // pred_region
    %vm28 = vcmask 261120
    %29 = vst.msk [vmem:[#allocation2] sm:$0xff] %vm28, 0.0
    %30 = vst.msk [vmem:[#allocation2 + $0x8] sm:$0xff] %vm28, 0.0
    %31 = vst.msk [vmem:[#allocation2 + $0x10] sm:$0xff] %vm28, 0.0
    %32 = vst.msk [vmem:[#allocation2 + $0x18] sm:$0xff] %vm28, 0.0
    %33 = vst.msk [vmem:[#allocation2 + $0x20] sm:$0xff] %vm28, 0.0
    %34 = vst.msk [vmem:[#allocation2 + $0x28] sm:$0xff] %vm28, 0.0
    %35 = vst.msk [vmem:[#allocation2 + $0x30] sm:$0xff] %vm28, 0.0
    %36 = vst.msk [vmem:[#allocation2 + $0x38] sm:$0xff] %vm28, 0.0
  $region29: #{bert_forward.14} parent=0 // pred_fallthru
    _
  %v37 = vld [vmem:[#allocation2] sm:$0xff]
  %v38 = vld [vmem:[#allocation2 + $0x8] sm:$0xff]
  %v39 = vld [vmem:[#allocation2 + $0x10] sm:$0xff]
  %v40 = vld [vmem:[#allocation2 + $0x18] sm:$0xff]
  %v41 = vld [vmem:[#allocation2 + $0x20] sm:$0xff]
  %v42 = vld [vmem:[#allocation2 + $0x28] sm:$0xff]
  %v43 = vld [vmem:[#allocation2 + $0x30] sm:$0xff]
  %v44 = vld [vmem:[#allocation2 + $0x38] sm:$0xff]
  %v45 = vld [vmem:[%s0] sm:$0xf]
  %v46 = vld [vmem:[%s0 + $0x4] sm:$0xf]
  %v47 = vld [vmem:[%s0 + $0x8] sm:$0xf]
  %v48 = vld [vmem:[%s0 + $0xc] sm:$0xf]
  %v49 = vld [vmem:[%s0 + $0x10] sm:$0xf]
  %v50 = vld [vmem:[%s0 + $0x14] sm:$0xf]
  %v51 = vld [vmem:[%s0 + $0x18] sm:$0xf]
  %v52 = vld [vmem:[%s0 + $0x1c] sm:$0xf]
  %v53 = vld [vmem:[%s1] sm:$0xf]
  %v54 = vld [vmem:[%s1 + $0x4] sm:$0xf]
  %v55 = vld [vmem:[%s1 + $0x8] sm:$0xf]
  %v56 = vld [vmem:[%s1 + $0xc] sm:$0xf]
  %v65 = vunpack.c.l.b16 %v45
  %v66 = vunpack.c.l.b16 %v46
  %v67 = vunpack.c.l.b16 %v47
  %v68 = vunpack.c.l.b16 %v48
  %v69 = vunpack.c.l.b16 %v49
  %v70 = vunpack.c.l.b16 %v50
  %v71 = vunpack.c.l.b16 %v51
  %v72 = vunpack.c.l.b16 %v52
  %v73 = vpack.c.b16 %v66, %v65
  %v74 = vpack.c.b16 %v68, %v67
  %v75 = vpack.c.b16 %v70, %v69
  %v76 = vpack.c.b16 %v72, %v71
  %v81 = vunpack.c.l.b16 %v53
  %v82 = vunpack.c.l.b16 %v54
  %v83 = vunpack.c.l.b16 %v55
  %v84 = vunpack.c.l.b16 %v56
  %v85 = vpack.c.b16 %v82, %v81
  %v86 = vpack.c.b16 %v84, %v83
  %vm89 = vcmask 261120
  %v91 = vsel %vm89, %v73, 0
  %v94 = vsel %vm89, %v74, 0
  %v97 = vsel %vm89, %v75, 0
  %v100 = vsel %vm89, %v76, 0
  %102 = vmatprep.subr.bf16.mxu0 0
  %103 = vmatpush1.bf16.msra.mxu0 %v85
  %104 = vmatprep.subr.bf16.mxu0 0
  %105 = vmatpush1.bf16.msra.mxu0 %v86
  %106 = vmatprep.subr.bf16.mxu0 0
  %107 = vmatpush1.bf16.msra.mxu0 0
  %108 = vmatprep.subr.bf16.mxu0 0
  %109 = vmatpush1.bf16.msra.mxu0 0
  %110 = vmatprep.subr.bf16.mxu0 0
  %111 = vmatpush1.bf16.msra.mxu0 0
  %112 = vmatprep.subr.bf16.mxu0 0
  %113 = vmatpush1.bf16.msra.mxu0 0
  %114 = vmatprep.subr.bf16.mxu0 0
  %115 = vmatpush1.bf16.msra.mxu0 0
  %116 = vmatprep.subr.bf16.mxu0 0
  %117 = vmatpush1.bf16.msra.mxu0 0
  %118 = vmatprep.subr.bf16.mxu0 0
  %119 = vmatpush1.bf16.msra.mxu0 0
  %120 = vmatprep.subr.bf16.mxu0 0
  %121 = vmatpush1.bf16.msra.mxu0 0
  %122 = vmatprep.subr.bf16.mxu0 0
  %123 = vmatpush1.bf16.msra.mxu0 0
  %124 = vmatprep.subr.bf16.mxu0 0
  %125 = vmatpush1.bf16.msra.mxu0 0
  %126 = vmatprep.subr.bf16.mxu0 0
  %127 = vmatpush1.bf16.msra.mxu0 0
  %128 = vmatprep.subr.bf16.mxu0 0
  %129 = vmatpush1.bf16.msra.mxu0 0
  %130 = vmatprep.subr.bf16.mxu0 0
  %131 = vmatpush1.bf16.msra.mxu0 0
  %132 = vmatprep.subr.bf16.mxu0 0
  %133 = vmatpush1.bf16.msra.mxu0 0
  %134 = vmatprep.mubr.bf16.mxu0 0
  %135 = vmatmul.mubr.bf16.gmra.mrb[0].mxu0 %v91
  %v136 = vpop.f32.mrb[0].mxu0
  %v137 = vadd.f32 0.0, %v136
  %v138 = vpop.f32.mrb[0].mxu0
  %v139 = vpop.f32.mrb[0].mxu0
  %v140 = vadd.f32 0.0, %v139
  %v141 = vpop.f32.mrb[0].mxu0
  %142 = vmatprep.mubr.bf16.mxu0 0
  %143 = vmatmul.mubr.bf16.gmra.mrb[0].mxu0 %v94
  %v144 = vpop.f32.mrb[0].mxu0
  %v145 = vadd.f32 0.0, %v144
  %v146 = vpop.f32.mrb[0].mxu0
  %v147 = vpop.f32.mrb[0].mxu0
  %v148 = vadd.f32 0.0, %v147
  %v149 = vpop.f32.mrb[0].mxu0
  %150 = vmatprep.mubr.bf16.mxu0 0
  %151 = vmatmul.mubr.bf16.gmra.mrb[0].mxu0 %v97
  %v152 = vpop.f32.mrb[0].mxu0
  %v153 = vadd.f32 0.0, %v152
  %v154 = vpop.f32.mrb[0].mxu0
  %v155 = vpop.f32.mrb[0].mxu0
  %v156 = vadd.f32 0.0, %v155
  %v157 = vpop.f32.mrb[0].mxu0
  %158 = vmatprep.mubr.bf16.mxu0 0
  %159 = vmatmul.mubr.bf16.gmra.mrb[0].mxu0 %v100
  %v160 = vpop.f32.mrb[0].mxu0
  %v161 = vadd.f32 0.0, %v160
  %v162 = vpop.f32.mrb[0].mxu0
  %v163 = vpop.f32.mrb[0].mxu0
  %v164 = vadd.f32 0.0, %v163
  %v165 = vpop.f32.mrb[0].mxu0
  %166 = vdwg.mxu0
  %v167 = vadd.f32 %v37, %v137
  %v168 = vadd.f32 %v38, %v140
  %v169 = vadd.f32 %v39, %v145
  %v170 = vadd.f32 %v40, %v148
  %v171 = vadd.f32 %v41, %v153
  %v172 = vadd.f32 %v42, %v156
  %v173 = vadd.f32 %v43, %v161
  %v174 = vadd.f32 %v44, %v164
  %175 = vst.msk [vmem:[#allocation2] sm:$0xff] %vm89, %v167
  %176 = vst.msk [vmem:[#allocation2 + $0x8] sm:$0xff] %vm89, %v168
  %177 = vst.msk [vmem:[#allocation2 + $0x10] sm:$0xff] %vm89, %v169
  %178 = vst.msk [vmem:[#allocation2 + $0x18] sm:$0xff] %vm89, %v170
  %179 = vst.msk [vmem:[#allocation2 + $0x20] sm:$0xff] %vm89, %v171
  %180 = vst.msk [vmem:[#allocation2 + $0x28] sm:$0xff] %vm89, %v172
  %181 = vst.msk [vmem:[#allocation2 + $0x30] sm:$0xff] %vm89, %v173
  %182 = vst.msk [vmem:[#allocation2 + $0x38] sm:$0xff] %vm89, %v174
  // Predicated region
  $region30: #{bert_forward.14} parent=0 // pred_check
    %p183 = pneg %p24
  $region31: #{bert_forward.14} parent=0 // pred_check_branch
    %185 = sbr.rel (%p183) target = $region33
  $region32: #{bert_forward.14} parent=0 // pred_region
    %v186 = vld [vmem:[#allocation2] sm:$0xff]
    %v187 = vld [vmem:[#allocation2 + $0x8] sm:$0xff]
    %v188 = vld [vmem:[#allocation2 + $0x10] sm:$0xff]
    %v189 = vld [vmem:[#allocation2 + $0x18] sm:$0xff]
    %v190 = vld [vmem:[#allocation2 + $0x20] sm:$0xff]
    %v191 = vld [vmem:[#allocation2 + $0x28] sm:$0xff]
    %v192 = vld [vmem:[#allocation2 + $0x30] sm:$0xff]
    %v193 = vld [vmem:[#allocation2 + $0x38] sm:$0xff]
    %v194 = vld [vmem:[%s2] sm:$0x1]
    %v196 = vlaneseq
    %v197 = vshrl.u32 %v196, 7
    %v198 = vsub.s32 0, %v197
    %v199 = vrot.slane %v194, %v198
    %v201 = vadd.f32 %v186, %v199
    %v202 = vadd.f32 %v187, %v199
    %v203 = vadd.f32 %v188, %v199
    %v204 = vadd.f32 %v189, %v199
    %v205 = vadd.f32 %v190, %v199
    %v206 = vadd.f32 %v191, %v199
    %v207 = vadd.f32 %v192, %v199
    %v208 = vadd.f32 %v193, %v199
    %v209 = vld [vmem:[%s3] sm:$0xf]
    %v210 = vld [vmem:[%s3 + $0x4] sm:$0xf]
    %v211 = vld [vmem:[%s3 + $0x8] sm:$0xf]
    %v212 = vld [vmem:[%s3 + $0xc] sm:$0xf]
    %v213 = vld [vmem:[%s3 + $0x10] sm:$0xf]
    %v214 = vld [vmem:[%s3 + $0x14] sm:$0xf]
    %v215 = vld [vmem:[%s3 + $0x18] sm:$0xf]
    %v216 = vld [vmem:[%s3 + $0x1c] sm:$0xf]
    %v217 = vunpack.c.l.bf16 %v209
    %v218 = vunpack.c.l.bf16 %v210
    %v219 = vunpack.c.l.bf16 %v211
    %v220 = vunpack.c.l.bf16 %v212
    %v221 = vunpack.c.l.bf16 %v213
    %v222 = vunpack.c.l.bf16 %v214
    %v223 = vunpack.c.l.bf16 %v215
    %v224 = vunpack.c.l.bf16 %v216
    %v225 = vadd.f32 %v201, %v217
    %v226 = vadd.f32 %v202, %v218
    %v227 = vadd.f32 %v203, %v219
    %v228 = vadd.f32 %v204, %v220
    %v229 = vadd.f32 %v205, %v221
    %v230 = vadd.f32 %v206, %v222
    %v231 = vadd.f32 %v207, %v223
    %v232 = vadd.f32 %v208, %v224
    %v233 = vsel %vm89, %v225, 0.0
    %234 = vadd.xlane.f32.xlu0 %v233
    %v235 = vpop.xlane.xlu0 %234
    %v236 = vsel %vm89, %v226, 0.0
    %237 = vadd.xlane.f32.xlu0 %v236
    %v238 = vpop.xlane.xlu0 %237
    %v239 = vsel %vm89, %v227, 0.0
    %240 = vadd.xlane.f32.xlu0 %v239
    %v241 = vpop.xlane.xlu0 %240
    %v242 = vsel %vm89, %v228, 0.0
    %243 = vadd.xlane.f32.xlu0 %v242
    %v244 = vpop.xlane.xlu0 %243
    %v245 = vsel %vm89, %v229, 0.0
    %246 = vadd.xlane.f32.xlu0 %v245
    %v247 = vpop.xlane.xlu0 %246
    %v248 = vsel %vm89, %v230, 0.0
    %249 = vadd.xlane.f32.xlu0 %v248
    %v250 = vpop.xlane.xlu0 %249
    %v251 = vsel %vm89, %v231, 0.0
    %252 = vadd.xlane.f32.xlu0 %v251
    %v253 = vpop.xlane.xlu0 %252
    %v254 = vsel %vm89, %v232, 0.0
    %255 = vadd.xlane.f32.xlu0 %v254
    %v256 = vpop.xlane.xlu0 %255
    %v257 = vrcp.pop 32.0
    %v258 = vmul.f32 %v235, %v257
    %v259 = vmul.f32 %v238, %v257
    %v260 = vmul.f32 %v241, %v257
    %v261 = vmul.f32 %v244, %v257
    %v262 = vmul.f32 %v247, %v257
    %v263 = vmul.f32 %v250, %v257
    %v264 = vmul.f32 %v253, %v257
    %v265 = vmul.f32 %v256, %v257
    %v266 = vsub.f32 %v225, %v258
    %v267 = vsub.f32 %v226, %v259
    %v268 = vsub.f32 %v227, %v260
    %v269 = vsub.f32 %v228, %v261
    %v270 = vsub.f32 %v229, %v262
    %v271 = vsub.f32 %v230, %v263
    %v272 = vsub.f32 %v231, %v264
    %v273 = vsub.f32 %v232, %v265
    %v274 = vmul.f32 %v266, %v266
    %v275 = vmul.f32 %v267, %v267
    %v276 = vmul.f32 %v268, %v268
    %v277 = vmul.f32 %v269, %v269
    %v278 = vmul.f32 %v270, %v270
    %v279 = vmul.f32 %v271, %v271
    %v280 = vmul.f32 %v272, %v272
    %v281 = vmul.f32 %v273, %v273
    %v282 = vsel %vm89, %v274, 0.0
    %283 = vadd.xlane.f32.xlu0 %v282
    %v284 = vpop.xlane.xlu0 %283
    %v285 = vsel %vm89, %v275, 0.0
    %286 = vadd.xlane.f32.xlu0 %v285
    %v287 = vpop.xlane.xlu0 %286
    %v288 = vsel %vm89, %v276, 0.0
    %289 = vadd.xlane.f32.xlu0 %v288
    %v290 = vpop.xlane.xlu0 %289
    %v291 = vsel %vm89, %v277, 0.0
    %292 = vadd.xlane.f32.xlu0 %v291
    %v293 = vpop.xlane.xlu0 %292
    %v294 = vsel %vm89, %v278, 0.0
    %295 = vadd.xlane.f32.xlu0 %v294
    %v296 = vpop.xlane.xlu0 %295
    %v297 = vsel %vm89, %v279, 0.0
    %298 = vadd.xlane.f32.xlu0 %v297
    %v299 = vpop.xlane.xlu0 %298
    %v300 = vsel %vm89, %v280, 0.0
    %301 = vadd.xlane.f32.xlu0 %v300
    %v302 = vpop.xlane.xlu0 %301
    %v303 = vsel %vm89, %v281, 0.0
    %304 = vadd.xlane.f32.xlu0 %v303
    %v305 = vpop.xlane.xlu0 %304
    %v306 = vmul.f32 %v284, %v257
    %v307 = vmul.f32 %v287, %v257
    %v308 = vmul.f32 %v290, %v257
    %v309 = vmul.f32 %v293, %v257
    %v310 = vmul.f32 %v296, %v257
    %v311 = vmul.f32 %v299, %v257
    %v312 = vmul.f32 %v302, %v257
    %v313 = vmul.f32 %v305, %v257
    %v314 = vadd.f32 %v306, 1e-05
    %v315 = vadd.f32 %v307, 1e-05
    %v316 = vadd.f32 %v308, 1e-05
    %v317 = vadd.f32 %v309, 1e-05
    %v318 = vadd.f32 %v310, 1e-05
    %v319 = vadd.f32 %v311, 1e-05
    %v320 = vadd.f32 %v312, 1e-05
    %v321 = vadd.f32 %v313, 1e-05
    %v322 = vrsqrt.pop %v314
    %v323 = vrsqrt.pop %v315
    %v324 = vrsqrt.pop %v316
    %v325 = vrsqrt.pop %v317
    %v326 = vrsqrt.pop %v318
    %v327 = vrsqrt.pop %v319
    %v328 = vrsqrt.pop %v320
    %v329 = vrsqrt.pop %v321
    %v330 = vmul.f32 %v266, %v322
    %v331 = vmul.f32 %v267, %v323
    %v332 = vmul.f32 %v268, %v324
    %v333 = vmul.f32 %v269, %v325
    %v334 = vmul.f32 %v270, %v326
    %v335 = vmul.f32 %v271, %v327
    %v336 = vmul.f32 %v272, %v328
    %v337 = vmul.f32 %v273, %v329
    %v338 = vld [vmem:[%s4] sm:$0x1]
    %v340 = vlaneseq
    %v341 = vshrl.u32 %v340, 7
    %v342 = vsub.s32 0, %v341
    %v343 = vrot.slane %v338, %v342
    %v345 = vmul.f32 %v330, %v343
    %v346 = vmul.f32 %v331, %v343
    %v347 = vmul.f32 %v332, %v343
    %v348 = vmul.f32 %v333, %v343
    %v349 = vmul.f32 %v334, %v343
    %v350 = vmul.f32 %v335, %v343
    %v351 = vmul.f32 %v336, %v343
    %v352 = vmul.f32 %v337, %v343
    %v353 = vld [vmem:[%s5] sm:$0x1]
    %v355 = vlaneseq
    %v356 = vshrl.u32 %v355, 7
    %v357 = vsub.s32 0, %v356
    %v358 = vrot.slane %v353, %v357
    %v360 = vadd.f32 %v345, %v358
    %v361 = vadd.f32 %v346, %v358
    %v362 = vadd.f32 %v347, %v358
    %v363 = vadd.f32 %v348, %v358
    %v364 = vadd.f32 %v349, %v358
    %v365 = vadd.f32 %v350, %v358
    %v366 = vadd.f32 %v351, %v358
    %v367 = vadd.f32 %v352, %v358
    %v368 = vpack.c.bf16 %v361, %v360
    %v369 = vpack.c.bf16 %v363, %v362
    %v370 = vpack.c.bf16 %v365, %v364
    %v371 = vpack.c.bf16 %v367, %v366
    %v376 = vunpack.c.l.b16 %v368
    %v377 = vunpack.c.h.b16 %v368
    %v378 = vunpack.c.l.b16 %v369
    %v379 = vunpack.c.h.b16 %v369
    %v380 = vunpack.c.l.b16 %v370
    %v381 = vunpack.c.h.b16 %v370
    %v382 = vunpack.c.l.b16 %v371
    %v383 = vunpack.c.h.b16 %v371
    %v384 = vpack.c.b16 %v376, %v376
    %v385 = vpack.c.b16 %v377, %v377
    %v386 = vpack.c.b16 %v378, %v378
    %v387 = vpack.c.b16 %v379, %v379
    %v388 = vpack.c.b16 %v380, %v380
    %v389 = vpack.c.b16 %v381, %v381
    %v390 = vpack.c.b16 %v382, %v382
    %v391 = vpack.c.b16 %v383, %v383
    %vm400 = vcmask 257024
    %401 = vst.msk [vmem:[%s6] sm:$0xf] %vm400, %v384
    %402 = vst.msk [vmem:[%s6 + $0x4] sm:$0xf] %vm400, %v385
    %403 = vst.msk [vmem:[%s6 + $0x8] sm:$0xf] %vm400, %v386
    %404 = vst.msk [vmem:[%s6 + $0xc] sm:$0xf] %vm400, %v387
    %405 = vst.msk [vmem:[%s6 + $0x10] sm:$0xf] %vm400, %v388
    %406 = vst.msk [vmem:[%s6 + $0x14] sm:$0xf] %vm400, %v389
    %407 = vst.msk [vmem:[%s6 + $0x18] sm:$0xf] %vm400, %v390
    %408 = vst.msk [vmem:[%s6 + $0x1c] sm:$0xf] %vm400, %v391
  $region33: #{bert_forward.14} parent=0 // pred_fallthru
    _
  // Predicated region
  $region34: #{bert_forward.14} parent=0 // pred_check
    _
  $region35: #{bert_forward.14} parent=0 // pred_check_branch
    %410 = sbr.rel (0) target = $region37
  $region36: #{bert_forward.14} parent=0 // pred_region
    _
  $region37: #{bert_forward.14} parent=0 // pred_fallthru
    _
  // Predicated region
  $region38: #{bert_forward.14} parent=0 // pred_check
    _
  $region39: #{bert_forward.14} parent=0 // pred_check_branch
    %412 = sbr.rel (0) target = $region41
  $region40: #{bert_forward.14} parent=0 // pred_region
    _
  $region41: #{bert_forward.14} parent=0 // pred_fallthru
    _

// kernel: bert_forward.15
$region0: #{bert_forward.15}
  #allocation0 [shape = 'u32[]', space=smem, size = 0x4, offset = 0x4, fixed_abs, tag = 'smem constant byte address 0x4 - core index']
  #allocation1 [shape = 'u32[144,128]{1,0:T(1,128)}', space=vmem, size = 0x12000, scoped, tag = 'internal scratch']
  #allocation2 [shape = 'f32[64,128]{1,0:T(8,128)}', space=vmem, size = 0x8000, scoped, tag = 'scratch operand']
  %s0 = inlined_call_operand.vmem [shape: bf16[64,32], index: 0, kind: input, shape index: {}]
  %s1 = inlined_call_operand.vmem [shape: bf16[32,128], index: 1, kind: input, shape index: {}]
  %s2 = inlined_call_operand.vmem [shape: f32[1,128], index: 2, kind: input, shape index: {}]
  %s3 = inlined_call_operand.vmem [shape: bf16[64,128], index: 3, kind: output, shape index: {}]
  %s4 = sld [smem:[#allocation0]]
  $region30: #{bert_forward.15} parent=0
    _
  %s6 = ssub.s32 1, %s4
  %s7 = scalar_select 0, %s6, %s4
  // Predicated region
  $region2: #{bert_forward.15} parent=0 // pred_check
    _
  $region3: #{bert_forward.15} parent=0 // pred_check_branch
    %9 = sbr.rel (0) target = $region5
  $region4: #{bert_forward.15} parent=0 // pred_region
    _
  $region5: #{bert_forward.15} parent=0 // pred_fallthru
    _
  // Predicated region
  $region6: #{bert_forward.15} parent=0 // pred_check
    _
  $region7: #{bert_forward.15} parent=0 // pred_check_branch
    %11 = sbr.rel (0) target = $region9
  $region8: #{bert_forward.15} parent=0 // pred_region
    _
  $region9: #{bert_forward.15} parent=0 // pred_fallthru
    _
  // Predicated region
  $region10: #{bert_forward.15} parent=0 // pred_check
    _
  $region11: #{bert_forward.15} parent=0 // pred_check_branch
    %13 = sbr.rel (0) target = $region13
  $region12: #{bert_forward.15} parent=0 // pred_region
    _
  $region13: #{bert_forward.15} parent=0 // pred_fallthru
    _
  %p15 = scmp.eq.s32.totalorder 0, 0
  // Predicated region
  $region14: #{bert_forward.15} parent=0 // pred_check
    %p16 = pneg %p15
  $region15: #{bert_forward.15} parent=0 // pred_check_branch
    %18 = sbr.rel (%p16) target = $region17
  $region16: #{bert_forward.15} parent=0 // pred_region
    %19 = vst [vmem:[#allocation2] sm:$0xff] 0.0
    %20 = vst [vmem:[#allocation2 + $0x8] sm:$0xff] 0.0
    %21 = vst [vmem:[#allocation2 + $0x10] sm:$0xff] 0.0
    %22 = vst [vmem:[#allocation2 + $0x18] sm:$0xff] 0.0
    %23 = vst [vmem:[#allocation2 + $0x20] sm:$0xff] 0.0
    %24 = vst [vmem:[#allocation2 + $0x28] sm:$0xff] 0.0
    %25 = vst [vmem:[#allocation2 + $0x30] sm:$0xff] 0.0
    %26 = vst [vmem:[#allocation2 + $0x38] sm:$0xff] 0.0
  $region17: #{bert_forward.15} parent=0 // pred_fallthru
    _
  %v27 = vld [vmem:[#allocation2] sm:$0xff]
  %v28 = vld [vmem:[#allocation2 + $0x8] sm:$0xff]
  %v29 = vld [vmem:[#allocation2 + $0x10] sm:$0xff]
  %v30 = vld [vmem:[#allocation2 + $0x18] sm:$0xff]
  %v31 = vld [vmem:[#allocation2 + $0x20] sm:$0xff]
  %v32 = vld [vmem:[#allocation2 + $0x28] sm:$0xff]
  %v33 = vld [vmem:[#allocation2 + $0x30] sm:$0xff]
  %v34 = vld [vmem:[#allocation2 + $0x38] sm:$0xff]
  %v35 = vld [vmem:[%s0] sm:$0xf]
  %v36 = vld [vmem:[%s0 + $0x4] sm:$0xf]
  %v37 = vld [vmem:[%s0 + $0x8] sm:$0xf]
  %v38 = vld [vmem:[%s0 + $0xc] sm:$0xf]
  %v39 = vld [vmem:[%s0 + $0x10] sm:$0xf]
  %v40 = vld [vmem:[%s0 + $0x14] sm:$0xf]
  %v41 = vld [vmem:[%s0 + $0x18] sm:$0xf]
  %v42 = vld [vmem:[%s0 + $0x1c] sm:$0xf]
  %v43 = vld [vmem:[%s1] sm:$0xf]
  %v44 = vld [vmem:[%s1 + $0x4] sm:$0xf]
  %v45 = vld [vmem:[%s1 + $0x8] sm:$0xf]
  %v46 = vld [vmem:[%s1 + $0xc] sm:$0xf]
  %v55 = vunpack.c.l.b16 %v35
  %v56 = vunpack.c.l.b16 %v36
  %v57 = vunpack.c.l.b16 %v37
  %v58 = vunpack.c.l.b16 %v38
  %v59 = vunpack.c.l.b16 %v39
  %v60 = vunpack.c.l.b16 %v40
  %v61 = vunpack.c.l.b16 %v41
  %v62 = vunpack.c.l.b16 %v42
  %v63 = vpack.c.b16 %v56, %v55
  %v64 = vpack.c.b16 %v58, %v57
  %v65 = vpack.c.b16 %v60, %v59
  %v66 = vpack.c.b16 %v62, %v61
  %v71 = vunpack.c.l.b16 %v43
  %v72 = vunpack.c.l.b16 %v44
  %v73 = vunpack.c.l.b16 %v45
  %v74 = vunpack.c.l.b16 %v46
  %v75 = vpack.c.b16 %v72, %v71
  %v76 = vpack.c.b16 %v74, %v73
  %vm79 = vcmask 261120
  %v81 = vsel %vm79, %v63, 0
  %v84 = vsel %vm79, %v64, 0
  %v87 = vsel %vm79, %v65, 0
  %v90 = vsel %vm79, %v66, 0
  %92 = vmatprep.subr.bf16.mxu0 0
  %93 = vmatpush1.bf16.msra.mxu0 %v75
  %94 = vmatprep.subr.bf16.mxu0 0
  %95 = vmatpush1.bf16.msra.mxu0 %v76
  %96 = vmatprep.subr.bf16.mxu0 0
  %97 = vmatpush1.bf16.msra.mxu0 0
  %98 = vmatprep.subr.bf16.mxu0 0
  %99 = vmatpush1.bf16.msra.mxu0 0
  %100 = vmatprep.subr.bf16.mxu0 0
  %101 = vmatpush1.bf16.msra.mxu0 0
  %102 = vmatprep.subr.bf16.mxu0 0
  %103 = vmatpush1.bf16.msra.mxu0 0
  %104 = vmatprep.subr.bf16.mxu0 0
  %105 = vmatpush1.bf16.msra.mxu0 0
  %106 = vmatprep.subr.bf16.mxu0 0
  %107 = vmatpush1.bf16.msra.mxu0 0
  %108 = vmatprep.subr.bf16.mxu0 0
  %109 = vmatpush1.bf16.msra.mxu0 0
  %110 = vmatprep.subr.bf16.mxu0 0
  %111 = vmatpush1.bf16.msra.mxu0 0
  %112 = vmatprep.subr.bf16.mxu0 0
  %113 = vmatpush1.bf16.msra.mxu0 0
  %114 = vmatprep.subr.bf16.mxu0 0
  %115 = vmatpush1.bf16.msra.mxu0 0
  %116 = vmatprep.subr.bf16.mxu0 0
  %117 = vmatpush1.bf16.msra.mxu0 0
  %118 = vmatprep.subr.bf16.mxu0 0
  %119 = vmatpush1.bf16.msra.mxu0 0
  %120 = vmatprep.subr.bf16.mxu0 0
  %121 = vmatpush1.bf16.msra.mxu0 0
  %122 = vmatprep.subr.bf16.mxu0 0
  %123 = vmatpush1.bf16.msra.mxu0 0
  %124 = vmatprep.mubr.bf16.mxu0 0
  %125 = vmatmul.mubr.bf16.gmra.mrb[0].mxu0 %v81
  %v126 = vpop.f32.mrb[0].mxu0
  %v127 = vadd.f32 0.0, %v126
  %v128 = vpop.f32.mrb[0].mxu0
  %v129 = vpop.f32.mrb[0].mxu0
  %v130 = vadd.f32 0.0, %v129
  %v131 = vpop.f32.mrb[0].mxu0
  %132 = vmatprep.mubr.bf16.mxu0 0
  %133 = vmatmul.mubr.bf16.gmra.mrb[0].mxu0 %v84
  %v134 = vpop.f32.mrb[0].mxu0
  %v135 = vadd.f32 0.0, %v134
  %v136 = vpop.f32.mrb[0].mxu0
  %v137 = vpop.f32.mrb[0].mxu0
  %v138 = vadd.f32 0.0, %v137
  %v139 = vpop.f32.mrb[0].mxu0
  %140 = vmatprep.mubr.bf16.mxu0 0
  %141 = vmatmul.mubr.bf16.gmra.mrb[0].mxu0 %v87
  %v142 = vpop.f32.mrb[0].mxu0
  %v143 = vadd.f32 0.0, %v142
  %v144 = vpop.f32.mrb[0].mxu0
  %v145 = vpop.f32.mrb[0].mxu0
  %v146 = vadd.f32 0.0, %v145
  %v147 = vpop.f32.mrb[0].mxu0
  %148 = vmatprep.mubr.bf16.mxu0 0
  %149 = vmatmul.mubr.bf16.gmra.mrb[0].mxu0 %v90
  %v150 = vpop.f32.mrb[0].mxu0
  %v151 = vadd.f32 0.0, %v150
  %v152 = vpop.f32.mrb[0].mxu0
  %v153 = vpop.f32.mrb[0].mxu0
  %v154 = vadd.f32 0.0, %v153
  %v155 = vpop.f32.mrb[0].mxu0
  %156 = vdwg.mxu0
  %v157 = vadd.f32 %v27, %v127
  %v158 = vadd.f32 %v28, %v130
  %v159 = vadd.f32 %v29, %v135
  %v160 = vadd.f32 %v30, %v138
  %v161 = vadd.f32 %v31, %v143
  %v162 = vadd.f32 %v32, %v146
  %v163 = vadd.f32 %v33, %v151
  %v164 = vadd.f32 %v34, %v154
  %165 = vst [vmem:[#allocation2] sm:$0xff] %v157
  %166 = vst [vmem:[#allocation2 + $0x8] sm:$0xff] %v158
  %167 = vst [vmem:[#allocation2 + $0x10] sm:$0xff] %v159
  %168 = vst [vmem:[#allocation2 + $0x18] sm:$0xff] %v160
  %169 = vst [vmem:[#allocation2 + $0x20] sm:$0xff] %v161
  %170 = vst [vmem:[#allocation2 + $0x28] sm:$0xff] %v162
  %171 = vst [vmem:[#allocation2 + $0x30] sm:$0xff] %v163
  %172 = vst [vmem:[#allocation2 + $0x38] sm:$0xff] %v164
  // Predicated region
  $region18: #{bert_forward.15} parent=0 // pred_check
    %p173 = pneg %p15
  $region19: #{bert_forward.15} parent=0 // pred_check_branch
    %175 = sbr.rel (%p173) target = $region21
  $region20: #{bert_forward.15} parent=0 // pred_region
    %v176 = vld [vmem:[#allocation2] sm:$0xff]
    %v177 = vld [vmem:[#allocation2 + $0x8] sm:$0xff]
    %v178 = vld [vmem:[#allocation2 + $0x10] sm:$0xff]
    %v179 = vld [vmem:[#allocation2 + $0x18] sm:$0xff]
    %v180 = vld [vmem:[#allocation2 + $0x20] sm:$0xff]
    %v181 = vld [vmem:[#allocation2 + $0x28] sm:$0xff]
    %v182 = vld [vmem:[#allocation2 + $0x30] sm:$0xff]
    %v183 = vld [vmem:[#allocation2 + $0x38] sm:$0xff]
    %v184 = vld [vmem:[%s2] sm:$0x1]
    %v186 = vlaneseq
    %v187 = vshrl.u32 %v186, 7
    %v188 = vsub.s32 0, %v187
    %v189 = vrot.slane %v184, %v188
    %v191 = vadd.f32 %v176, %v189
    %v192 = vadd.f32 %v177, %v189
    %v193 = vadd.f32 %v178, %v189
    %v194 = vadd.f32 %v179, %v189
    %v195 = vadd.f32 %v180, %v189
    %v196 = vadd.f32 %v181, %v189
    %v197 = vadd.f32 %v182, %v189
    %v198 = vadd.f32 %v183, %v189
    %v199 = vmul.f32 %v191, 0.5
    %v200 = vmul.f32 %v192, 0.5
    %v201 = vmul.f32 %v193, 0.5
    %v202 = vmul.f32 %v194, 0.5
    %v203 = vmul.f32 %v195, 0.5
    %v204 = vmul.f32 %v196, 0.5
    %v205 = vmul.f32 %v197, 0.5
    %v206 = vmul.f32 %v198, 0.5
    %v207 = vmul.f32 %v191, 0.044715
    %v208 = vmul.f32 %v192, 0.044715
    %v209 = vmul.f32 %v193, 0.044715
    %v210 = vmul.f32 %v194, 0.044715
    %v211 = vmul.f32 %v195, 0.044715
    %v212 = vmul.f32 %v196, 0.044715
    %v213 = vmul.f32 %v197, 0.044715
    %v214 = vmul.f32 %v198, 0.044715
    %v215 = vmul.f32 %v207, %v191
    %v216 = vmul.f32 %v208, %v192
    %v217 = vmul.f32 %v209, %v193
    %v218 = vmul.f32 %v210, %v194
    %v219 = vmul.f32 %v211, %v195
    %v220 = vmul.f32 %v212, %v196
    %v221 = vmul.f32 %v213, %v197
    %v222 = vmul.f32 %v214, %v198
    %v223 = vmul.f32 %v215, %v191
    %v224 = vmul.f32 %v216, %v192
    %v225 = vmul.f32 %v217, %v193
    %v226 = vmul.f32 %v218, %v194
    %v227 = vmul.f32 %v219, %v195
    %v228 = vmul.f32 %v220, %v196
    %v229 = vmul.f32 %v221, %v197
    %v230 = vmul.f32 %v222, %v198
    %v231 = vadd.f32 %v191, %v223
    %v232 = vadd.f32 %v192, %v224
    %v233 = vadd.f32 %v193, %v225
    %v234 = vadd.f32 %v194, %v226
    %v235 = vadd.f32 %v195, %v227
    %v236 = vadd.f32 %v196, %v228
    %v237 = vadd.f32 %v197, %v229
    %v238 = vadd.f32 %v198, %v230
    %v239 = vmul.f32 %v231, 0.7978846
    %v240 = vmul.f32 %v232, 0.7978846
    %v241 = vmul.f32 %v233, 0.7978846
    %v242 = vmul.f32 %v234, 0.7978846
    %v243 = vmul.f32 %v235, 0.7978846
    %v244 = vmul.f32 %v236, 0.7978846
    %v245 = vmul.f32 %v237, 0.7978846
    %v246 = vmul.f32 %v238, 0.7978846
    %v247 = vtanh.pop %v239
    %v248 = vtanh.pop %v240
    %v249 = vtanh.pop %v241
    %v250 = vtanh.pop %v242
    %v251 = vtanh.pop %v243
    %v252 = vtanh.pop %v244
    %v253 = vtanh.pop %v245
    %v254 = vtanh.pop %v246
    %v255 = vadd.f32 %v247, 1.0
    %v256 = vadd.f32 %v248, 1.0
    %v257 = vadd.f32 %v249, 1.0
    %v258 = vadd.f32 %v250, 1.0
    %v259 = vadd.f32 %v251, 1.0
    %v260 = vadd.f32 %v252, 1.0
    %v261 = vadd.f32 %v253, 1.0
    %v262 = vadd.f32 %v254, 1.0
    %v263 = vmul.f32 %v199, %v255
    %v264 = vmul.f32 %v200, %v256
    %v265 = vmul.f32 %v201, %v257
    %v266 = vmul.f32 %v202, %v258
    %v267 = vmul.f32 %v203, %v259
    %v268 = vmul.f32 %v204, %v260
    %v269 = vmul.f32 %v205, %v261
    %v270 = vmul.f32 %v206, %v262
    %v271 = vpack.c.bf16 %v264, %v263
    %v272 = vpack.c.bf16 %v266, %v265
    %v273 = vpack.c.bf16 %v268, %v267
    %v274 = vpack.c.bf16 %v270, %v269
    %v279 = vunpack.c.l.b16 %v271
    %v280 = vunpack.c.h.b16 %v271
    %v281 = vunpack.c.l.b16 %v272
    %v282 = vunpack.c.h.b16 %v272
    %v283 = vunpack.c.l.b16 %v273
    %v284 = vunpack.c.h.b16 %v273
    %v285 = vunpack.c.l.b16 %v274
    %v286 = vunpack.c.h.b16 %v274
    %v287 = vpack.c.b16 %v279, %v279
    %v288 = vpack.c.b16 %v280, %v280
    %v289 = vpack.c.b16 %v281, %v281
    %v290 = vpack.c.b16 %v282, %v282
    %v291 = vpack.c.b16 %v283, %v283
    %v292 = vpack.c.b16 %v284, %v284
    %v293 = vpack.c.b16 %v285, %v285
    %v294 = vpack.c.b16 %v286, %v286
    %303 = vst [vmem:[%s3] sm:$0xf] %v287
    %304 = vst [vmem:[%s3 + $0x4] sm:$0xf] %v288
    %305 = vst [vmem:[%s3 + $0x8] sm:$0xf] %v289
    %306 = vst [vmem:[%s3 + $0xc] sm:$0xf] %v290
    %307 = vst [vmem:[%s3 + $0x10] sm:$0xf] %v291
    %308 = vst [vmem:[%s3 + $0x14] sm:$0xf] %v292
    %309 = vst [vmem:[%s3 + $0x18] sm:$0xf] %v293
    %310 = vst [vmem:[%s3 + $0x1c] sm:$0xf] %v294
  $region21: #{bert_forward.15} parent=0 // pred_fallthru
    _
  // Predicated region
  $region22: #{bert_forward.15} parent=0 // pred_check
    _
  $region23: #{bert_forward.15} parent=0 // pred_check_branch
    %312 = sbr.rel (0) target = $region25
  $region24: #{bert_forward.15} parent=0 // pred_region
    _
  $region25: #{bert_forward.15} parent=0 // pred_fallthru
    _
  // Predicated region
  $region26: #{bert_forward.15} parent=0 // pred_check
    _
  $region27: #{bert_forward.15} parent=0 // pred_check_branch
    %314 = sbr.rel (0) target = $region29
  $region28: #{bert_forward.15} parent=0 // pred_region
    _
  $region29: #{bert_forward.15} parent=0 // pred_fallthru
    _

// kernel: bert_forward.22
$region0: #{bert_forward.22}
  #allocation0 [shape = 'u32[]', space=smem, size = 0x4, offset = 0x4, fixed_abs, tag = 'smem constant byte address 0x4 - core index']
  #allocation1 [shape = 'u32[144,128]{1,0:T(1,128)}', space=vmem, size = 0x12000, scoped, tag = 'internal scratch']
  #allocation2 [shape = 'f32[8,128]{1,0:T(8,128)}', space=vmem, size = 0x1000, scoped, tag = 'scratch operand']
  %s0 = inlined_call_operand.vmem [shape: bf16[8,32], index: 0, kind: input, shape index: {}]
  %s1 = inlined_call_operand.vmem [shape: bf16[32,128], index: 1, kind: input, shape index: {}]
  %s2 = inlined_call_operand.vmem [shape: f32[1,128], index: 2, kind: input, shape index: {}]
  %s3 = inlined_call_operand.vmem [shape: bf16[8,128], index: 3, kind: output, shape index: {}]
  %s4 = sld [smem:[#allocation0]]
  $region30: #{bert_forward.22} parent=0
    _
  %s6 = ssub.s32 1, %s4
  %s7 = scalar_select 0, %s6, %s4
  // Predicated region
  $region2: #{bert_forward.22} parent=0 // pred_check
    _
  $region3: #{bert_forward.22} parent=0 // pred_check_branch
    %9 = sbr.rel (0) target = $region5
  $region4: #{bert_forward.22} parent=0 // pred_region
    _
  $region5: #{bert_forward.22} parent=0 // pred_fallthru
    _
  // Predicated region
  $region6: #{bert_forward.22} parent=0 // pred_check
    _
  $region7: #{bert_forward.22} parent=0 // pred_check_branch
    %11 = sbr.rel (0) target = $region9
  $region8: #{bert_forward.22} parent=0 // pred_region
    _
  $region9: #{bert_forward.22} parent=0 // pred_fallthru
    _
  // Predicated region
  $region10: #{bert_forward.22} parent=0 // pred_check
    _
  $region11: #{bert_forward.22} parent=0 // pred_check_branch
    %13 = sbr.rel (0) target = $region13
  $region12: #{bert_forward.22} parent=0 // pred_region
    _
  $region13: #{bert_forward.22} parent=0 // pred_fallthru
    _
  %p15 = scmp.eq.s32.totalorder 0, 0
  // Predicated region
  $region14: #{bert_forward.22} parent=0 // pred_check
    %p16 = pneg %p15
  $region15: #{bert_forward.22} parent=0 // pred_check_branch
    %18 = sbr.rel (%p16) target = $region17
  $region16: #{bert_forward.22} parent=0 // pred_region
    %19 = vst [vmem:[#allocation2] sm:$0xff] 0.0
  $region17: #{bert_forward.22} parent=0 // pred_fallthru
    _
  %v20 = vld [vmem:[#allocation2] sm:$0xff]
  %v21 = vld [vmem:[%s0] sm:$0xf]
  %v22 = vld [vmem:[%s1] sm:$0xf]
  %v23 = vld [vmem:[%s1 + $0x4] sm:$0xf]
  %v24 = vld [vmem:[%s1 + $0x8] sm:$0xf]
  %v25 = vld [vmem:[%s1 + $0xc] sm:$0xf]
  %v30 = vunpack.c.l.b16 %v22
  %v31 = vunpack.c.l.b16 %v23
  %v32 = vunpack.c.l.b16 %v24
  %v33 = vunpack.c.l.b16 %v25
  %v34 = vpack.c.b16 %v31, %v30
  %v35 = vpack.c.b16 %v33, %v32
  %vm38 = vcmask 261120
  %v40 = vsel %vm38, %v21, 0
  %42 = vmatprep.subr.bf16.mxu0 0
  %43 = vmatpush1.bf16.msra.mxu0 %v34
  %44 = vmatprep.subr.bf16.mxu0 0
  %45 = vmatpush1.bf16.msra.mxu0 %v35
  %46 = vmatprep.subr.bf16.mxu0 0
  %47 = vmatpush1.bf16.msra.mxu0 0
  %48 = vmatprep.subr.bf16.mxu0 0
  %49 = vmatpush1.bf16.msra.mxu0 0
  %50 = vmatprep.subr.bf16.mxu0 0
  %51 = vmatpush1.bf16.msra.mxu0 0
  %52 = vmatprep.subr.bf16.mxu0 0
  %53 = vmatpush1.bf16.msra.mxu0 0
  %54 = vmatprep.subr.bf16.mxu0 0
  %55 = vmatpush1.bf16.msra.mxu0 0
  %56 = vmatprep.subr.bf16.mxu0 0
  %57 = vmatpush1.bf16.msra.mxu0 0
  %58 = vmatprep.subr.bf16.mxu0 0
  %59 = vmatpush1.bf16.msra.mxu0 0
  %60 = vmatprep.subr.bf16.mxu0 0
  %61 = vmatpush1.bf16.msra.mxu0 0
  %62 = vmatprep.subr.bf16.mxu0 0
  %63 = vmatpush1.bf16.msra.mxu0 0
  %64 = vmatprep.subr.bf16.mxu0 0
  %65 = vmatpush1.bf16.msra.mxu0 0
  %66 = vmatprep.subr.bf16.mxu0 0
  %67 = vmatpush1.bf16.msra.mxu0 0
  %68 = vmatprep.subr.bf16.mxu0 0
  %69 = vmatpush1.bf16.msra.mxu0 0
  %70 = vmatprep.subr.bf16.mxu0 0
  %71 = vmatpush1.bf16.msra.mxu0 0
  %72 = vmatprep.subr.bf16.mxu0 0
  %73 = vmatpush1.bf16.msra.mxu0 0
  %74 = vmatprep.mubr.bf16.mxu0 0
  %75 = vmatmul.mubr.bf16.gmra.mrb[0].mxu0 %v40
  %v76 = vpop.f32.mrb[0].mxu0
  %v77 = vadd.f32 0.0, %v76
  %v78 = vpop.f32.mrb[0].mxu0
  %v79 = vpop.f32.mrb[0].mxu0
  %v80 = vpop.f32.mrb[0].mxu0
  %81 = vdwg.mxu0
  %v82 = vadd.f32 %v20, %v77
  %83 = vst [vmem:[#allocation2] sm:$0xff] %v82
  // Predicated region
  $region18: #{bert_forward.22} parent=0 // pred_check
    %p84 = pneg %p15
  $region19: #{bert_forward.22} parent=0 // pred_check_branch
    %86 = sbr.rel (%p84) target = $region21
  $region20: #{bert_forward.22} parent=0 // pred_region
    %v87 = vld [vmem:[#allocation2] sm:$0xff]
    %v88 = vld [vmem:[%s2] sm:$0x1]
    %v90 = vlaneseq
    %v91 = vshrl.u32 %v90, 7
    %v92 = vsub.s32 0, %v91
    %v93 = vrot.slane %v88, %v92
    %v95 = vadd.f32 %v87, %v93
    %v96 = vtanh.pop %v95
    %v97 = vpack.c.bf16 %v96, %v96
    %98 = vst [vmem:[%s3] sm:$0xf] %v97
  $region21: #{bert_forward.22} parent=0 // pred_fallthru
    _
  // Predicated region
  $region22: #{bert_forward.22} parent=0 // pred_check
    _
  $region23: #{bert_forward.22} parent=0 // pred_check_branch
    %100 = sbr.rel (0) target = $region25
  $region24: #{bert_forward.22} parent=0 // pred_region
    _
  $region25: #{bert_forward.22} parent=0 // pred_fallthru
    _
  // Predicated region
  $region26: #{bert_forward.22} parent=0 // pred_check
    _
  $region27: #{bert_forward.22} parent=0 // pred_check_branch
    %102 = sbr.rel (0) target = $region29
  $region28: #{bert_forward.22} parent=0 // pred_region
    _
  $region29: #{bert_forward.22} parent=0 // pred_fallthru
    _

// kernel: bert_forward.16
$region0: #{bert_forward.16}
  #allocation0 [shape = 'u32[]', space=smem, size = 0x4, offset = 0x4, fixed_abs, tag = 'smem constant byte address 0x4 - core index']
  #allocation1 [shape = 'u32[144,128]{1,0:T(1,128)}', space=vmem, size = 0x12000, scoped, tag = 'internal scratch']
  #allocation2 [shape = 'f32[64,32]{1,0:T(8,128)}', space=vmem, size = 0x8000, scoped, tag = 'scratch operand']
  %s0 = inlined_call_operand.vmem [shape: bf16[64,64], index: 0, kind: input, shape index: {}]
  %s1 = inlined_call_operand.vmem [shape: bf16[64,32], index: 1, kind: input, shape index: {}]
  %s2 = inlined_call_operand.vmem [shape: f32[1,32], index: 2, kind: input, shape index: {}]
  %s3 = inlined_call_operand.vmem [shape: bf16[64,32], index: 3, kind: input, shape index: {}]
  %s4 = inlined_call_operand.vmem [shape: f32[1,32], index: 4, kind: input, shape index: {}]
  %s5 = inlined_call_operand.vmem [shape: f32[1,32], index: 5, kind: input, shape index: {}]
  %s6 = inlined_call_operand.vmem [shape: bf16[64,32], index: 6, kind: output, shape index: {}]
  %s7 = sld [smem:[#allocation0]]
  $region42: #{bert_forward.16} parent=0
    _
  %s9 = ssub.s32 1, %s7
  %s10 = scalar_select 0, %s9, %s7
  // Predicated region
  $region2: #{bert_forward.16} parent=0 // pred_check
    _
  $region3: #{bert_forward.16} parent=0 // pred_check_branch
    %12 = sbr.rel (0) target = $region5
  $region4: #{bert_forward.16} parent=0 // pred_region
    _
  $region5: #{bert_forward.16} parent=0 // pred_fallthru
    _
  // Predicated region
  $region6: #{bert_forward.16} parent=0 // pred_check
    _
  $region7: #{bert_forward.16} parent=0 // pred_check_branch
    %14 = sbr.rel (0) target = $region9
  $region8: #{bert_forward.16} parent=0 // pred_region
    _
  $region9: #{bert_forward.16} parent=0 // pred_fallthru
    _
  // Predicated region
  $region10: #{bert_forward.16} parent=0 // pred_check
    _
  $region11: #{bert_forward.16} parent=0 // pred_check_branch
    %16 = sbr.rel (0) target = $region13
  $region12: #{bert_forward.16} parent=0 // pred_region
    _
  $region13: #{bert_forward.16} parent=0 // pred_fallthru
    _
  // Predicated region
  $region14: #{bert_forward.16} parent=0 // pred_check
    _
  $region15: #{bert_forward.16} parent=0 // pred_check_branch
    %18 = sbr.rel (0) target = $region17
  $region16: #{bert_forward.16} parent=0 // pred_region
    _
  $region17: #{bert_forward.16} parent=0 // pred_fallthru
    _
  // Predicated region
  $region18: #{bert_forward.16} parent=0 // pred_check
    _
  $region19: #{bert_forward.16} parent=0 // pred_check_branch
    %20 = sbr.rel (0) target = $region21
  $region20: #{bert_forward.16} parent=0 // pred_region
    _
  $region21: #{bert_forward.16} parent=0 // pred_fallthru
    _
  // Predicated region
  $region22: #{bert_forward.16} parent=0 // pred_check
    _
  $region23: #{bert_forward.16} parent=0 // pred_check_branch
    %22 = sbr.rel (0) target = $region25
  $region24: #{bert_forward.16} parent=0 // pred_region
    _
  $region25: #{bert_forward.16} parent=0 // pred_fallthru
    _
  %p24 = scmp.eq.s32.totalorder 0, 0
  // Predicated region
  $region26: #{bert_forward.16} parent=0 // pred_check
    %p25 = pneg %p24
  $region27: #{bert_forward.16} parent=0 // pred_check_branch
    %27 = sbr.rel (%p25) target = $region29
  $region28: #{bert_forward.16} parent=0 // pred_region
    %vm28 = vcmask 261120
    %29 = vst.msk [vmem:[#allocation2] sm:$0xff] %vm28, 0.0
    %30 = vst.msk [vmem:[#allocation2 + $0x8] sm:$0xff] %vm28, 0.0
    %31 = vst.msk [vmem:[#allocation2 + $0x10] sm:$0xff] %vm28, 0.0
    %32 = vst.msk [vmem:[#allocation2 + $0x18] sm:$0xff] %vm28, 0.0
    %33 = vst.msk [vmem:[#allocation2 + $0x20] sm:$0xff] %vm28, 0.0
    %34 = vst.msk [vmem:[#allocation2 + $0x28] sm:$0xff] %vm28, 0.0
    %35 = vst.msk [vmem:[#allocation2 + $0x30] sm:$0xff] %vm28, 0.0
    %36 = vst.msk [vmem:[#allocation2 + $0x38] sm:$0xff] %vm28, 0.0
  $region29: #{bert_forward.16} parent=0 // pred_fallthru
    _
  %v37 = vld [vmem:[#allocation2] sm:$0xff]
  %v38 = vld [vmem:[#allocation2 + $0x8] sm:$0xff]
  %v39 = vld [vmem:[#allocation2 + $0x10] sm:$0xff]
  %v40 = vld [vmem:[#allocation2 + $0x18] sm:$0xff]
  %v41 = vld [vmem:[#allocation2 + $0x20] sm:$0xff]
  %v42 = vld [vmem:[#allocation2 + $0x28] sm:$0xff]
  %v43 = vld [vmem:[#allocation2 + $0x30] sm:$0xff]
  %v44 = vld [vmem:[#allocation2 + $0x38] sm:$0xff]
  %v45 = vld [vmem:[%s0] sm:$0xf]
  %v46 = vld [vmem:[%s0 + $0x4] sm:$0xf]
  %v47 = vld [vmem:[%s0 + $0x8] sm:$0xf]
  %v48 = vld [vmem:[%s0 + $0xc] sm:$0xf]
  %v49 = vld [vmem:[%s0 + $0x10] sm:$0xf]
  %v50 = vld [vmem:[%s0 + $0x14] sm:$0xf]
  %v51 = vld [vmem:[%s0 + $0x18] sm:$0xf]
  %v52 = vld [vmem:[%s0 + $0x1c] sm:$0xf]
  %v53 = vld [vmem:[%s1] sm:$0xf]
  %v54 = vld [vmem:[%s1 + $0x4] sm:$0xf]
  %v55 = vld [vmem:[%s1 + $0x8] sm:$0xf]
  %v56 = vld [vmem:[%s1 + $0xc] sm:$0xf]
  %v57 = vld [vmem:[%s1 + $0x10] sm:$0xf]
  %v58 = vld [vmem:[%s1 + $0x14] sm:$0xf]
  %v59 = vld [vmem:[%s1 + $0x18] sm:$0xf]
  %v60 = vld [vmem:[%s1 + $0x1c] sm:$0xf]
  %v69 = vunpack.c.l.b16 %v45
  %v70 = vunpack.c.l.b16 %v46
  %v71 = vunpack.c.l.b16 %v47
  %v72 = vunpack.c.l.b16 %v48
  %v73 = vunpack.c.l.b16 %v49
  %v74 = vunpack.c.l.b16 %v50
  %v75 = vunpack.c.l.b16 %v51
  %v76 = vunpack.c.l.b16 %v52
  %v77 = vpack.c.b16 %v70, %v69
  %v78 = vpack.c.b16 %v72, %v71
  %v79 = vpack.c.b16 %v74, %v73
  %v80 = vpack.c.b16 %v76, %v75
  %v89 = vunpack.c.l.b16 %v53
  %v90 = vunpack.c.l.b16 %v54
  %v91 = vunpack.c.l.b16 %v55
  %v92 = vunpack.c.l.b16 %v56
  %v93 = vunpack.c.l.b16 %v57
  %v94 = vunpack.c.l.b16 %v58
  %v95 = vunpack.c.l.b16 %v59
  %v96 = vunpack.c.l.b16 %v60
  %v97 = vpack.c.b16 %v90, %v89
  %v98 = vpack.c.b16 %v92, %v91
  %v99 = vpack.c.b16 %v94, %v93
  %v100 = vpack.c.b16 %v96, %v95
  %vm105 = vcmask 523264
  %v107 = vsel %vm105, %v77, 0
  %v110 = vsel %vm105, %v78, 0
  %v113 = vsel %vm105, %v79, 0
  %v116 = vsel %vm105, %v80, 0
  %118 = vmatprep.subr.bf16.mxu0 0
  %119 = vmatpush1.bf16.msra.mxu0 %v97
  %120 = vmatprep.subr.bf16.mxu0 0
  %121 = vmatpush1.bf16.msra.mxu0 %v98
  %122 = vmatprep.subr.bf16.mxu0 0
  %123 = vmatpush1.bf16.msra.mxu0 %v99
  %124 = vmatprep.subr.bf16.mxu0 0
  %125 = vmatpush1.bf16.msra.mxu0 %v100
  %126 = vmatprep.subr.bf16.mxu0 0
  %127 = vmatpush1.bf16.msra.mxu0 0
  %128 = vmatprep.subr.bf16.mxu0 0
  %129 = vmatpush1.bf16.msra.mxu0 0
  %130 = vmatprep.subr.bf16.mxu0 0
  %131 = vmatpush1.bf16.msra.mxu0 0
  %132 = vmatprep.subr.bf16.mxu0 0
  %133 = vmatpush1.bf16.msra.mxu0 0
  %134 = vmatprep.subr.bf16.mxu0 0
  %135 = vmatpush1.bf16.msra.mxu0 0
  %136 = vmatprep.subr.bf16.mxu0 0
  %137 = vmatpush1.bf16.msra.mxu0 0
  %138 = vmatprep.subr.bf16.mxu0 0
  %139 = vmatpush1.bf16.msra.mxu0 0
  %140 = vmatprep.subr.bf16.mxu0 0
  %141 = vmatpush1.bf16.msra.mxu0 0
  %142 = vmatprep.subr.bf16.mxu0 0
  %143 = vmatpush1.bf16.msra.mxu0 0
  %144 = vmatprep.subr.bf16.mxu0 0
  %145 = vmatpush1.bf16.msra.mxu0 0
  %146 = vmatprep.subr.bf16.mxu0 0
  %147 = vmatpush1.bf16.msra.mxu0 0
  %148 = vmatprep.subr.bf16.mxu0 0
  %149 = vmatpush1.bf16.msra.mxu0 0
  %150 = vmatprep.mubr.bf16.mxu0 0
  %151 = vmatmul.mubr.bf16.gmra.mrb[0].mxu0 %v107
  %v152 = vpop.f32.mrb[0].mxu0
  %v153 = vadd.f32 0.0, %v152
  %v154 = vpop.f32.mrb[0].mxu0
  %v155 = vpop.f32.mrb[0].mxu0
  %v156 = vadd.f32 0.0, %v155
  %v157 = vpop.f32.mrb[0].mxu0
  %158 = vmatprep.mubr.bf16.mxu0 0
  %159 = vmatmul.mubr.bf16.gmra.mrb[0].mxu0 %v110
  %v160 = vpop.f32.mrb[0].mxu0
  %v161 = vadd.f32 0.0, %v160
  %v162 = vpop.f32.mrb[0].mxu0
  %v163 = vpop.f32.mrb[0].mxu0
  %v164 = vadd.f32 0.0, %v163
  %v165 = vpop.f32.mrb[0].mxu0
  %166 = vmatprep.mubr.bf16.mxu0 0
  %167 = vmatmul.mubr.bf16.gmra.mrb[0].mxu0 %v113
  %v168 = vpop.f32.mrb[0].mxu0
  %v169 = vadd.f32 0.0, %v168
  %v170 = vpop.f32.mrb[0].mxu0
  %v171 = vpop.f32.mrb[0].mxu0
  %v172 = vadd.f32 0.0, %v171
  %v173 = vpop.f32.mrb[0].mxu0
  %174 = vmatprep.mubr.bf16.mxu0 0
  %175 = vmatmul.mubr.bf16.gmra.mrb[0].mxu0 %v116
  %v176 = vpop.f32.mrb[0].mxu0
  %v177 = vadd.f32 0.0, %v176
  %v178 = vpop.f32.mrb[0].mxu0
  %v179 = vpop.f32.mrb[0].mxu0
  %v180 = vadd.f32 0.0, %v179
  %v181 = vpop.f32.mrb[0].mxu0
  %182 = vdwg.mxu0
  %v183 = vadd.f32 %v37, %v153
  %v184 = vadd.f32 %v38, %v156
  %v185 = vadd.f32 %v39, %v161
  %v186 = vadd.f32 %v40, %v164
  %v187 = vadd.f32 %v41, %v169
  %v188 = vadd.f32 %v42, %v172
  %v189 = vadd.f32 %v43, %v177
  %v190 = vadd.f32 %v44, %v180
  %vm191 = vcmask 261120
  %192 = vst.msk [vmem:[#allocation2] sm:$0xff] %vm191, %v183
  %193 = vst.msk [vmem:[#allocation2 + $0x8] sm:$0xff] %vm191, %v184
  %194 = vst.msk [vmem:[#allocation2 + $0x10] sm:$0xff] %vm191, %v185
  %195 = vst.msk [vmem:[#allocation2 + $0x18] sm:$0xff] %vm191, %v186
  %196 = vst.msk [vmem:[#allocation2 + $0x20] sm:$0xff] %vm191, %v187
  %197 = vst.msk [vmem:[#allocation2 + $0x28] sm:$0xff] %vm191, %v188
  %198 = vst.msk [vmem:[#allocation2 + $0x30] sm:$0xff] %vm191, %v189
  %199 = vst.msk [vmem:[#allocation2 + $0x38] sm:$0xff] %vm191, %v190
  // Predicated region
  $region30: #{bert_forward.16} parent=0 // pred_check
    %p200 = pneg %p24
  $region31: #{bert_forward.16} parent=0 // pred_check_branch
    %202 = sbr.rel (%p200) target = $region33
  $region32: #{bert_forward.16} parent=0 // pred_region
    %v203 = vld [vmem:[#allocation2] sm:$0xff]
    %v204 = vld [vmem:[#allocation2 + $0x8] sm:$0xff]
    %v205 = vld [vmem:[#allocation2 + $0x10] sm:$0xff]
    %v206 = vld [vmem:[#allocation2 + $0x18] sm:$0xff]
    %v207 = vld [vmem:[#allocation2 + $0x20] sm:$0xff]
    %v208 = vld [vmem:[#allocation2 + $0x28] sm:$0xff]
    %v209 = vld [vmem:[#allocation2 + $0x30] sm:$0xff]
    %v210 = vld [vmem:[#allocation2 + $0x38] sm:$0xff]
    %v211 = vld [vmem:[%s2] sm:$0x1]
    %v213 = vlaneseq
    %v214 = vshrl.u32 %v213, 7
    %v215 = vsub.s32 0, %v214
    %v216 = vrot.slane %v211, %v215
    %v218 = vadd.f32 %v203, %v216
    %v219 = vadd.f32 %v204, %v216
    %v220 = vadd.f32 %v205, %v216
    %v221 = vadd.f32 %v206, %v216
    %v222 = vadd.f32 %v207, %v216
    %v223 = vadd.f32 %v208, %v216
    %v224 = vadd.f32 %v209, %v216
    %v225 = vadd.f32 %v210, %v216
    %v226 = vld [vmem:[%s3] sm:$0xf]
    %v227 = vld [vmem:[%s3 + $0x4] sm:$0xf]
    %v228 = vld [vmem:[%s3 + $0x8] sm:$0xf]
    %v229 = vld [vmem:[%s3 + $0xc] sm:$0xf]
    %v230 = vld [vmem:[%s3 + $0x10] sm:$0xf]
    %v231 = vld [vmem:[%s3 + $0x14] sm:$0xf]
    %v232 = vld [vmem:[%s3 + $0x18] sm:$0xf]
    %v233 = vld [vmem:[%s3 + $0x1c] sm:$0xf]
    %v234 = vunpack.c.l.bf16 %v226
    %v235 = vunpack.c.l.bf16 %v227
    %v236 = vunpack.c.l.bf16 %v228
    %v237 = vunpack.c.l.bf16 %v229
    %v238 = vunpack.c.l.bf16 %v230
    %v239 = vunpack.c.l.bf16 %v231
    %v240 = vunpack.c.l.bf16 %v232
    %v241 = vunpack.c.l.bf16 %v233
    %v242 = vadd.f32 %v218, %v234
    %v243 = vadd.f32 %v219, %v235
    %v244 = vadd.f32 %v220, %v236
    %v245 = vadd.f32 %v221, %v237
    %v246 = vadd.f32 %v222, %v238
    %v247 = vadd.f32 %v223, %v239
    %v248 = vadd.f32 %v224, %v240
    %v249 = vadd.f32 %v225, %v241
    %v250 = vsel %vm191, %v242, 0.0
    %251 = vadd.xlane.f32.xlu0 %v250
    %v252 = vpop.xlane.xlu0 %251
    %v253 = vsel %vm191, %v243, 0.0
    %254 = vadd.xlane.f32.xlu0 %v253
    %v255 = vpop.xlane.xlu0 %254
    %v256 = vsel %vm191, %v244, 0.0
    %257 = vadd.xlane.f32.xlu0 %v256
    %v258 = vpop.xlane.xlu0 %257
    %v259 = vsel %vm191, %v245, 0.0
    %260 = vadd.xlane.f32.xlu0 %v259
    %v261 = vpop.xlane.xlu0 %260
    %v262 = vsel %vm191, %v246, 0.0
    %263 = vadd.xlane.f32.xlu0 %v262
    %v264 = vpop.xlane.xlu0 %263
    %v265 = vsel %vm191, %v247, 0.0
    %266 = vadd.xlane.f32.xlu0 %v265
    %v267 = vpop.xlane.xlu0 %266
    %v268 = vsel %vm191, %v248, 0.0
    %269 = vadd.xlane.f32.xlu0 %v268
    %v270 = vpop.xlane.xlu0 %269
    %v271 = vsel %vm191, %v249, 0.0
    %272 = vadd.xlane.f32.xlu0 %v271
    %v273 = vpop.xlane.xlu0 %272
    %v274 = vrcp.pop 32.0
    %v275 = vmul.f32 %v252, %v274
    %v276 = vmul.f32 %v255, %v274
    %v277 = vmul.f32 %v258, %v274
    %v278 = vmul.f32 %v261, %v274
    %v279 = vmul.f32 %v264, %v274
    %v280 = vmul.f32 %v267, %v274
    %v281 = vmul.f32 %v270, %v274
    %v282 = vmul.f32 %v273, %v274
    %v283 = vsub.f32 %v242, %v275
    %v284 = vsub.f32 %v243, %v276
    %v285 = vsub.f32 %v244, %v277
    %v286 = vsub.f32 %v245, %v278
    %v287 = vsub.f32 %v246, %v279
    %v288 = vsub.f32 %v247, %v280
    %v289 = vsub.f32 %v248, %v281
    %v290 = vsub.f32 %v249, %v282
    %v291 = vmul.f32 %v283, %v283
    %v292 = vmul.f32 %v284, %v284
    %v293 = vmul.f32 %v285, %v285
    %v294 = vmul.f32 %v286, %v286
    %v295 = vmul.f32 %v287, %v287
    %v296 = vmul.f32 %v288, %v288
    %v297 = vmul.f32 %v289, %v289
    %v298 = vmul.f32 %v290, %v290
    %v299 = vsel %vm191, %v291, 0.0
    %300 = vadd.xlane.f32.xlu0 %v299
    %v301 = vpop.xlane.xlu0 %300
    %v302 = vsel %vm191, %v292, 0.0
    %303 = vadd.xlane.f32.xlu0 %v302
    %v304 = vpop.xlane.xlu0 %303
    %v305 = vsel %vm191, %v293, 0.0
    %306 = vadd.xlane.f32.xlu0 %v305
    %v307 = vpop.xlane.xlu0 %306
    %v308 = vsel %vm191, %v294, 0.0
    %309 = vadd.xlane.f32.xlu0 %v308
    %v310 = vpop.xlane.xlu0 %309
    %v311 = vsel %vm191, %v295, 0.0
    %312 = vadd.xlane.f32.xlu0 %v311
    %v313 = vpop.xlane.xlu0 %312
    %v314 = vsel %vm191, %v296, 0.0
    %315 = vadd.xlane.f32.xlu0 %v314
    %v316 = vpop.xlane.xlu0 %315
    %v317 = vsel %vm191, %v297, 0.0
    %318 = vadd.xlane.f32.xlu0 %v317
    %v319 = vpop.xlane.xlu0 %318
    %v320 = vsel %vm191, %v298, 0.0
    %321 = vadd.xlane.f32.xlu0 %v320
    %v322 = vpop.xlane.xlu0 %321
    %v323 = vmul.f32 %v301, %v274
    %v324 = vmul.f32 %v304, %v274
    %v325 = vmul.f32 %v307, %v274
    %v326 = vmul.f32 %v310, %v274
    %v327 = vmul.f32 %v313, %v274
    %v328 = vmul.f32 %v316, %v274
    %v329 = vmul.f32 %v319, %v274
    %v330 = vmul.f32 %v322, %v274
    %v331 = vadd.f32 %v323, 1e-05
    %v332 = vadd.f32 %v324, 1e-05
    %v333 = vadd.f32 %v325, 1e-05
    %v334 = vadd.f32 %v326, 1e-05
    %v335 = vadd.f32 %v327, 1e-05
    %v336 = vadd.f32 %v328, 1e-05
    %v337 = vadd.f32 %v329, 1e-05
    %v338 = vadd.f32 %v330, 1e-05
    %v339 = vrsqrt.pop %v331
    %v340 = vrsqrt.pop %v332
    %v341 = vrsqrt.pop %v333
    %v342 = vrsqrt.pop %v334
    %v343 = vrsqrt.pop %v335
    %v344 = vrsqrt.pop %v336
    %v345 = vrsqrt.pop %v337
    %v346 = vrsqrt.pop %v338
    %v347 = vmul.f32 %v283, %v339
    %v348 = vmul.f32 %v284, %v340
    %v349 = vmul.f32 %v285, %v341
    %v350 = vmul.f32 %v286, %v342
    %v351 = vmul.f32 %v287, %v343
    %v352 = vmul.f32 %v288, %v344
    %v353 = vmul.f32 %v289, %v345
    %v354 = vmul.f32 %v290, %v346
    %v355 = vld [vmem:[%s4] sm:$0x1]
    %v357 = vlaneseq
    %v358 = vshrl.u32 %v357, 7
    %v359 = vsub.s32 0, %v358
    %v360 = vrot.slane %v355, %v359
    %v362 = vmul.f32 %v347, %v360
    %v363 = vmul.f32 %v348, %v360
    %v364 = vmul.f32 %v349, %v360
    %v365 = vmul.f32 %v350, %v360
    %v366 = vmul.f32 %v351, %v360
    %v367 = vmul.f32 %v352, %v360
    %v368 = vmul.f32 %v353, %v360
    %v369 = vmul.f32 %v354, %v360
    %v370 = vld [vmem:[%s5] sm:$0x1]
    %v372 = vlaneseq
    %v373 = vshrl.u32 %v372, 7
    %v374 = vsub.s32 0, %v373
    %v375 = vrot.slane %v370, %v374
    %v377 = vadd.f32 %v362, %v375
    %v378 = vadd.f32 %v363, %v375
    %v379 = vadd.f32 %v364, %v375
    %v380 = vadd.f32 %v365, %v375
    %v381 = vadd.f32 %v366, %v375
    %v382 = vadd.f32 %v367, %v375
    %v383 = vadd.f32 %v368, %v375
    %v384 = vadd.f32 %v369, %v375
    %v385 = vpack.c.bf16 %v378, %v377
    %v386 = vpack.c.bf16 %v380, %v379
    %v387 = vpack.c.bf16 %v382, %v381
    %v388 = vpack.c.bf16 %v384, %v383
    %v393 = vunpack.c.l.b16 %v385
    %v394 = vunpack.c.h.b16 %v385
    %v395 = vunpack.c.l.b16 %v386
    %v396 = vunpack.c.h.b16 %v386
    %v397 = vunpack.c.l.b16 %v387
    %v398 = vunpack.c.h.b16 %v387
    %v399 = vunpack.c.l.b16 %v388
    %v400 = vunpack.c.h.b16 %v388
    %v401 = vpack.c.b16 %v393, %v393
    %v402 = vpack.c.b16 %v394, %v394
    %v403 = vpack.c.b16 %v395, %v395
    %v404 = vpack.c.b16 %v396, %v396
    %v405 = vpack.c.b16 %v397, %v397
    %v406 = vpack.c.b16 %v398, %v398
    %v407 = vpack.c.b16 %v399, %v399
    %v408 = vpack.c.b16 %v400, %v400
    %vm417 = vcmask 257024
    %418 = vst.msk [vmem:[%s6] sm:$0xf] %vm417, %v401
    %419 = vst.msk [vmem:[%s6 + $0x4] sm:$0xf] %vm417, %v402
    %420 = vst.msk [vmem:[%s6 + $0x8] sm:$0xf] %vm417, %v403
    %421 = vst.msk [vmem:[%s6 + $0xc] sm:$0xf] %vm417, %v404
    %422 = vst.msk [vmem:[%s6 + $0x10] sm:$0xf] %vm417, %v405
    %423 = vst.msk [vmem:[%s6 + $0x14] sm:$0xf] %vm417, %v406
    %424 = vst.msk [vmem:[%s6 + $0x18] sm:$0xf] %vm417, %v407
    %425 = vst.msk [vmem:[%s6 + $0x1c] sm:$0xf] %vm417, %v408
  $region33: #{bert_forward.16} parent=0 // pred_fallthru
    _
  // Predicated region
  $region34: #{bert_forward.16} parent=0 // pred_check
    _
  $region35: #{bert_forward.16} parent=0 // pred_check_branch
    %427 = sbr.rel (0) target = $region37
  $region36: #{bert_forward.16} parent=0 // pred_region
    _
  $region37: #{bert_forward.16} parent=0 // pred_fallthru
    _
  // Predicated region
  $region38: #{bert_forward.16} parent=0 // pred_check
    _
  $region39: #{bert_forward.16} parent=0 // pred_check_branch
    %429 = sbr.rel (0) target = $region41
  $region40: #{bert_forward.16} parent=0 // pred_region
    _
  $region41: #{bert_forward.16} parent=0 // pred_fallthru
    _

// kernel: bert_forward.23
$region0: #{bert_forward.23}
  #allocation0 [shape = 'u32[]', space=smem, size = 0x4, offset = 0x4, fixed_abs, tag = 'smem constant byte address 0x4 - core index']
  #allocation1 [shape = 'u32[144,128]{1,0:T(1,128)}', space=vmem, size = 0x12000, scoped, tag = 'internal scratch']
  #allocation2 [shape = 'f32[72,128]{1,0:T(8,128)}', space=vmem, size = 0x9000, scoped, tag = 'scratch operand']
  %s0 = inlined_call_operand.vmem [shape: bf16[72,32], index: 0, kind: input, shape index: {}]
  %s1 = inlined_call_operand.vmem [shape: bf16[32,128], index: 1, kind: input, shape index: {}]
  %s2 = inlined_call_operand.vmem [shape: f32[1,128], index: 2, kind: input, shape index: {}]
  %s3 = inlined_call_operand.vmem [shape: f32[72,128], index: 3, kind: output, shape index: {}]
  %s4 = sld [smem:[#allocation0]]
  $region30: #{bert_forward.23} parent=0
    _
  %s6 = ssub.s32 1, %s4
  %s7 = scalar_select 0, %s6, %s4
  // Predicated region
  $region2: #{bert_forward.23} parent=0 // pred_check
    _
  $region3: #{bert_forward.23} parent=0 // pred_check_branch
    %9 = sbr.rel (0) target = $region5
  $region4: #{bert_forward.23} parent=0 // pred_region
    _
  $region5: #{bert_forward.23} parent=0 // pred_fallthru
    _
  // Predicated region
  $region6: #{bert_forward.23} parent=0 // pred_check
    _
  $region7: #{bert_forward.23} parent=0 // pred_check_branch
    %11 = sbr.rel (0) target = $region9
  $region8: #{bert_forward.23} parent=0 // pred_region
    _
  $region9: #{bert_forward.23} parent=0 // pred_fallthru
    _
  // Predicated region
  $region10: #{bert_forward.23} parent=0 // pred_check
    _
  $region11: #{bert_forward.23} parent=0 // pred_check_branch
    %13 = sbr.rel (0) target = $region13
  $region12: #{bert_forward.23} parent=0 // pred_region
    _
  $region13: #{bert_forward.23} parent=0 // pred_fallthru
    _
  %p15 = scmp.eq.s32.totalorder 0, 0
  // Predicated region
  $region14: #{bert_forward.23} parent=0 // pred_check
    %p16 = pneg %p15
  $region15: #{bert_forward.23} parent=0 // pred_check_branch
    %18 = sbr.rel (%p16) target = $region17
  $region16: #{bert_forward.23} parent=0 // pred_region
    %19 = vst [vmem:[#allocation2] sm:$0xff] 0.0
    %20 = vst [vmem:[#allocation2 + $0x8] sm:$0xff] 0.0
    %21 = vst [vmem:[#allocation2 + $0x10] sm:$0xff] 0.0
    %22 = vst [vmem:[#allocation2 + $0x18] sm:$0xff] 0.0
    %23 = vst [vmem:[#allocation2 + $0x20] sm:$0xff] 0.0
    %24 = vst [vmem:[#allocation2 + $0x28] sm:$0xff] 0.0
    %25 = vst [vmem:[#allocation2 + $0x30] sm:$0xff] 0.0
    %26 = vst [vmem:[#allocation2 + $0x38] sm:$0xff] 0.0
    %27 = vst [vmem:[#allocation2 + $0x40] sm:$0xff] 0.0
  $region17: #{bert_forward.23} parent=0 // pred_fallthru
    _
  %v28 = vld [vmem:[#allocation2] sm:$0xff]
  %v29 = vld [vmem:[#allocation2 + $0x8] sm:$0xff]
  %v30 = vld [vmem:[#allocation2 + $0x10] sm:$0xff]
  %v31 = vld [vmem:[#allocation2 + $0x18] sm:$0xff]
  %v32 = vld [vmem:[#allocation2 + $0x20] sm:$0xff]
  %v33 = vld [vmem:[#allocation2 + $0x28] sm:$0xff]
  %v34 = vld [vmem:[#allocation2 + $0x30] sm:$0xff]
  %v35 = vld [vmem:[#allocation2 + $0x38] sm:$0xff]
  %v36 = vld [vmem:[#allocation2 + $0x40] sm:$0xff]
  %v37 = vld [vmem:[%s0] sm:$0xf]
  %v38 = vld [vmem:[%s0 + $0x4] sm:$0xf]
  %v39 = vld [vmem:[%s0 + $0x8] sm:$0xf]
  %v40 = vld [vmem:[%s0 + $0xc] sm:$0xf]
  %v41 = vld [vmem:[%s0 + $0x10] sm:$0xf]
  %v42 = vld [vmem:[%s0 + $0x14] sm:$0xf]
  %v43 = vld [vmem:[%s0 + $0x18] sm:$0xf]
  %v44 = vld [vmem:[%s0 + $0x1c] sm:$0xf]
  %v45 = vld [vmem:[%s0 + $0x20] sm:$0xf]
  %v46 = vld [vmem:[%s1] sm:$0xf]
  %v47 = vld [vmem:[%s1 + $0x4] sm:$0xf]
  %v48 = vld [vmem:[%s1 + $0x8] sm:$0xf]
  %v49 = vld [vmem:[%s1 + $0xc] sm:$0xf]
  %v59 = vunpack.c.l.b16 %v37
  %v60 = vunpack.c.l.b16 %v38
  %v61 = vunpack.c.l.b16 %v39
  %v62 = vunpack.c.l.b16 %v40
  %v63 = vunpack.c.l.b16 %v41
  %v64 = vunpack.c.l.b16 %v42
  %v65 = vunpack.c.l.b16 %v43
  %v66 = vunpack.c.l.b16 %v44
  %v67 = vunpack.c.l.b16 %v45
  %v68 = vpack.c.b16 %v60, %v59
  %v69 = vpack.c.b16 %v62, %v61
  %v70 = vpack.c.b16 %v64, %v63
  %v71 = vpack.c.b16 %v66, %v65
  %v72 = vpack.c.b16 %v67, %v67
  %v77 = vunpack.c.l.b16 %v46
  %v78 = vunpack.c.l.b16 %v47
  %v79 = vunpack.c.l.b16 %v48
  %v80 = vunpack.c.l.b16 %v49
  %v81 = vpack.c.b16 %v78, %v77
  %v82 = vpack.c.b16 %v80, %v79
  %vm85 = vcmask 261120
  %v87 = vsel %vm85, %v68, 0
  %v90 = vsel %vm85, %v69, 0
  %v93 = vsel %vm85, %v70, 0
  %v96 = vsel %vm85, %v71, 0
  %v99 = vsel %vm85, %v72, 0
  %101 = vmatprep.subr.bf16.mxu0 0
  %102 = vmatpush1.bf16.msra.mxu0 %v81
  %103 = vmatprep.subr.bf16.mxu0 0
  %104 = vmatpush1.bf16.msra.mxu0 %v82
  %105 = vmatprep.subr.bf16.mxu0 0
  %106 = vmatpush1.bf16.msra.mxu0 0
  %107 = vmatprep.subr.bf16.mxu0 0
  %108 = vmatpush1.bf16.msra.mxu0 0
  %109 = vmatprep.subr.bf16.mxu0 0
  %110 = vmatpush1.bf16.msra.mxu0 0
  %111 = vmatprep.subr.bf16.mxu0 0
  %112 = vmatpush1.bf16.msra.mxu0 0
  %113 = vmatprep.subr.bf16.mxu0 0
  %114 = vmatpush1.bf16.msra.mxu0 0
  %115 = vmatprep.subr.bf16.mxu0 0
  %116 = vmatpush1.bf16.msra.mxu0 0
  %117 = vmatprep.subr.bf16.mxu0 0
  %118 = vmatpush1.bf16.msra.mxu0 0
  %119 = vmatprep.subr.bf16.mxu0 0
  %120 = vmatpush1.bf16.msra.mxu0 0
  %121 = vmatprep.subr.bf16.mxu0 0
  %122 = vmatpush1.bf16.msra.mxu0 0
  %123 = vmatprep.subr.bf16.mxu0 0
  %124 = vmatpush1.bf16.msra.mxu0 0
  %125 = vmatprep.subr.bf16.mxu0 0
  %126 = vmatpush1.bf16.msra.mxu0 0
  %127 = vmatprep.subr.bf16.mxu0 0
  %128 = vmatpush1.bf16.msra.mxu0 0
  %129 = vmatprep.subr.bf16.mxu0 0
  %130 = vmatpush1.bf16.msra.mxu0 0
  %131 = vmatprep.subr.bf16.mxu0 0
  %132 = vmatpush1.bf16.msra.mxu0 0
  %133 = vmatprep.mubr.bf16.mxu0 0
  %134 = vmatmul.mubr.bf16.gmra.mrb[0].mxu0 %v87
  %v135 = vpop.f32.mrb[0].mxu0
  %v136 = vadd.f32 0.0, %v135
  %v137 = vpop.f32.mrb[0].mxu0
  %v138 = vpop.f32.mrb[0].mxu0
  %v139 = vadd.f32 0.0, %v138
  %v140 = vpop.f32.mrb[0].mxu0
  %141 = vmatprep.mubr.bf16.mxu0 0
  %142 = vmatmul.mubr.bf16.gmra.mrb[0].mxu0 %v90
  %v143 = vpop.f32.mrb[0].mxu0
  %v144 = vadd.f32 0.0, %v143
  %v145 = vpop.f32.mrb[0].mxu0
  %v146 = vpop.f32.mrb[0].mxu0
  %v147 = vadd.f32 0.0, %v146
  %v148 = vpop.f32.mrb[0].mxu0
  %149 = vmatprep.mubr.bf16.mxu0 0
  %150 = vmatmul.mubr.bf16.gmra.mrb[0].mxu0 %v93
  %v151 = vpop.f32.mrb[0].mxu0
  %v152 = vadd.f32 0.0, %v151
  %v153 = vpop.f32.mrb[0].mxu0
  %v154 = vpop.f32.mrb[0].mxu0
  %v155 = vadd.f32 0.0, %v154
  %v156 = vpop.f32.mrb[0].mxu0
  %157 = vmatprep.mubr.bf16.mxu0 0
  %158 = vmatmul.mubr.bf16.gmra.mrb[0].mxu0 %v96
  %v159 = vpop.f32.mrb[0].mxu0
  %v160 = vadd.f32 0.0, %v159
  %v161 = vpop.f32.mrb[0].mxu0
  %v162 = vpop.f32.mrb[0].mxu0
  %v163 = vadd.f32 0.0, %v162
  %v164 = vpop.f32.mrb[0].mxu0
  %165 = vmatprep.mubr.bf16.mxu0 0
  %166 = vmatmul.mubr.bf16.gmra.mrb[0].mxu0 %v99
  %v167 = vpop.f32.mrb[0].mxu0
  %v168 = vadd.f32 0.0, %v167
  %v169 = vpop.f32.mrb[0].mxu0
  %v170 = vpop.f32.mrb[0].mxu0
  %v171 = vpop.f32.mrb[0].mxu0
  %172 = vdwg.mxu0
  %v173 = vadd.f32 %v28, %v136
  %v174 = vadd.f32 %v29, %v139
  %v175 = vadd.f32 %v30, %v144
  %v176 = vadd.f32 %v31, %v147
  %v177 = vadd.f32 %v32, %v152
  %v178 = vadd.f32 %v33, %v155
  %v179 = vadd.f32 %v34, %v160
  %v180 = vadd.f32 %v35, %v163
  %v181 = vadd.f32 %v36, %v168
  %182 = vst [vmem:[#allocation2] sm:$0xff] %v173
  %183 = vst [vmem:[#allocation2 + $0x8] sm:$0xff] %v174
  %184 = vst [vmem:[#allocation2 + $0x10] sm:$0xff] %v175
  %185 = vst [vmem:[#allocation2 + $0x18] sm:$0xff] %v176
  %186 = vst [vmem:[#allocation2 + $0x20] sm:$0xff] %v177
  %187 = vst [vmem:[#allocation2 + $0x28] sm:$0xff] %v178
  %188 = vst [vmem:[#allocation2 + $0x30] sm:$0xff] %v179
  %189 = vst [vmem:[#allocation2 + $0x38] sm:$0xff] %v180
  %190 = vst [vmem:[#allocation2 + $0x40] sm:$0xff] %v181
  // Predicated region
  $region18: #{bert_forward.23} parent=0 // pred_check
    %p191 = pneg %p15
  $region19: #{bert_forward.23} parent=0 // pred_check_branch
    %193 = sbr.rel (%p191) target = $region21
  $region20: #{bert_forward.23} parent=0 // pred_region
    %v194 = vld [vmem:[#allocation2] sm:$0xff]
    %v195 = vld [vmem:[#allocation2 + $0x8] sm:$0xff]
    %v196 = vld [vmem:[#allocation2 + $0x10] sm:$0xff]
    %v197 = vld [vmem:[#allocation2 + $0x18] sm:$0xff]
    %v198 = vld [vmem:[#allocation2 + $0x20] sm:$0xff]
    %v199 = vld [vmem:[#allocation2 + $0x28] sm:$0xff]
    %v200 = vld [vmem:[#allocation2 + $0x30] sm:$0xff]
    %v201 = vld [vmem:[#allocation2 + $0x38] sm:$0xff]
    %v202 = vld [vmem:[#allocation2 + $0x40] sm:$0xff]
    %v203 = vld [vmem:[%s2] sm:$0x1]
    %v205 = vlaneseq
    %v206 = vshrl.u32 %v205, 7
    %v207 = vsub.s32 0, %v206
    %v208 = vrot.slane %v203, %v207
    %v210 = vadd.f32 %v194, %v208
    %v211 = vadd.f32 %v195, %v208
    %v212 = vadd.f32 %v196, %v208
    %v213 = vadd.f32 %v197, %v208
    %v214 = vadd.f32 %v198, %v208
    %v215 = vadd.f32 %v199, %v208
    %v216 = vadd.f32 %v200, %v208
    %v217 = vadd.f32 %v201, %v208
    %v218 = vadd.f32 %v202, %v208
    %219 = vst [vmem:[%s3] sm:$0xff] %v210
    %220 = vst [vmem:[%s3 + $0x8] sm:$0xff] %v211
    %221 = vst [vmem:[%s3 + $0x10] sm:$0xff] %v212
    %222 = vst [vmem:[%s3 + $0x18] sm:$0xff] %v213
    %223 = vst [vmem:[%s3 + $0x20] sm:$0xff] %v214
    %224 = vst [vmem:[%s3 + $0x28] sm:$0xff] %v215
    %225 = vst [vmem:[%s3 + $0x30] sm:$0xff] %v216
    %226 = vst [vmem:[%s3 + $0x38] sm:$0xff] %v217
    %227 = vst [vmem:[%s3 + $0x40] sm:$0xff] %v218
  $region21: #{bert_forward.23} parent=0 // pred_fallthru
    _
  // Predicated region
  $region22: #{bert_forward.23} parent=0 // pred_check
    _
  $region23: #{bert_forward.23} parent=0 // pred_check_branch
    %229 = sbr.rel (0) target = $region25
  $region24: #{bert_forward.23} parent=0 // pred_region
    _
  $region25: #{bert_forward.23} parent=0 // pred_fallthru
    _
  // Predicated region
  $region26: #{bert_forward.23} parent=0 // pred_check
    _
  $region27: #{bert_forward.23} parent=0 // pred_check_branch
    %231 = sbr.rel (0) target = $region29
  $region28: #{bert_forward.23} parent=0 // pred_region
    _
  $region29: #{bert_forward.23} parent=0 // pred_fallthru
    _

</llo_original>
